<compile_context>
chip_gen: v5e
topology: v5e:2x2
jax: 0.10.0
libtpu: 0.0.40
codegen_flags: <defaults>
</compile_context>

<pallas_src>
import functools
import random

import jax
import jax.numpy as jnp
from jax.experimental import pallas as pl
from jax.experimental.pallas import tpu as pltpu


# ---------------------------------------------------------------------------
# Kernel
# ---------------------------------------------------------------------------
def _gru_step(gi, h, w_hh_bf, b_hh_b, hidden):
    """One PyTorch-style GRU step (gate order [r, z, n]).

    gi      : (B, 3H) f32, already contains x @ W_ih + b_ih (precomputed).
    h       : (B, H)  f32 previous hidden state.
    w_hh_bf : (H, 3H) bf16 recurrent weights.
    b_hh_b  : (B, 3H) f32 pre-broadcast recurrent bias.
    """
    gh = jnp.dot(h.astype(jnp.bfloat16), w_hh_bf,
                 preferred_element_type=jnp.float32) + b_hh_b
    r = jax.nn.sigmoid(gi[:, 0:hidden] + gh[:, 0:hidden])
    z = jax.nn.sigmoid(gi[:, hidden:2 * hidden] + gh[:, hidden:2 * hidden])
    # b_hn is inside r * (h_n + b_hn), matching torch.nn.GRU.
    n = jnp.tanh(gi[:, 2 * hidden:3 * hidden] + r * gh[:, 2 * hidden:3 * hidden])
    return (1.0 - z) * n + z * h


def seq2seq_kernel(enc_emb_ref, ans_emb_ref, emb_ref,
                   enc_wih_ref, enc_whh_ref, enc_bih_ref, enc_bhh_ref,
                   dec_wih_ref, dec_whh_ref, dec_bih_ref, dec_bhh_ref,
                   wout_ref, bout_ref,
                   out_ref, *, batch, teach):
    # enc_emb_ref / ans_emb_ref are time-major flattened: (S*B, E) bf16.
    # out_ref is (S, B, V) f32 (lane-dense (B, V) tile per step).
    B = batch
    S, _, V = out_ref.shape
    H = enc_whh_ref.shape[0]

    f32 = jnp.float32
    bf16 = jnp.bfloat16

    enc_whh = enc_whh_ref[...]
    dec_whh = dec_whh_ref[...]
    dec_wih = dec_wih_ref[...]
    wout = wout_ref[...]

    # Hoisted bias broadcasts (done once, reused by every unrolled step).
    enc_bhh_b = jnp.broadcast_to(enc_bhh_ref[...], (B, 3 * H))
    dec_bhh_b = jnp.broadcast_to(dec_bhh_ref[...], (B, 3 * H))
    dec_bih_b = jnp.broadcast_to(dec_bih_ref[...], (B, 3 * H))
    bout_b = jnp.broadcast_to(bout_ref[...], (B, V))

    # ---- time-parallel input-gate matmuls (hoisted out of the recurrence) --
    # One (S*B, E) @ (E, 3H) launch instead of S tiny (B, E) @ (E, 3H) ones.
    gi_enc_all = jnp.dot(enc_emb_ref[...], enc_wih_ref[...],
                         preferred_element_type=f32) + enc_bih_ref[...]
    gi_ans_all = jnp.dot(ans_emb_ref[...], dec_wih,
                         preferred_element_type=f32) + dec_bih_ref[...]
    # Fused greedy re-embedding table: one_hot @ (emb @ W_ih_dec) later is a
    # single matmul instead of (one_hot @ emb) then (x @ W_ih_dec).
    embw_dec = jnp.dot(emb_ref[...], dec_wih,
                       preferred_element_type=f32).astype(bf16)      # (V, 3H)

    # ---- encoder: single-layer GRU over the source, h0 = 0 -----------------
    # TODO(synk): the reference passes opaque encoder/decoder modules; a
    # single-layer unidirectional GRU (+ linear head in the decoder) is assumed.
    h = jnp.zeros((B, H), f32)
    for t in range(S):
        h = _gru_step(gi_enc_all[t * B:(t + 1) * B], h, enc_whh, enc_bhh_b, H)

    # outputs_prob[:, 0] is never written by the reference forward -> zeros.
    out_ref[0] = jnp.zeros((B, V), f32)

    # ---- decoder: teacher-forced / greedy loop ------------------------------
    dec_h = h
    gi = gi_ans_all[0:B]                       # embedding(answer[:, 0]) @ W_ih
    deferred = []                              # (step, hidden) -> batched W_out
    for i in range(1, S):
        dec_h = _gru_step(gi, dec_h, dec_whh, dec_bhh_b, H)
        greedy_next = (i < S - 1) and (not teach[i])
        if greedy_next:
            # Logits needed *now* to pick the next input token.
            logits = jnp.dot(dec_h.astype(bf16), wout,
                             preferred_element_type=f32) + bout_b
            out_ref[i] = logits
            # TODO(synk): reference does `output.argmax(1)` on a (B,1,V) tensor
            # (a bug); standard greedy argmax over the vocab is used here.
            pred = jnp.argmax(logits, axis=-1).astype(jnp.int32)        # (B,)
            lane = jax.lax.broadcasted_iota(jnp.int32, (B, V), 1)
            pred_oh = (lane == pred[:, None]).astype(bf16)              # (B, V)
            gi = jnp.dot(pred_oh, embw_dec,
                         preferred_element_type=f32) + dec_bih_b
        else:
            # Projection not needed for the recurrence -> defer and batch it.
            deferred.append((i, dec_h))
            if i < S - 1:                      # teacher forcing: ground truth
                gi = gi_ans_all[i * B:(i + 1) * B]

    # ---- batched output projection for all deferred steps -------------------
    if deferred:
        hcat = jnp.concatenate([dh for _, dh in deferred], axis=0).astype(bf16)
        lcat = jnp.dot(hcat, wout, preferred_element_type=f32) + bout_ref[...]
        for j, (i, _) in enumerate(deferred):
            out_ref[i] = lcat[j * B:(j + 1) * B]


# ---------------------------------------------------------------------------
# Wrapper / params
# ---------------------------------------------------------------------------
def make_params(key, vocab, embed_dim, hidden):
    ks = jax.random.split(key, 11)
    s = 0.1
    n = lambda k, shape: (jax.random.normal(k, shape, jnp.float32) * s)
    return {
        "emb":     n(ks[0], (vocab, embed_dim)),
        "enc_wih": n(ks[1], (embed_dim, 3 * hidden)),
        "enc_whh": n(ks[2], (hidden, 3 * hidden)),
        "enc_bih": n(ks[3], (1, 3 * hidden)),
        "enc_bhh": n(ks[4], (1, 3 * hidden)),
        "dec_wih": n(ks[5], (embed_dim, 3 * hidden)),
        "dec_whh": n(ks[6], (hidden, 3 * hidden)),
        "dec_bih": n(ks[7], (1, 3 * hidden)),
        "dec_bhh": n(ks[8], (1, 3 * hidden)),
        "wout":    n(ks[9], (hidden, vocab)),
        "bout":    n(ks[10], (1, vocab)),
    }


def seq2seq_forward(source, answer, params, teacher_forcing=0.5, seed=0):
    """Returns outputs_prob of shape (batch, sen_len, out_dim) float32."""
    B, S = source.shape
    V, E = params["emb"].shape

    # Deterministic trace-time replacement for `random.random() < tf`
    # (one draw per decode step i = 1..S-1), baked into the compiled kernel.
    rng = random.Random(seed)
    teach = (False,) + tuple(rng.random() < teacher_forcing for _ in range(1, S))

    emb = params["emb"]
    # Embedding table lookups of the *known* token ids (glue, plain JAX gather).
    enc_embed = jnp.take(emb, source, axis=0)          # (B, S, E)
    ans_embed = jnp.take(emb, answer, axis=0)          # (B, S, E)

    bf16 = jnp.bfloat16
    # Time-major flatten so the kernel can issue one (S*B, E) @ (E, 3H) matmul.
    enc_flat = enc_embed.transpose(1, 0, 2).reshape(S * B, E).astype(bf16)
    ans_flat = ans_embed.transpose(1, 0, 2).reshape(S * B, E).astype(bf16)

    args = (enc_flat, ans_flat, emb.astype(bf16),
            params["enc_wih"].astype(bf16), params["enc_whh"].astype(bf16),
            params["enc_bih"], params["enc_bhh"],
            params["dec_wih"].astype(bf16), params["dec_whh"].astype(bf16),
            params["dec_bih"], params["dec_bhh"],
            params["wout"].astype(bf16), params["bout"])

    vmem = pl.BlockSpec(memory_space=pltpu.MemorySpace.VMEM)
    out_sbv = pl.pallas_call(
        functools.partial(seq2seq_kernel, batch=B, teach=teach),
        out_shape=jax.ShapeDtypeStruct((S, B, V), jnp.float32),
        in_specs=[vmem] * len(args),
        out_specs=vmem,
    )(*args)
    # Back to the PyTorch (batch, sen_len, out_dim) layout (wrapper glue).
    return jnp.transpose(out_sbv, (1, 0, 2))


# ---------------------------------------------------------------------------
# Demo
# ---------------------------------------------------------------------------
if __name__ == "__main__":
    BATCH, SEQ = 8, 8
    VOCAB, EMBED, HIDDEN = 128, 32, 128   # out_dim = VOCAB; H, V multiples of 128

    key = jax.random.PRNGKey(0)
    k_par, k_src, k_ans = jax.random.split(key, 3)

    params = make_params(k_par, VOCAB, EMBED, HIDDEN)
    source = jax.random.randint(k_src, (BATCH, SEQ), 0, VOCAB, dtype=jnp.int32)
    answer = jax.random.randint(k_ans, (BATCH, SEQ), 0, VOCAB, dtype=jnp.int32)

    outputs_prob = seq2seq_forward(source, answer, params,
                                   teacher_forcing=0.5, seed=0)
    jax.block_until_ready(outputs_prob)

    assert outputs_prob.shape == (BATCH, SEQ, VOCAB)
    assert outputs_prob.dtype == jnp.float32
    print("KERNEL_OK")
</pallas_src>

<mosaic_0001>
module attributes {stable_mosaic.version = 11 : i64} {
  func.func @seq2seq_kernel(%arg0: memref<64x32xbf16, #tpu.memory_space<vmem>>, %arg1: memref<64x32xbf16, #tpu.memory_space<vmem>>, %arg2: memref<128x32xbf16, #tpu.memory_space<vmem>>, %arg3: memref<32x384xbf16, #tpu.memory_space<vmem>>, %arg4: memref<128x384xbf16, #tpu.memory_space<vmem>>, %arg5: memref<1x384xf32, #tpu.memory_space<vmem>>, %arg6: memref<1x384xf32, #tpu.memory_space<vmem>>, %arg7: memref<32x384xbf16, #tpu.memory_space<vmem>>, %arg8: memref<128x384xbf16, #tpu.memory_space<vmem>>, %arg9: memref<1x384xf32, #tpu.memory_space<vmem>>, %arg10: memref<1x384xf32, #tpu.memory_space<vmem>>, %arg11: memref<128x128xbf16, #tpu.memory_space<vmem>>, %arg12: memref<1x128xf32, #tpu.memory_space<vmem>>, %arg13: memref<8x8x128xf32, #tpu.memory_space<vmem>>) attributes {dimension_semantics = [], scalar_prefetch = 0 : i64, scratch_operands = 0 : i64, tpu.core_type = #tpu.core_type<tc>} {
    %c0 = arith.constant 0 : index
    %c0_0 = arith.constant 0 : index
    %0 = vector.load %arg4[%c0, %c0_0] : memref<128x384xbf16, #tpu.memory_space<vmem>>, vector<128x384xbf16>
    %c0_1 = arith.constant 0 : index
    %c0_2 = arith.constant 0 : index
    %1 = vector.load %arg8[%c0_1, %c0_2] : memref<128x384xbf16, #tpu.memory_space<vmem>>, vector<128x384xbf16>
    %c0_3 = arith.constant 0 : index
    %c0_4 = arith.constant 0 : index
    %2 = vector.load %arg7[%c0_3, %c0_4] : memref<32x384xbf16, #tpu.memory_space<vmem>>, vector<32x384xbf16>
    %c0_5 = arith.constant 0 : index
    %c0_6 = arith.constant 0 : index
    %3 = vector.load %arg11[%c0_5, %c0_6] : memref<128x128xbf16, #tpu.memory_space<vmem>>, vector<128x128xbf16>
    %c0_7 = arith.constant 0 : index
    %c0_8 = arith.constant 0 : index
    %4 = vector.load %arg6[%c0_7, %c0_8] : memref<1x384xf32, #tpu.memory_space<vmem>>, vector<1x384xf32>
    %5 = vector.shape_cast %4 : vector<1x384xf32> to vector<1x384xf32>
    %6 = vector.broadcast %5 : vector<1x384xf32> to vector<8x384xf32>
    %c0_9 = arith.constant 0 : index
    %c0_10 = arith.constant 0 : index
    %7 = vector.load %arg10[%c0_9, %c0_10] : memref<1x384xf32, #tpu.memory_space<vmem>>, vector<1x384xf32>
    %8 = vector.shape_cast %7 : vector<1x384xf32> to vector<1x384xf32>
    %9 = vector.broadcast %8 : vector<1x384xf32> to vector<8x384xf32>
    %c0_11 = arith.constant 0 : index
    %c0_12 = arith.constant 0 : index
    %10 = vector.load %arg9[%c0_11, %c0_12] : memref<1x384xf32, #tpu.memory_space<vmem>>, vector<1x384xf32>
    %11 = vector.shape_cast %10 : vector<1x384xf32> to vector<1x384xf32>
    %12 = vector.broadcast %11 : vector<1x384xf32> to vector<8x384xf32>
    %c0_13 = arith.constant 0 : index
    %c0_14 = arith.constant 0 : index
    %13 = vector.load %arg12[%c0_13, %c0_14] : memref<1x128xf32, #tpu.memory_space<vmem>>, vector<1x128xf32>
    %14 = vector.shape_cast %13 : vector<1x128xf32> to vector<1x128xf32>
    %15 = vector.broadcast %14 : vector<1x128xf32> to vector<8x128xf32>
    %c0_15 = arith.constant 0 : index
    %c0_16 = arith.constant 0 : index
    %16 = vector.load %arg0[%c0_15, %c0_16] : memref<64x32xbf16, #tpu.memory_space<vmem>>, vector<64x32xbf16>
    %c0_17 = arith.constant 0 : index
    %c0_18 = arith.constant 0 : index
    %17 = vector.load %arg3[%c0_17, %c0_18] : memref<32x384xbf16, #tpu.memory_space<vmem>>, vector<32x384xbf16>
    %cst = arith.constant dense<0.000000e+00> : vector<64x384xf32>
    %18 = tpu.matmul %16, %17, %cst {dimension_numbers = #tpu.dot_dimension_numbers<[1], [0], [0], [1], [0, 0, 1, 1], [], []>} : vector<64x32xbf16>, vector<32x384xbf16>, vector<64x384xf32> -> vector<64x384xf32>
    %c0_19 = arith.constant 0 : index
    %c0_20 = arith.constant 0 : index
    %19 = vector.load %arg5[%c0_19, %c0_20] : memref<1x384xf32, #tpu.memory_space<vmem>>, vector<1x384xf32>
    %20 = vector.broadcast %19 : vector<1x384xf32> to vector<64x384xf32>
    %21 = arith.addf %18, %20 : vector<64x384xf32>
    %c0_21 = arith.constant 0 : index
    %c0_22 = arith.constant 0 : index
    %22 = vector.load %arg1[%c0_21, %c0_22] : memref<64x32xbf16, #tpu.memory_space<vmem>>, vector<64x32xbf16>
    %cst_23 = arith.constant dense<0.000000e+00> : vector<64x384xf32>
    %23 = tpu.matmul %22, %2, %cst_23 {dimension_numbers = #tpu.dot_dimension_numbers<[1], [0], [0], [1], [0, 0, 1, 1], [], []>} : vector<64x32xbf16>, vector<32x384xbf16>, vector<64x384xf32> -> vector<64x384xf32>
    %c0_24 = arith.constant 0 : index
    %c0_25 = arith.constant 0 : index
    %24 = vector.load %arg9[%c0_24, %c0_25] : memref<1x384xf32, #tpu.memory_space<vmem>>, vector<1x384xf32>
    %25 = vector.broadcast %24 : vector<1x384xf32> to vector<64x384xf32>
    %26 = arith.addf %23, %25 : vector<64x384xf32>
    %c0_26 = arith.constant 0 : index
    %c0_27 = arith.constant 0 : index
    %27 = vector.load %arg2[%c0_26, %c0_27] : memref<128x32xbf16, #tpu.memory_space<vmem>>, vector<128x32xbf16>
    %cst_28 = arith.constant dense<0.000000e+00> : vector<128x384xf32>
    %28 = tpu.matmul %27, %2, %cst_28 {dimension_numbers = #tpu.dot_dimension_numbers<[1], [0], [0], [1], [0, 0, 1, 1], [], []>} : vector<128x32xbf16>, vector<32x384xbf16>, vector<128x384xf32> -> vector<128x384xf32>
    %29 = arith.truncf %28 : vector<128x384xf32> to vector<128x384xbf16>
    %cst_29 = arith.constant 0.000000e+00 : f32
    %30 = vector.broadcast %cst_29 : f32 to vector<8x128xf32>
    %31 = vector.extract_strided_slice %21 {offsets = [0, 0], sizes = [8, 384], strides = [1, 1]} : vector<64x384xf32> to vector<8x384xf32>
    %32 = arith.truncf %30 : vector<8x128xf32> to vector<8x128xbf16>
    %cst_30 = arith.constant dense<0.000000e+00> : vector<8x384xf32>
    %33 = tpu.matmul %32, %0, %cst_30 {dimension_numbers = #tpu.dot_dimension_numbers<[1], [0], [0], [1], [0, 0, 1, 1], [], []>} : vector<8x128xbf16>, vector<128x384xbf16>, vector<8x384xf32> -> vector<8x384xf32>
    %34 = arith.addf %33, %6 : vector<8x384xf32>
    %35 = vector.extract_strided_slice %31 {offsets = [0, 0], sizes = [8, 128], strides = [1, 1]} : vector<8x384xf32> to vector<8x128xf32>
    %36 = vector.extract_strided_slice %34 {offsets = [0, 0], sizes = [8, 128], strides = [1, 1]} : vector<8x384xf32> to vector<8x128xf32>
    %37 = arith.addf %35, %36 : vector<8x128xf32>
    %38 = arith.negf %37 : vector<8x128xf32>
    %39 = math.exp %38 : vector<8x128xf32>
    %cst_31 = arith.constant 1.000000e+00 : f32
    %40 = vector.broadcast %cst_31 : f32 to vector<8x128xf32>
    %41 = arith.addf %40, %39 : vector<8x128xf32>
    %42 = arith.divf %40, %41 : vector<8x128xf32>
    %43 = vector.extract_strided_slice %31 {offsets = [0, 128], sizes = [8, 128], strides = [1, 1]} : vector<8x384xf32> to vector<8x128xf32>
    %44 = vector.extract_strided_slice %34 {offsets = [0, 128], sizes = [8, 128], strides = [1, 1]} : vector<8x384xf32> to vector<8x128xf32>
    %45 = arith.addf %43, %44 : vector<8x128xf32>
    %46 = arith.negf %45 : vector<8x128xf32>
    %47 = math.exp %46 : vector<8x128xf32>
    %cst_32 = arith.constant 1.000000e+00 : f32
    %48 = vector.broadcast %cst_32 : f32 to vector<8x128xf32>
    %49 = arith.addf %48, %47 : vector<8x128xf32>
    %50 = arith.divf %48, %49 : vector<8x128xf32>
    %51 = vector.extract_strided_slice %31 {offsets = [0, 256], sizes = [8, 128], strides = [1, 1]} : vector<8x384xf32> to vector<8x128xf32>
    %52 = vector.extract_strided_slice %34 {offsets = [0, 256], sizes = [8, 128], strides = [1, 1]} : vector<8x384xf32> to vector<8x128xf32>
    %53 = arith.mulf %42, %52 : vector<8x128xf32>
    %54 = arith.addf %51, %53 : vector<8x128xf32>
    %55 = math.tanh %54 : vector<8x128xf32>
    %cst_33 = arith.constant 1.000000e+00 : f32
    %56 = vector.broadcast %cst_33 : f32 to vector<8x128xf32>
    %57 = arith.subf %56, %50 : vector<8x128xf32>
    %58 = arith.mulf %57, %55 : vector<8x128xf32>
    %59 = arith.mulf %50, %30 : vector<8x128xf32>
    %60 = arith.addf %58, %59 : vector<8x128xf32>
    %61 = vector.extract_strided_slice %21 {offsets = [8, 0], sizes = [8, 384], strides = [1, 1]} : vector<64x384xf32> to vector<8x384xf32>
    %62 = arith.truncf %60 : vector<8x128xf32> to vector<8x128xbf16>
    %cst_34 = arith.constant dense<0.000000e+00> : vector<8x384xf32>
    %63 = tpu.matmul %62, %0, %cst_34 {dimension_numbers = #tpu.dot_dimension_numbers<[1], [0], [0], [1], [0, 0, 1, 1], [], []>} : vector<8x128xbf16>, vector<128x384xbf16>, vector<8x384xf32> -> vector<8x384xf32>
    %64 = arith.addf %63, %6 : vector<8x384xf32>
    %65 = vector.extract_strided_slice %61 {offsets = [0, 0], sizes = [8, 128], strides = [1, 1]} : vector<8x384xf32> to vector<8x128xf32>
    %66 = vector.extract_strided_slice %64 {offsets = [0, 0], sizes = [8, 128], strides = [1, 1]} : vector<8x384xf32> to vector<8x128xf32>
    %67 = arith.addf %65, %66 : vector<8x128xf32>
    %68 = arith.negf %67 : vector<8x128xf32>
    %69 = math.exp %68 : vector<8x128xf32>
    %cst_35 = arith.constant 1.000000e+00 : f32
    %70 = vector.broadcast %cst_35 : f32 to vector<8x128xf32>
    %71 = arith.addf %70, %69 : vector<8x128xf32>
    %72 = arith.divf %70, %71 : vector<8x128xf32>
    %73 = vector.extract_strided_slice %61 {offsets = [0, 128], sizes = [8, 128], strides = [1, 1]} : vector<8x384xf32> to vector<8x128xf32>
    %74 = vector.extract_strided_slice %64 {offsets = [0, 128], sizes = [8, 128], strides = [1, 1]} : vector<8x384xf32> to vector<8x128xf32>
    %75 = arith.addf %73, %74 : vector<8x128xf32>
    %76 = arith.negf %75 : vector<8x128xf32>
    %77 = math.exp %76 : vector<8x128xf32>
    %cst_36 = arith.constant 1.000000e+00 : f32
    %78 = vector.broadcast %cst_36 : f32 to vector<8x128xf32>
    %79 = arith.addf %78, %77 : vector<8x128xf32>
    %80 = arith.divf %78, %79 : vector<8x128xf32>
    %81 = vector.extract_strided_slice %61 {offsets = [0, 256], sizes = [8, 128], strides = [1, 1]} : vector<8x384xf32> to vector<8x128xf32>
    %82 = vector.extract_strided_slice %64 {offsets = [0, 256], sizes = [8, 128], strides = [1, 1]} : vector<8x384xf32> to vector<8x128xf32>
    %83 = arith.mulf %72, %82 : vector<8x128xf32>
    %84 = arith.addf %81, %83 : vector<8x128xf32>
    %85 = math.tanh %84 : vector<8x128xf32>
    %cst_37 = arith.constant 1.000000e+00 : f32
    %86 = vector.broadcast %cst_37 : f32 to vector<8x128xf32>
    %87 = arith.subf %86, %80 : vector<8x128xf32>
    %88 = arith.mulf %87, %85 : vector<8x128xf32>
    %89 = arith.mulf %80, %60 : vector<8x128xf32>
    %90 = arith.addf %88, %89 : vector<8x128xf32>
    %91 = vector.extract_strided_slice %21 {offsets = [16, 0], sizes = [8, 384], strides = [1, 1]} : vector<64x384xf32> to vector<8x384xf32>
    %92 = arith.truncf %90 : vector<8x128xf32> to vector<8x128xbf16>
    %cst_38 = arith.constant dense<0.000000e+00> : vector<8x384xf32>
    %93 = tpu.matmul %92, %0, %cst_38 {dimension_numbers = #tpu.dot_dimension_numbers<[1], [0], [0], [1], [0, 0, 1, 1], [], []>} : vector<8x128xbf16>, vector<128x384xbf16>, vector<8x384xf32> -> vector<8x384xf32>
    %94 = arith.addf %93, %6 : vector<8x384xf32>
    %95 = vector.extract_strided_slice %91 {offsets = [0, 0], sizes = [8, 128], strides = [1, 1]} : vector<8x384xf32> to vector<8x128xf32>
    %96 = vector.extract_strided_slice %94 {offsets = [0, 0], sizes = [8, 128], strides = [1, 1]} : vector<8x384xf32> to vector<8x128xf32>
    %97 = arith.addf %95, %96 : vector<8x128xf32>
    %98 = arith.negf %97 : vector<8x128xf32>
    %99 = math.exp %98 : vector<8x128xf32>
    %cst_39 = arith.constant 1.000000e+00 : f32
    %100 = vector.broadcast %cst_39 : f32 to vector<8x128xf32>
    %101 = arith.addf %100, %99 : vector<8x128xf32>
    %102 = arith.divf %100, %101 : vector<8x128xf32>
    %103 = vector.extract_strided_slice %91 {offsets = [0, 128], sizes = [8, 128], strides = [1, 1]} : vector<8x384xf32> to vector<8x128xf32>
    %104 = vector.extract_strided_slice %94 {offsets = [0, 128], sizes = [8, 128], strides = [1, 1]} : vector<8x384xf32> to vector<8x128xf32>
    %105 = arith.addf %103, %104 : vector<8x128xf32>
    %106 = arith.negf %105 : vector<8x128xf32>
    %107 = math.exp %106 : vector<8x128xf32>
    %cst_40 = arith.constant 1.000000e+00 : f32
    %108 = vector.broadcast %cst_40 : f32 to vector<8x128xf32>
    %109 = arith.addf %108, %107 : vector<8x128xf32>
    %110 = arith.divf %108, %109 : vector<8x128xf32>
    %111 = vector.extract_strided_slice %91 {offsets = [0, 256], sizes = [8, 128], strides = [1, 1]} : vector<8x384xf32> to vector<8x128xf32>
    %112 = vector.extract_strided_slice %94 {offsets = [0, 256], sizes = [8, 128], strides = [1, 1]} : vector<8x384xf32> to vector<8x128xf32>
    %113 = arith.mulf %102, %112 : vector<8x128xf32>
    %114 = arith.addf %111, %113 : vector<8x128xf32>
    %115 = math.tanh %114 : vector<8x128xf32>
    %cst_41 = arith.constant 1.000000e+00 : f32
    %116 = vector.broadcast %cst_41 : f32 to vector<8x128xf32>
    %117 = arith.subf %116, %110 : vector<8x128xf32>
    %118 = arith.mulf %117, %115 : vector<8x128xf32>
    %119 = arith.mulf %110, %90 : vector<8x128xf32>
    %120 = arith.addf %118, %119 : vector<8x128xf32>
    %121 = vector.extract_strided_slice %21 {offsets = [24, 0], sizes = [8, 384], strides = [1, 1]} : vector<64x384xf32> to vector<8x384xf32>
    %122 = arith.truncf %120 : vector<8x128xf32> to vector<8x128xbf16>
    %cst_42 = arith.constant dense<0.000000e+00> : vector<8x384xf32>
    %123 = tpu.matmul %122, %0, %cst_42 {dimension_numbers = #tpu.dot_dimension_numbers<[1], [0], [0], [1], [0, 0, 1, 1], [], []>} : vector<8x128xbf16>, vector<128x384xbf16>, vector<8x384xf32> -> vector<8x384xf32>
    %124 = arith.addf %123, %6 : vector<8x384xf32>
    %125 = vector.extract_strided_slice %121 {offsets = [0, 0], sizes = [8, 128], strides = [1, 1]} : vector<8x384xf32> to vector<8x128xf32>
    %126 = vector.extract_strided_slice %124 {offsets = [0, 0], sizes = [8, 128], strides = [1, 1]} : vector<8x384xf32> to vector<8x128xf32>
    %127 = arith.addf %125, %126 : vector<8x128xf32>
    %128 = arith.negf %127 : vector<8x128xf32>
    %129 = math.exp %128 : vector<8x128xf32>
    %cst_43 = arith.constant 1.000000e+00 : f32
    %130 = vector.broadcast %cst_43 : f32 to vector<8x128xf32>
    %131 = arith.addf %130, %129 : vector<8x128xf32>
    %132 = arith.divf %130, %131 : vector<8x128xf32>
    %133 = vector.extract_strided_slice %121 {offsets = [0, 128], sizes = [8, 128], strides = [1, 1]} : vector<8x384xf32> to vector<8x128xf32>
    %134 = vector.extract_strided_slice %124 {offsets = [0, 128], sizes = [8, 128], strides = [1, 1]} : vector<8x384xf32> to vector<8x128xf32>
    %135 = arith.addf %133, %134 : vector<8x128xf32>
    %136 = arith.negf %135 : vector<8x128xf32>
    %137 = math.exp %136 : vector<8x128xf32>
    %cst_44 = arith.constant 1.000000e+00 : f32
    %138 = vector.broadcast %cst_44 : f32 to vector<8x128xf32>
    %139 = arith.addf %138, %137 : vector<8x128xf32>
    %140 = arith.divf %138, %139 : vector<8x128xf32>
    %141 = vector.extract_strided_slice %121 {offsets = [0, 256], sizes = [8, 128], strides = [1, 1]} : vector<8x384xf32> to vector<8x128xf32>
    %142 = vector.extract_strided_slice %124 {offsets = [0, 256], sizes = [8, 128], strides = [1, 1]} : vector<8x384xf32> to vector<8x128xf32>
    %143 = arith.mulf %132, %142 : vector<8x128xf32>
    %144 = arith.addf %141, %143 : vector<8x128xf32>
    %145 = math.tanh %144 : vector<8x128xf32>
    %cst_45 = arith.constant 1.000000e+00 : f32
    %146 = vector.broadcast %cst_45 : f32 to vector<8x128xf32>
    %147 = arith.subf %146, %140 : vector<8x128xf32>
    %148 = arith.mulf %147, %145 : vector<8x128xf32>
    %149 = arith.mulf %140, %120 : vector<8x128xf32>
    %150 = arith.addf %148, %149 : vector<8x128xf32>
    %151 = vector.extract_strided_slice %21 {offsets = [32, 0], sizes = [8, 384], strides = [1, 1]} : vector<64x384xf32> to vector<8x384xf32>
    %152 = arith.truncf %150 : vector<8x128xf32> to vector<8x128xbf16>
    %cst_46 = arith.constant dense<0.000000e+00> : vector<8x384xf32>
    %153 = tpu.matmul %152, %0, %cst_46 {dimension_numbers = #tpu.dot_dimension_numbers<[1], [0], [0], [1], [0, 0, 1, 1], [], []>} : vector<8x128xbf16>, vector<128x384xbf16>, vector<8x384xf32> -> vector<8x384xf32>
    %154 = arith.addf %153, %6 : vector<8x384xf32>
    %155 = vector.extract_strided_slice %151 {offsets = [0, 0], sizes = [8, 128], strides = [1, 1]} : vector<8x384xf32> to vector<8x128xf32>
    %156 = vector.extract_strided_slice %154 {offsets = [0, 0], sizes = [8, 128], strides = [1, 1]} : vector<8x384xf32> to vector<8x128xf32>
    %157 = arith.addf %155, %156 : vector<8x128xf32>
    %158 = arith.negf %157 : vector<8x128xf32>
    %159 = math.exp %158 : vector<8x128xf32>
    %cst_47 = arith.constant 1.000000e+00 : f32
    %160 = vector.broadcast %cst_47 : f32 to vector<8x128xf32>
    %161 = arith.addf %160, %159 : vector<8x128xf32>
    %162 = arith.divf %160, %161 : vector<8x128xf32>
    %163 = vector.extract_strided_slice %151 {offsets = [0, 128], sizes = [8, 128], strides = [1, 1]} : vector<8x384xf32> to vector<8x128xf32>
    %164 = vector.extract_strided_slice %154 {offsets = [0, 128], sizes = [8, 128], strides = [1, 1]} : vector<8x384xf32> to vector<8x128xf32>
    %165 = arith.addf %163, %164 : vector<8x128xf32>
    %166 = arith.negf %165 : vector<8x128xf32>
    %167 = math.exp %166 : vector<8x128xf32>
    %cst_48 = arith.constant 1.000000e+00 : f32
    %168 = vector.broadcast %cst_48 : f32 to vector<8x128xf32>
    %169 = arith.addf %168, %167 : vector<8x128xf32>
    %170 = arith.divf %168, %169 : vector<8x128xf32>
    %171 = vector.extract_strided_slice %151 {offsets = [0, 256], sizes = [8, 128], strides = [1, 1]} : vector<8x384xf32> to vector<8x128xf32>
    %172 = vector.extract_strided_slice %154 {offsets = [0, 256], sizes = [8, 128], strides = [1, 1]} : vector<8x384xf32> to vector<8x128xf32>
    %173 = arith.mulf %162, %172 : vector<8x128xf32>
    %174 = arith.addf %171, %173 : vector<8x128xf32>
    %175 = math.tanh %174 : vector<8x128xf32>
    %cst_49 = arith.constant 1.000000e+00 : f32
    %176 = vector.broadcast %cst_49 : f32 to vector<8x128xf32>
    %177 = arith.subf %176, %170 : vector<8x128xf32>
    %178 = arith.mulf %177, %175 : vector<8x128xf32>
    %179 = arith.mulf %170, %150 : vector<8x128xf32>
    %180 = arith.addf %178, %179 : vector<8x128xf32>
    %181 = vector.extract_strided_slice %21 {offsets = [40, 0], sizes = [8, 384], strides = [1, 1]} : vector<64x384xf32> to vector<8x384xf32>
    %182 = arith.truncf %180 : vector<8x128xf32> to vector<8x128xbf16>
    %cst_50 = arith.constant dense<0.000000e+00> : vector<8x384xf32>
    %183 = tpu.matmul %182, %0, %cst_50 {dimension_numbers = #tpu.dot_dimension_numbers<[1], [0], [0], [1], [0, 0, 1, 1], [], []>} : vector<8x128xbf16>, vector<128x384xbf16>, vector<8x384xf32> -> vector<8x384xf32>
    %184 = arith.addf %183, %6 : vector<8x384xf32>
    %185 = vector.extract_strided_slice %181 {offsets = [0, 0], sizes = [8, 128], strides = [1, 1]} : vector<8x384xf32> to vector<8x128xf32>
    %186 = vector.extract_strided_slice %184 {offsets = [0, 0], sizes = [8, 128], strides = [1, 1]} : vector<8x384xf32> to vector<8x128xf32>
    %187 = arith.addf %185, %186 : vector<8x128xf32>
    %188 = arith.negf %187 : vector<8x128xf32>
    %189 = math.exp %188 : vector<8x128xf32>
    %cst_51 = arith.constant 1.000000e+00 : f32
    %190 = vector.broadcast %cst_51 : f32 to vector<8x128xf32>
    %191 = arith.addf %190, %189 : vector<8x128xf32>
    %192 = arith.divf %190, %191 : vector<8x128xf32>
    %193 = vector.extract_strided_slice %181 {offsets = [0, 128], sizes = [8, 128], strides = [1, 1]} : vector<8x384xf32> to vector<8x128xf32>
    %194 = vector.extract_strided_slice %184 {offsets = [0, 128], sizes = [8, 128], strides = [1, 1]} : vector<8x384xf32> to vector<8x128xf32>
    %195 = arith.addf %193, %194 : vector<8x128xf32>
    %196 = arith.negf %195 : vector<8x128xf32>
    %197 = math.exp %196 : vector<8x128xf32>
    %cst_52 = arith.constant 1.000000e+00 : f32
    %198 = vector.broadcast %cst_52 : f32 to vector<8x128xf32>
    %199 = arith.addf %198, %197 : vector<8x128xf32>
    %200 = arith.divf %198, %199 : vector<8x128xf32>
    %201 = vector.extract_strided_slice %181 {offsets = [0, 256], sizes = [8, 128], strides = [1, 1]} : vector<8x384xf32> to vector<8x128xf32>
    %202 = vector.extract_strided_slice %184 {offsets = [0, 256], sizes = [8, 128], strides = [1, 1]} : vector<8x384xf32> to vector<8x128xf32>
    %203 = arith.mulf %192, %202 : vector<8x128xf32>
    %204 = arith.addf %201, %203 : vector<8x128xf32>
    %205 = math.tanh %204 : vector<8x128xf32>
    %cst_53 = arith.constant 1.000000e+00 : f32
    %206 = vector.broadcast %cst_53 : f32 to vector<8x128xf32>
    %207 = arith.subf %206, %200 : vector<8x128xf32>
    %208 = arith.mulf %207, %205 : vector<8x128xf32>
    %209 = arith.mulf %200, %180 : vector<8x128xf32>
    %210 = arith.addf %208, %209 : vector<8x128xf32>
    %211 = vector.extract_strided_slice %21 {offsets = [48, 0], sizes = [8, 384], strides = [1, 1]} : vector<64x384xf32> to vector<8x384xf32>
    %212 = arith.truncf %210 : vector<8x128xf32> to vector<8x128xbf16>
    %cst_54 = arith.constant dense<0.000000e+00> : vector<8x384xf32>
    %213 = tpu.matmul %212, %0, %cst_54 {dimension_numbers = #tpu.dot_dimension_numbers<[1], [0], [0], [1], [0, 0, 1, 1], [], []>} : vector<8x128xbf16>, vector<128x384xbf16>, vector<8x384xf32> -> vector<8x384xf32>
    %214 = arith.addf %213, %6 : vector<8x384xf32>
    %215 = vector.extract_strided_slice %211 {offsets = [0, 0], sizes = [8, 128], strides = [1, 1]} : vector<8x384xf32> to vector<8x128xf32>
    %216 = vector.extract_strided_slice %214 {offsets = [0, 0], sizes = [8, 128], strides = [1, 1]} : vector<8x384xf32> to vector<8x128xf32>
    %217 = arith.addf %215, %216 : vector<8x128xf32>
    %218 = arith.negf %217 : vector<8x128xf32>
    %219 = math.exp %218 : vector<8x128xf32>
    %cst_55 = arith.constant 1.000000e+00 : f32
    %220 = vector.broadcast %cst_55 : f32 to vector<8x128xf32>
    %221 = arith.addf %220, %219 : vector<8x128xf32>
    %222 = arith.divf %220, %221 : vector<8x128xf32>
    %223 = vector.extract_strided_slice %211 {offsets = [0, 128], sizes = [8, 128], strides = [1, 1]} : vector<8x384xf32> to vector<8x128xf32>
    %224 = vector.extract_strided_slice %214 {offsets = [0, 128], sizes = [8, 128], strides = [1, 1]} : vector<8x384xf32> to vector<8x128xf32>
    %225 = arith.addf %223, %224 : vector<8x128xf32>
    %226 = arith.negf %225 : vector<8x128xf32>
    %227 = math.exp %226 : vector<8x128xf32>
    %cst_56 = arith.constant 1.000000e+00 : f32
    %228 = vector.broadcast %cst_56 : f32 to vector<8x128xf32>
    %229 = arith.addf %228, %227 : vector<8x128xf32>
    %230 = arith.divf %228, %229 : vector<8x128xf32>
    %231 = vector.extract_strided_slice %211 {offsets = [0, 256], sizes = [8, 128], strides = [1, 1]} : vector<8x384xf32> to vector<8x128xf32>
    %232 = vector.extract_strided_slice %214 {offsets = [0, 256], sizes = [8, 128], strides = [1, 1]} : vector<8x384xf32> to vector<8x128xf32>
    %233 = arith.mulf %222, %232 : vector<8x128xf32>
    %234 = arith.addf %231, %233 : vector<8x128xf32>
    %235 = math.tanh %234 : vector<8x128xf32>
    %cst_57 = arith.constant 1.000000e+00 : f32
    %236 = vector.broadcast %cst_57 : f32 to vector<8x128xf32>
    %237 = arith.subf %236, %230 : vector<8x128xf32>
    %238 = arith.mulf %237, %235 : vector<8x128xf32>
    %239 = arith.mulf %230, %210 : vector<8x128xf32>
    %240 = arith.addf %238, %239 : vector<8x128xf32>
    %241 = vector.extract_strided_slice %21 {offsets = [56, 0], sizes = [8, 384], strides = [1, 1]} : vector<64x384xf32> to vector<8x384xf32>
    %242 = arith.truncf %240 : vector<8x128xf32> to vector<8x128xbf16>
    %cst_58 = arith.constant dense<0.000000e+00> : vector<8x384xf32>
    %243 = tpu.matmul %242, %0, %cst_58 {dimension_numbers = #tpu.dot_dimension_numbers<[1], [0], [0], [1], [0, 0, 1, 1], [], []>} : vector<8x128xbf16>, vector<128x384xbf16>, vector<8x384xf32> -> vector<8x384xf32>
    %244 = arith.addf %243, %6 : vector<8x384xf32>
    %245 = vector.extract_strided_slice %241 {offsets = [0, 0], sizes = [8, 128], strides = [1, 1]} : vector<8x384xf32> to vector<8x128xf32>
    %246 = vector.extract_strided_slice %244 {offsets = [0, 0], sizes = [8, 128], strides = [1, 1]} : vector<8x384xf32> to vector<8x128xf32>
    %247 = arith.addf %245, %246 : vector<8x128xf32>
    %248 = arith.negf %247 : vector<8x128xf32>
    %249 = math.exp %248 : vector<8x128xf32>
    %cst_59 = arith.constant 1.000000e+00 : f32
    %250 = vector.broadcast %cst_59 : f32 to vector<8x128xf32>
    %251 = arith.addf %250, %249 : vector<8x128xf32>
    %252 = arith.divf %250, %251 : vector<8x128xf32>
    %253 = vector.extract_strided_slice %241 {offsets = [0, 128], sizes = [8, 128], strides = [1, 1]} : vector<8x384xf32> to vector<8x128xf32>
    %254 = vector.extract_strided_slice %244 {offsets = [0, 128], sizes = [8, 128], strides = [1, 1]} : vector<8x384xf32> to vector<8x128xf32>
    %255 = arith.addf %253, %254 : vector<8x128xf32>
    %256 = arith.negf %255 : vector<8x128xf32>
    %257 = math.exp %256 : vector<8x128xf32>
    %cst_60 = arith.constant 1.000000e+00 : f32
    %258 = vector.broadcast %cst_60 : f32 to vector<8x128xf32>
    %259 = arith.addf %258, %257 : vector<8x128xf32>
    %260 = arith.divf %258, %259 : vector<8x128xf32>
    %261 = vector.extract_strided_slice %241 {offsets = [0, 256], sizes = [8, 128], strides = [1, 1]} : vector<8x384xf32> to vector<8x128xf32>
    %262 = vector.extract_strided_slice %244 {offsets = [0, 256], sizes = [8, 128], strides = [1, 1]} : vector<8x384xf32> to vector<8x128xf32>
    %263 = arith.mulf %252, %262 : vector<8x128xf32>
    %264 = arith.addf %261, %263 : vector<8x128xf32>
    %265 = math.tanh %264 : vector<8x128xf32>
    %cst_61 = arith.constant 1.000000e+00 : f32
    %266 = vector.broadcast %cst_61 : f32 to vector<8x128xf32>
    %267 = arith.subf %266, %260 : vector<8x128xf32>
    %268 = arith.mulf %267, %265 : vector<8x128xf32>
    %269 = arith.mulf %260, %240 : vector<8x128xf32>
    %270 = arith.addf %268, %269 : vector<8x128xf32>
    %cst_62 = arith.constant 0.000000e+00 : f32
    %271 = vector.broadcast %cst_62 : f32 to vector<8x128xf32>
    %c0_63 = arith.constant 0 : index
    %c0_64 = arith.constant 0 : index
    %c0_65 = arith.constant 0 : index
    %272 = vector.load %arg13[%c0_63, %c0_64, %c0_65] : memref<8x8x128xf32, #tpu.memory_space<vmem>>, vector<1x8x128xf32>
    %273 = vector.shape_cast %272 : vector<1x8x128xf32> to vector<8x128xf32>
    %274 = vector.shape_cast %271 : vector<8x128xf32> to vector<1x8x128xf32>
    tpu.vector_store %arg13[%c0_63, %c0_64, %c0_65], %274 {strides = array<i32>} : memref<8x8x128xf32, #tpu.memory_space<vmem>>, vector<1x8x128xf32>,
    %275 = vector.extract_strided_slice %26 {offsets = [0, 0], sizes = [8, 384], strides = [1, 1]} : vector<64x384xf32> to vector<8x384xf32>
    %276 = arith.truncf %270 : vector<8x128xf32> to vector<8x128xbf16>
    %cst_66 = arith.constant dense<0.000000e+00> : vector<8x384xf32>
    %277 = tpu.matmul %276, %1, %cst_66 {dimension_numbers = #tpu.dot_dimension_numbers<[1], [0], [0], [1], [0, 0, 1, 1], [], []>} : vector<8x128xbf16>, vector<128x384xbf16>, vector<8x384xf32> -> vector<8x384xf32>
    %278 = arith.addf %277, %9 : vector<8x384xf32>
    %279 = vector.extract_strided_slice %275 {offsets = [0, 0], sizes = [8, 128], strides = [1, 1]} : vector<8x384xf32> to vector<8x128xf32>
    %280 = vector.extract_strided_slice %278 {offsets = [0, 0], sizes = [8, 128], strides = [1, 1]} : vector<8x384xf32> to vector<8x128xf32>
    %281 = arith.addf %279, %280 : vector<8x128xf32>
    %282 = arith.negf %281 : vector<8x128xf32>
    %283 = math.exp %282 : vector<8x128xf32>
    %cst_67 = arith.constant 1.000000e+00 : f32
    %284 = vector.broadcast %cst_67 : f32 to vector<8x128xf32>
    %285 = arith.addf %284, %283 : vector<8x128xf32>
    %286 = arith.divf %284, %285 : vector<8x128xf32>
    %287 = vector.extract_strided_slice %275 {offsets = [0, 128], sizes = [8, 128], strides = [1, 1]} : vector<8x384xf32> to vector<8x128xf32>
    %288 = vector.extract_strided_slice %278 {offsets = [0, 128], sizes = [8, 128], strides = [1, 1]} : vector<8x384xf32> to vector<8x128xf32>
    %289 = arith.addf %287, %288 : vector<8x128xf32>
    %290 = arith.negf %289 : vector<8x128xf32>
    %291 = math.exp %290 : vector<8x128xf32>
    %cst_68 = arith.constant 1.000000e+00 : f32
    %292 = vector.broadcast %cst_68 : f32 to vector<8x128xf32>
    %293 = arith.addf %292, %291 : vector<8x128xf32>
    %294 = arith.divf %292, %293 : vector<8x128xf32>
    %295 = vector.extract_strided_slice %275 {offsets = [0, 256], sizes = [8, 128], strides = [1, 1]} : vector<8x384xf32> to vector<8x128xf32>
    %296 = vector.extract_strided_slice %278 {offsets = [0, 256], sizes = [8, 128], strides = [1, 1]} : vector<8x384xf32> to vector<8x128xf32>
    %297 = arith.mulf %286, %296 : vector<8x128xf32>
    %298 = arith.addf %295, %297 : vector<8x128xf32>
    %299 = math.tanh %298 : vector<8x128xf32>
    %cst_69 = arith.constant 1.000000e+00 : f32
    %300 = vector.broadcast %cst_69 : f32 to vector<8x128xf32>
    %301 = arith.subf %300, %294 : vector<8x128xf32>
    %302 = arith.mulf %301, %299 : vector<8x128xf32>
    %303 = arith.mulf %294, %270 : vector<8x128xf32>
    %304 = arith.addf %302, %303 : vector<8x128xf32>
    %305 = arith.truncf %304 : vector<8x128xf32> to vector<8x128xbf16>
    %cst_70 = arith.constant dense<0.000000e+00> : vector<8x128xf32>
    %306 = tpu.matmul %305, %3, %cst_70 {dimension_numbers = #tpu.dot_dimension_numbers<[1], [0], [0], [1], [0, 0, 1, 1], [], []>} : vector<8x128xbf16>, vector<128x128xbf16>, vector<8x128xf32> -> vector<8x128xf32>
    %307 = arith.addf %306, %15 : vector<8x128xf32>
    %c1 = arith.constant 1 : index
    %c0_71 = arith.constant 0 : index
    %c0_72 = arith.constant 0 : index
    %308 = vector.load %arg13[%c1, %c0_71, %c0_72] : memref<8x8x128xf32, #tpu.memory_space<vmem>>, vector<1x8x128xf32>
    %309 = vector.shape_cast %308 : vector<1x8x128xf32> to vector<8x128xf32>
    %310 = vector.shape_cast %307 : vector<8x128xf32> to vector<1x8x128xf32>
    tpu.vector_store %arg13[%c1, %c0_71, %c0_72], %310 {strides = array<i32>} : memref<8x8x128xf32, #tpu.memory_space<vmem>>, vector<1x8x128xf32>,
    %311 = tpu.reduce_index %307 {axis = 1 : i32, kind = #tpu.reduction_kind<arg_max>} : vector<8x128xf32> -> vector<8xi32>
    %312 = tpu.iota {dimensions = array<i32: 1>} : vector<8x128xi32>
    %313 = vector.shape_cast %311 : vector<8xi32> to vector<8x1xi32>
    %314 = vector.broadcast %313 : vector<8x1xi32> to vector<8x128xi32>
    %315 = arith.cmpi eq, %312, %314 : vector<8x128xi32>
    %316 = arith.extui %315 : vector<8x128xi1> to vector<8x128xi32>
    %317 = arith.sitofp %316 : vector<8x128xi32> to vector<8x128xf32>
    %318 = arith.truncf %317 : vector<8x128xf32> to vector<8x128xbf16>
    %cst_73 = arith.constant dense<0.000000e+00> : vector<8x384xf32>
    %319 = tpu.matmul %318, %29, %cst_73 {dimension_numbers = #tpu.dot_dimension_numbers<[1], [0], [0], [1], [0, 0, 1, 1], [], []>} : vector<8x128xbf16>, vector<128x384xbf16>, vector<8x384xf32> -> vector<8x384xf32>
    %320 = arith.addf %319, %12 : vector<8x384xf32>
    %321 = arith.truncf %304 : vector<8x128xf32> to vector<8x128xbf16>
    %cst_74 = arith.constant dense<0.000000e+00> : vector<8x384xf32>
    %322 = tpu.matmul %321, %1, %cst_74 {dimension_numbers = #tpu.dot_dimension_numbers<[1], [0], [0], [1], [0, 0, 1, 1], [], []>} : vector<8x128xbf16>, vector<128x384xbf16>, vector<8x384xf32> -> vector<8x384xf32>
    %323 = arith.addf %322, %9 : vector<8x384xf32>
    %324 = vector.extract_strided_slice %320 {offsets = [0, 0], sizes = [8, 128], strides = [1, 1]} : vector<8x384xf32> to vector<8x128xf32>
    %325 = vector.extract_strided_slice %323 {offsets = [0, 0], sizes = [8, 128], strides = [1, 1]} : vector<8x384xf32> to vector<8x128xf32>
    %326 = arith.addf %324, %325 : vector<8x128xf32>
    %327 = arith.negf %326 : vector<8x128xf32>
    %328 = math.exp %327 : vector<8x128xf32>
    %cst_75 = arith.constant 1.000000e+00 : f32
    %329 = vector.broadcast %cst_75 : f32 to vector<8x128xf32>
    %330 = arith.addf %329, %328 : vector<8x128xf32>
    %331 = arith.divf %329, %330 : vector<8x128xf32>
    %332 = vector.extract_strided_slice %320 {offsets = [0, 128], sizes = [8, 128], strides = [1, 1]} : vector<8x384xf32> to vector<8x128xf32>
    %333 = vector.extract_strided_slice %323 {offsets = [0, 128], sizes = [8, 128], strides = [1, 1]} : vector<8x384xf32> to vector<8x128xf32>
    %334 = arith.addf %332, %333 : vector<8x128xf32>
    %335 = arith.negf %334 : vector<8x128xf32>
    %336 = math.exp %335 : vector<8x128xf32>
    %cst_76 = arith.constant 1.000000e+00 : f32
    %337 = vector.broadcast %cst_76 : f32 to vector<8x128xf32>
    %338 = arith.addf %337, %336 : vector<8x128xf32>
    %339 = arith.divf %337, %338 : vector<8x128xf32>
    %340 = vector.extract_strided_slice %320 {offsets = [0, 256], sizes = [8, 128], strides = [1, 1]} : vector<8x384xf32> to vector<8x128xf32>
    %341 = vector.extract_strided_slice %323 {offsets = [0, 256], sizes = [8, 128], strides = [1, 1]} : vector<8x384xf32> to vector<8x128xf32>
    %342 = arith.mulf %331, %341 : vector<8x128xf32>
    %343 = arith.addf %340, %342 : vector<8x128xf32>
    %344 = math.tanh %343 : vector<8x128xf32>
    %cst_77 = arith.constant 1.000000e+00 : f32
    %345 = vector.broadcast %cst_77 : f32 to vector<8x128xf32>
    %346 = arith.subf %345, %339 : vector<8x128xf32>
    %347 = arith.mulf %346, %344 : vector<8x128xf32>
    %348 = arith.mulf %339, %304 : vector<8x128xf32>
    %349 = arith.addf %347, %348 : vector<8x128xf32>
    %350 = arith.truncf %349 : vector<8x128xf32> to vector<8x128xbf16>
    %cst_78 = arith.constant dense<0.000000e+00> : vector<8x128xf32>
    %351 = tpu.matmul %350, %3, %cst_78 {dimension_numbers = #tpu.dot_dimension_numbers<[1], [0], [0], [1], [0, 0, 1, 1], [], []>} : vector<8x128xbf16>, vector<128x128xbf16>, vector<8x128xf32> -> vector<8x128xf32>
    %352 = arith.addf %351, %15 : vector<8x128xf32>
    %c2 = arith.constant 2 : index
    %c0_79 = arith.constant 0 : index
    %c0_80 = arith.constant 0 : index
    %353 = vector.load %arg13[%c2, %c0_79, %c0_80] : memref<8x8x128xf32, #tpu.memory_space<vmem>>, vector<1x8x128xf32>
    %354 = vector.shape_cast %353 : vector<1x8x128xf32> to vector<8x128xf32>
    %355 = vector.shape_cast %352 : vector<8x128xf32> to vector<1x8x128xf32>
    tpu.vector_store %arg13[%c2, %c0_79, %c0_80], %355 {strides = array<i32>} : memref<8x8x128xf32, #tpu.memory_space<vmem>>, vector<1x8x128xf32>,
    %356 = tpu.reduce_index %352 {axis = 1 : i32, kind = #tpu.reduction_kind<arg_max>} : vector<8x128xf32> -> vector<8xi32>
    %357 = tpu.iota {dimensions = array<i32: 1>} : vector<8x128xi32>
    %358 = vector.shape_cast %356 : vector<8xi32> to vector<8x1xi32>
    %359 = vector.broadcast %358 : vector<8x1xi32> to vector<8x128xi32>
    %360 = arith.cmpi eq, %357, %359 : vector<8x128xi32>
    %361 = arith.extui %360 : vector<8x128xi1> to vector<8x128xi32>
    %362 = arith.sitofp %361 : vector<8x128xi32> to vector<8x128xf32>
    %363 = arith.truncf %362 : vector<8x128xf32> to vector<8x128xbf16>
    %cst_81 = arith.constant dense<0.000000e+00> : vector<8x384xf32>
    %364 = tpu.matmul %363, %29, %cst_81 {dimension_numbers = #tpu.dot_dimension_numbers<[1], [0], [0], [1], [0, 0, 1, 1], [], []>} : vector<8x128xbf16>, vector<128x384xbf16>, vector<8x384xf32> -> vector<8x384xf32>
    %365 = arith.addf %364, %12 : vector<8x384xf32>
    %366 = arith.truncf %349 : vector<8x128xf32> to vector<8x128xbf16>
    %cst_82 = arith.constant dense<0.000000e+00> : vector<8x384xf32>
    %367 = tpu.matmul %366, %1, %cst_82 {dimension_numbers = #tpu.dot_dimension_numbers<[1], [0], [0], [1], [0, 0, 1, 1], [], []>} : vector<8x128xbf16>, vector<128x384xbf16>, vector<8x384xf32> -> vector<8x384xf32>
    %368 = arith.addf %367, %9 : vector<8x384xf32>
    %369 = vector.extract_strided_slice %365 {offsets = [0, 0], sizes = [8, 128], strides = [1, 1]} : vector<8x384xf32> to vector<8x128xf32>
    %370 = vector.extract_strided_slice %368 {offsets = [0, 0], sizes = [8, 128], strides = [1, 1]} : vector<8x384xf32> to vector<8x128xf32>
    %371 = arith.addf %369, %370 : vector<8x128xf32>
    %372 = arith.negf %371 : vector<8x128xf32>
    %373 = math.exp %372 : vector<8x128xf32>
    %cst_83 = arith.constant 1.000000e+00 : f32
    %374 = vector.broadcast %cst_83 : f32 to vector<8x128xf32>
    %375 = arith.addf %374, %373 : vector<8x128xf32>
    %376 = arith.divf %374, %375 : vector<8x128xf32>
    %377 = vector.extract_strided_slice %365 {offsets = [0, 128], sizes = [8, 128], strides = [1, 1]} : vector<8x384xf32> to vector<8x128xf32>
    %378 = vector.extract_strided_slice %368 {offsets = [0, 128], sizes = [8, 128], strides = [1, 1]} : vector<8x384xf32> to vector<8x128xf32>
    %379 = arith.addf %377, %378 : vector<8x128xf32>
    %380 = arith.negf %379 : vector<8x128xf32>
    %381 = math.exp %380 : vector<8x128xf32>
    %cst_84 = arith.constant 1.000000e+00 : f32
    %382 = vector.broadcast %cst_84 : f32 to vector<8x128xf32>
    %383 = arith.addf %382, %381 : vector<8x128xf32>
    %384 = arith.divf %382, %383 : vector<8x128xf32>
    %385 = vector.extract_strided_slice %365 {offsets = [0, 256], sizes = [8, 128], strides = [1, 1]} : vector<8x384xf32> to vector<8x128xf32>
    %386 = vector.extract_strided_slice %368 {offsets = [0, 256], sizes = [8, 128], strides = [1, 1]} : vector<8x384xf32> to vector<8x128xf32>
    %387 = arith.mulf %376, %386 : vector<8x128xf32>
    %388 = arith.addf %385, %387 : vector<8x128xf32>
    %389 = math.tanh %388 : vector<8x128xf32>
    %cst_85 = arith.constant 1.000000e+00 : f32
    %390 = vector.broadcast %cst_85 : f32 to vector<8x128xf32>
    %391 = arith.subf %390, %384 : vector<8x128xf32>
    %392 = arith.mulf %391, %389 : vector<8x128xf32>
    %393 = arith.mulf %384, %349 : vector<8x128xf32>
    %394 = arith.addf %392, %393 : vector<8x128xf32>
    %395 = vector.extract_strided_slice %26 {offsets = [24, 0], sizes = [8, 384], strides = [1, 1]} : vector<64x384xf32> to vector<8x384xf32>
    %396 = arith.truncf %394 : vector<8x128xf32> to vector<8x128xbf16>
    %cst_86 = arith.constant dense<0.000000e+00> : vector<8x384xf32>
    %397 = tpu.matmul %396, %1, %cst_86 {dimension_numbers = #tpu.dot_dimension_numbers<[1], [0], [0], [1], [0, 0, 1, 1], [], []>} : vector<8x128xbf16>, vector<128x384xbf16>, vector<8x384xf32> -> vector<8x384xf32>
    %398 = arith.addf %397, %9 : vector<8x384xf32>
    %399 = vector.extract_strided_slice %395 {offsets = [0, 0], sizes = [8, 128], strides = [1, 1]} : vector<8x384xf32> to vector<8x128xf32>
    %400 = vector.extract_strided_slice %398 {offsets = [0, 0], sizes = [8, 128], strides = [1, 1]} : vector<8x384xf32> to vector<8x128xf32>
    %401 = arith.addf %399, %400 : vector<8x128xf32>
    %402 = arith.negf %401 : vector<8x128xf32>
    %403 = math.exp %402 : vector<8x128xf32>
    %cst_87 = arith.constant 1.000000e+00 : f32
    %404 = vector.broadcast %cst_87 : f32 to vector<8x128xf32>
    %405 = arith.addf %404, %403 : vector<8x128xf32>
    %406 = arith.divf %404, %405 : vector<8x128xf32>
    %407 = vector.extract_strided_slice %395 {offsets = [0, 128], sizes = [8, 128], strides = [1, 1]} : vector<8x384xf32> to vector<8x128xf32>
    %408 = vector.extract_strided_slice %398 {offsets = [0, 128], sizes = [8, 128], strides = [1, 1]} : vector<8x384xf32> to vector<8x128xf32>
    %409 = arith.addf %407, %408 : vector<8x128xf32>
    %410 = arith.negf %409 : vector<8x128xf32>
    %411 = math.exp %410 : vector<8x128xf32>
    %cst_88 = arith.constant 1.000000e+00 : f32
    %412 = vector.broadcast %cst_88 : f32 to vector<8x128xf32>
    %413 = arith.addf %412, %411 : vector<8x128xf32>
    %414 = arith.divf %412, %413 : vector<8x128xf32>
    %415 = vector.extract_strided_slice %395 {offsets = [0, 256], sizes = [8, 128], strides = [1, 1]} : vector<8x384xf32> to vector<8x128xf32>
    %416 = vector.extract_strided_slice %398 {offsets = [0, 256], sizes = [8, 128], strides = [1, 1]} : vector<8x384xf32> to vector<8x128xf32>
    %417 = arith.mulf %406, %416 : vector<8x128xf32>
    %418 = arith.addf %415, %417 : vector<8x128xf32>
    %419 = math.tanh %418 : vector<8x128xf32>
    %cst_89 = arith.constant 1.000000e+00 : f32
    %420 = vector.broadcast %cst_89 : f32 to vector<8x128xf32>
    %421 = arith.subf %420, %414 : vector<8x128xf32>
    %422 = arith.mulf %421, %419 : vector<8x128xf32>
    %423 = arith.mulf %414, %394 : vector<8x128xf32>
    %424 = arith.addf %422, %423 : vector<8x128xf32>
    %425 = vector.extract_strided_slice %26 {offsets = [32, 0], sizes = [8, 384], strides = [1, 1]} : vector<64x384xf32> to vector<8x384xf32>
    %426 = arith.truncf %424 : vector<8x128xf32> to vector<8x128xbf16>
    %cst_90 = arith.constant dense<0.000000e+00> : vector<8x384xf32>
    %427 = tpu.matmul %426, %1, %cst_90 {dimension_numbers = #tpu.dot_dimension_numbers<[1], [0], [0], [1], [0, 0, 1, 1], [], []>} : vector<8x128xbf16>, vector<128x384xbf16>, vector<8x384xf32> -> vector<8x384xf32>
    %428 = arith.addf %427, %9 : vector<8x384xf32>
    %429 = vector.extract_strided_slice %425 {offsets = [0, 0], sizes = [8, 128], strides = [1, 1]} : vector<8x384xf32> to vector<8x128xf32>
    %430 = vector.extract_strided_slice %428 {offsets = [0, 0], sizes = [8, 128], strides = [1, 1]} : vector<8x384xf32> to vector<8x128xf32>
    %431 = arith.addf %429, %430 : vector<8x128xf32>
    %432 = arith.negf %431 : vector<8x128xf32>
    %433 = math.exp %432 : vector<8x128xf32>
    %cst_91 = arith.constant 1.000000e+00 : f32
    %434 = vector.broadcast %cst_91 : f32 to vector<8x128xf32>
    %435 = arith.addf %434, %433 : vector<8x128xf32>
    %436 = arith.divf %434, %435 : vector<8x128xf32>
    %437 = vector.extract_strided_slice %425 {offsets = [0, 128], sizes = [8, 128], strides = [1, 1]} : vector<8x384xf32> to vector<8x128xf32>
    %438 = vector.extract_strided_slice %428 {offsets = [0, 128], sizes = [8, 128], strides = [1, 1]} : vector<8x384xf32> to vector<8x128xf32>
    %439 = arith.addf %437, %438 : vector<8x128xf32>
    %440 = arith.negf %439 : vector<8x128xf32>
    %441 = math.exp %440 : vector<8x128xf32>
    %cst_92 = arith.constant 1.000000e+00 : f32
    %442 = vector.broadcast %cst_92 : f32 to vector<8x128xf32>
    %443 = arith.addf %442, %441 : vector<8x128xf32>
    %444 = arith.divf %442, %443 : vector<8x128xf32>
    %445 = vector.extract_strided_slice %425 {offsets = [0, 256], sizes = [8, 128], strides = [1, 1]} : vector<8x384xf32> to vector<8x128xf32>
    %446 = vector.extract_strided_slice %428 {offsets = [0, 256], sizes = [8, 128], strides = [1, 1]} : vector<8x384xf32> to vector<8x128xf32>
    %447 = arith.mulf %436, %446 : vector<8x128xf32>
    %448 = arith.addf %445, %447 : vector<8x128xf32>
    %449 = math.tanh %448 : vector<8x128xf32>
    %cst_93 = arith.constant 1.000000e+00 : f32
    %450 = vector.broadcast %cst_93 : f32 to vector<8x128xf32>
    %451 = arith.subf %450, %444 : vector<8x128xf32>
    %452 = arith.mulf %451, %449 : vector<8x128xf32>
    %453 = arith.mulf %444, %424 : vector<8x128xf32>
    %454 = arith.addf %452, %453 : vector<8x128xf32>
    %455 = arith.truncf %454 : vector<8x128xf32> to vector<8x128xbf16>
    %cst_94 = arith.constant dense<0.000000e+00> : vector<8x128xf32>
    %456 = tpu.matmul %455, %3, %cst_94 {dimension_numbers = #tpu.dot_dimension_numbers<[1], [0], [0], [1], [0, 0, 1, 1], [], []>} : vector<8x128xbf16>, vector<128x128xbf16>, vector<8x128xf32> -> vector<8x128xf32>
    %457 = arith.addf %456, %15 : vector<8x128xf32>
    %c5 = arith.constant 5 : index
    %c0_95 = arith.constant 0 : index
    %c0_96 = arith.constant 0 : index
    %458 = vector.load %arg13[%c5, %c0_95, %c0_96] : memref<8x8x128xf32, #tpu.memory_space<vmem>>, vector<1x8x128xf32>
    %459 = vector.shape_cast %458 : vector<1x8x128xf32> to vector<8x128xf32>
    %460 = vector.shape_cast %457 : vector<8x128xf32> to vector<1x8x128xf32>
    tpu.vector_store %arg13[%c5, %c0_95, %c0_96], %460 {strides = array<i32>} : memref<8x8x128xf32, #tpu.memory_space<vmem>>, vector<1x8x128xf32>,
    %461 = tpu.reduce_index %457 {axis = 1 : i32, kind = #tpu.reduction_kind<arg_max>} : vector<8x128xf32> -> vector<8xi32>
    %462 = tpu.iota {dimensions = array<i32: 1>} : vector<8x128xi32>
    %463 = vector.shape_cast %461 : vector<8xi32> to vector<8x1xi32>
    %464 = vector.broadcast %463 : vector<8x1xi32> to vector<8x128xi32>
    %465 = arith.cmpi eq, %462, %464 : vector<8x128xi32>
    %466 = arith.extui %465 : vector<8x128xi1> to vector<8x128xi32>
    %467 = arith.sitofp %466 : vector<8x128xi32> to vector<8x128xf32>
    %468 = arith.truncf %467 : vector<8x128xf32> to vector<8x128xbf16>
    %cst_97 = arith.constant dense<0.000000e+00> : vector<8x384xf32>
    %469 = tpu.matmul %468, %29, %cst_97 {dimension_numbers = #tpu.dot_dimension_numbers<[1], [0], [0], [1], [0, 0, 1, 1], [], []>} : vector<8x128xbf16>, vector<128x384xbf16>, vector<8x384xf32> -> vector<8x384xf32>
    %470 = arith.addf %469, %12 : vector<8x384xf32>
    %471 = arith.truncf %454 : vector<8x128xf32> to vector<8x128xbf16>
    %cst_98 = arith.constant dense<0.000000e+00> : vector<8x384xf32>
    %472 = tpu.matmul %471, %1, %cst_98 {dimension_numbers = #tpu.dot_dimension_numbers<[1], [0], [0], [1], [0, 0, 1, 1], [], []>} : vector<8x128xbf16>, vector<128x384xbf16>, vector<8x384xf32> -> vector<8x384xf32>
    %473 = arith.addf %472, %9 : vector<8x384xf32>
    %474 = vector.extract_strided_slice %470 {offsets = [0, 0], sizes = [8, 128], strides = [1, 1]} : vector<8x384xf32> to vector<8x128xf32>
    %475 = vector.extract_strided_slice %473 {offsets = [0, 0], sizes = [8, 128], strides = [1, 1]} : vector<8x384xf32> to vector<8x128xf32>
    %476 = arith.addf %474, %475 : vector<8x128xf32>
    %477 = arith.negf %476 : vector<8x128xf32>
    %478 = math.exp %477 : vector<8x128xf32>
    %cst_99 = arith.constant 1.000000e+00 : f32
    %479 = vector.broadcast %cst_99 : f32 to vector<8x128xf32>
    %480 = arith.addf %479, %478 : vector<8x128xf32>
    %481 = arith.divf %479, %480 : vector<8x128xf32>
    %482 = vector.extract_strided_slice %470 {offsets = [0, 128], sizes = [8, 128], strides = [1, 1]} : vector<8x384xf32> to vector<8x128xf32>
    %483 = vector.extract_strided_slice %473 {offsets = [0, 128], sizes = [8, 128], strides = [1, 1]} : vector<8x384xf32> to vector<8x128xf32>
    %484 = arith.addf %482, %483 : vector<8x128xf32>
    %485 = arith.negf %484 : vector<8x128xf32>
    %486 = math.exp %485 : vector<8x128xf32>
    %cst_100 = arith.constant 1.000000e+00 : f32
    %487 = vector.broadcast %cst_100 : f32 to vector<8x128xf32>
    %488 = arith.addf %487, %486 : vector<8x128xf32>
    %489 = arith.divf %487, %488 : vector<8x128xf32>
    %490 = vector.extract_strided_slice %470 {offsets = [0, 256], sizes = [8, 128], strides = [1, 1]} : vector<8x384xf32> to vector<8x128xf32>
    %491 = vector.extract_strided_slice %473 {offsets = [0, 256], sizes = [8, 128], strides = [1, 1]} : vector<8x384xf32> to vector<8x128xf32>
    %492 = arith.mulf %481, %491 : vector<8x128xf32>
    %493 = arith.addf %490, %492 : vector<8x128xf32>
    %494 = math.tanh %493 : vector<8x128xf32>
    %cst_101 = arith.constant 1.000000e+00 : f32
    %495 = vector.broadcast %cst_101 : f32 to vector<8x128xf32>
    %496 = arith.subf %495, %489 : vector<8x128xf32>
    %497 = arith.mulf %496, %494 : vector<8x128xf32>
    %498 = arith.mulf %489, %454 : vector<8x128xf32>
    %499 = arith.addf %497, %498 : vector<8x128xf32>
    %500 = vector.extract_strided_slice %26 {offsets = [48, 0], sizes = [8, 384], strides = [1, 1]} : vector<64x384xf32> to vector<8x384xf32>
    %501 = arith.truncf %499 : vector<8x128xf32> to vector<8x128xbf16>
    %cst_102 = arith.constant dense<0.000000e+00> : vector<8x384xf32>
    %502 = tpu.matmul %501, %1, %cst_102 {dimension_numbers = #tpu.dot_dimension_numbers<[1], [0], [0], [1], [0, 0, 1, 1], [], []>} : vector<8x128xbf16>, vector<128x384xbf16>, vector<8x384xf32> -> vector<8x384xf32>
    %503 = arith.addf %502, %9 : vector<8x384xf32>
    %504 = vector.extract_strided_slice %500 {offsets = [0, 0], sizes = [8, 128], strides = [1, 1]} : vector<8x384xf32> to vector<8x128xf32>
    %505 = vector.extract_strided_slice %503 {offsets = [0, 0], sizes = [8, 128], strides = [1, 1]} : vector<8x384xf32> to vector<8x128xf32>
    %506 = arith.addf %504, %505 : vector<8x128xf32>
    %507 = arith.negf %506 : vector<8x128xf32>
    %508 = math.exp %507 : vector<8x128xf32>
    %cst_103 = arith.constant 1.000000e+00 : f32
    %509 = vector.broadcast %cst_103 : f32 to vector<8x128xf32>
    %510 = arith.addf %509, %508 : vector<8x128xf32>
    %511 = arith.divf %509, %510 : vector<8x128xf32>
    %512 = vector.extract_strided_slice %500 {offsets = [0, 128], sizes = [8, 128], strides = [1, 1]} : vector<8x384xf32> to vector<8x128xf32>
    %513 = vector.extract_strided_slice %503 {offsets = [0, 128], sizes = [8, 128], strides = [1, 1]} : vector<8x384xf32> to vector<8x128xf32>
    %514 = arith.addf %512, %513 : vector<8x128xf32>
    %515 = arith.negf %514 : vector<8x128xf32>
    %516 = math.exp %515 : vector<8x128xf32>
    %cst_104 = arith.constant 1.000000e+00 : f32
    %517 = vector.broadcast %cst_104 : f32 to vector<8x128xf32>
    %518 = arith.addf %517, %516 : vector<8x128xf32>
    %519 = arith.divf %517, %518 : vector<8x128xf32>
    %520 = vector.extract_strided_slice %500 {offsets = [0, 256], sizes = [8, 128], strides = [1, 1]} : vector<8x384xf32> to vector<8x128xf32>
    %521 = vector.extract_strided_slice %503 {offsets = [0, 256], sizes = [8, 128], strides = [1, 1]} : vector<8x384xf32> to vector<8x128xf32>
    %522 = arith.mulf %511, %521 : vector<8x128xf32>
    %523 = arith.addf %520, %522 : vector<8x128xf32>
    %524 = math.tanh %523 : vector<8x128xf32>
    %cst_105 = arith.constant 1.000000e+00 : f32
    %525 = vector.broadcast %cst_105 : f32 to vector<8x128xf32>
    %526 = arith.subf %525, %519 : vector<8x128xf32>
    %527 = arith.mulf %526, %524 : vector<8x128xf32>
    %528 = arith.mulf %519, %499 : vector<8x128xf32>
    %529 = arith.addf %527, %528 : vector<8x128xf32>
    %530 = tpu.concatenate %394, %424, %499, %529 in 0 : vector<8x128xf32>, vector<8x128xf32>, vector<8x128xf32>, vector<8x128xf32> -> vector<32x128xf32>
    %531 = arith.truncf %530 : vector<32x128xf32> to vector<32x128xbf16>
    %cst_106 = arith.constant dense<0.000000e+00> : vector<32x128xf32>
    %532 = tpu.matmul %531, %3, %cst_106 {dimension_numbers = #tpu.dot_dimension_numbers<[1], [0], [0], [1], [0, 0, 1, 1], [], []>} : vector<32x128xbf16>, vector<128x128xbf16>, vector<32x128xf32> -> vector<32x128xf32>
    %c0_107 = arith.constant 0 : index
    %c0_108 = arith.constant 0 : index
    %533 = vector.load %arg12[%c0_107, %c0_108] : memref<1x128xf32, #tpu.memory_space<vmem>>, vector<1x128xf32>
    %534 = vector.broadcast %533 : vector<1x128xf32> to vector<32x128xf32>
    %535 = arith.addf %532, %534 : vector<32x128xf32>
    %536 = vector.extract_strided_slice %535 {offsets = [0, 0], sizes = [8, 128], strides = [1, 1]} : vector<32x128xf32> to vector<8x128xf32>
    %c3 = arith.constant 3 : index
    %c0_109 = arith.constant 0 : index
    %c0_110 = arith.constant 0 : index
    %537 = vector.load %arg13[%c3, %c0_109, %c0_110] : memref<8x8x128xf32, #tpu.memory_space<vmem>>, vector<1x8x128xf32>
    %538 = vector.shape_cast %537 : vector<1x8x128xf32> to vector<8x128xf32>
    %539 = vector.shape_cast %536 : vector<8x128xf32> to vector<1x8x128xf32>
    tpu.vector_store %arg13[%c3, %c0_109, %c0_110], %539 {strides = array<i32>} : memref<8x8x128xf32, #tpu.memory_space<vmem>>, vector<1x8x128xf32>,
    %540 = vector.extract_strided_slice %535 {offsets = [8, 0], sizes = [8, 128], strides = [1, 1]} : vector<32x128xf32> to vector<8x128xf32>
    %c4 = arith.constant 4 : index
    %c0_111 = arith.constant 0 : index
    %c0_112 = arith.constant 0 : index
    %541 = vector.load %arg13[%c4, %c0_111, %c0_112] : memref<8x8x128xf32, #tpu.memory_space<vmem>>, vector<1x8x128xf32>
    %542 = vector.shape_cast %541 : vector<1x8x128xf32> to vector<8x128xf32>
    %543 = vector.shape_cast %540 : vector<8x128xf32> to vector<1x8x128xf32>
    tpu.vector_store %arg13[%c4, %c0_111, %c0_112], %543 {strides = array<i32>} : memref<8x8x128xf32, #tpu.memory_space<vmem>>, vector<1x8x128xf32>,
    %544 = vector.extract_strided_slice %535 {offsets = [16, 0], sizes = [8, 128], strides = [1, 1]} : vector<32x128xf32> to vector<8x128xf32>
    %c6 = arith.constant 6 : index
    %c0_113 = arith.constant 0 : index
    %c0_114 = arith.constant 0 : index
    %545 = vector.load %arg13[%c6, %c0_113, %c0_114] : memref<8x8x128xf32, #tpu.memory_space<vmem>>, vector<1x8x128xf32>
    %546 = vector.shape_cast %545 : vector<1x8x128xf32> to vector<8x128xf32>
    %547 = vector.shape_cast %544 : vector<8x128xf32> to vector<1x8x128xf32>
    tpu.vector_store %arg13[%c6, %c0_113, %c0_114], %547 {strides = array<i32>} : memref<8x8x128xf32, #tpu.memory_space<vmem>>, vector<1x8x128xf32>,
    %548 = vector.extract_strided_slice %535 {offsets = [24, 0], sizes = [8, 128], strides = [1, 1]} : vector<32x128xf32> to vector<8x128xf32>
    %c7 = arith.constant 7 : index
    %c0_115 = arith.constant 0 : index
    %c0_116 = arith.constant 0 : index
    %549 = vector.load %arg13[%c7, %c0_115, %c0_116] : memref<8x8x128xf32, #tpu.memory_space<vmem>>, vector<1x8x128xf32>
    %550 = vector.shape_cast %549 : vector<1x8x128xf32> to vector<8x128xf32>
    %551 = vector.shape_cast %548 : vector<8x128xf32> to vector<1x8x128xf32>
    tpu.vector_store %arg13[%c7, %c0_115, %c0_116], %551 {strides = array<i32>} : memref<8x8x128xf32, #tpu.memory_space<vmem>>, vector<1x8x128xf32>,
    return
  }
}

</mosaic_0001>

<llo_original>
// kernel: tpu_custom_call.1
$region0: #{tpu_custom_call.1}
  #allocation0 [shape = 'u32[]', space=smem, size = 0x4, offset = 0x4, fixed_abs, tag = 'smem constant byte address 0x4 - core index']
  #allocation1 [shape = 'u32[72,128]{1,0:T(1,128)}', space=vmem, size = 0x9000, scoped, tag = 'internal scratch']
  %s0 = inlined_call_operand.vmem [shape: bf16[64,32], index: 0, kind: input, shape index: {}]
  %s1 = inlined_call_operand.vmem [shape: bf16[64,32], index: 1, kind: input, shape index: {}]
  %s2 = inlined_call_operand.vmem [shape: bf16[128,32], index: 2, kind: input, shape index: {}]
  %s3 = inlined_call_operand.vmem [shape: bf16[32,384], index: 3, kind: input, shape index: {}]
  %s4 = inlined_call_operand.hbm [shape: bf16[128,384], index: 4, kind: input, shape index: {}]
  %s5 = inlined_call_operand.vmem [shape: f32[1,384], index: 5, kind: input, shape index: {}]
  %s6 = inlined_call_operand.vmem [shape: f32[1,384], index: 6, kind: input, shape index: {}]
  %s7 = inlined_call_operand.hbm [shape: bf16[32,384], index: 7, kind: input, shape index: {}]
  %s8 = inlined_call_operand.hbm [shape: bf16[128,384], index: 8, kind: input, shape index: {}]
  %s9 = inlined_call_operand.vmem [shape: f32[1,384], index: 9, kind: input, shape index: {}]
  %s10 = inlined_call_operand.vmem [shape: f32[1,384], index: 10, kind: input, shape index: {}]
  %s11 = inlined_call_operand.vmem [shape: bf16[128,128], index: 11, kind: input, shape index: {}]
  %s12 = inlined_call_operand.vmem [shape: f32[1,128], index: 12, kind: input, shape index: {}]
  %s13 = inlined_call_operand.hbm [shape: f32[8,8,128], index: 13, kind: output, shape index: {}]
  %s14 = sld [smem:[#allocation0]]
  $region74: #{tpu_custom_call.1} parent=0
    _
  %s16 = ssub.s32 1, %s14
  %s17 = scalar_select 0, %s16, %s14
  $region1: #{tpu_custom_call.1} parent=0
    #allocation2 [shape = 'u8[98304]{0}', space=vmem, size = 0x18000, scoped, tag = 'input window, operand 4, single buffered']
    #allocation3 [shape = 's32[1]{0}', space=sflag, size = 0x4, scoped, tag = 'scoped memory for tpu_custom_call.1']
    #allocation4 [shape = 's32[1]{0}', space=sflag, size = 0x4, scoped, tag = 'scoped memory for tpu_custom_call.1']
    #allocation5 [shape = 'u8[24576]{0}', space=vmem, size = 0x6000, scoped, tag = 'input window, operand 7, single buffered']
    #allocation6 [shape = 's32[1]{0}', space=sflag, size = 0x4, scoped, tag = 'scoped memory for tpu_custom_call.1']
    #allocation7 [shape = 'u8[98304]{0}', space=vmem, size = 0x18000, scoped, tag = 'input window, operand 8, single buffered']
    #allocation8 [shape = 'u8[32768]{0}', space=vmem, size = 0x8000, scoped, tag = 'output window, operand 0, single buffered']
    %18 = vsyncpa [#allocation3], 0
    %19 = vsyncpa [#allocation6], 0
    %20 = vsyncpa [#allocation4], 0
    // Predicated region
    $region2: #{tpu_custom_call.1} parent=1 // pred_check
      _
    $region3: #{tpu_custom_call.1} parent=1 // pred_check_branch
      %22 = sbr.rel (0) target = $region5
    $region4: #{tpu_custom_call.1} parent=1 // pred_region
      _
    $region5: #{tpu_custom_call.1} parent=1 // pred_fallthru
      _
    // Predicated region
    $region6: #{tpu_custom_call.1} parent=1 // pred_check
      _
    $region7: #{tpu_custom_call.1} parent=1 // pred_check_branch
      %24 = sbr.rel (0) target = $region9
    $region8: #{tpu_custom_call.1} parent=1 // pred_region
      _
    $region9: #{tpu_custom_call.1} parent=1 // pred_fallthru
      _
    // Predicated region
    $region10: #{tpu_custom_call.1} parent=1 // pred_check
      _
    $region11: #{tpu_custom_call.1} parent=1 // pred_check_branch
      %26 = sbr.rel (0) target = $region13
    $region12: #{tpu_custom_call.1} parent=1 // pred_region
      _
    $region13: #{tpu_custom_call.1} parent=1 // pred_fallthru
      _
    // Predicated region
    $region14: #{tpu_custom_call.1} parent=1 // pred_check
      _
    $region15: #{tpu_custom_call.1} parent=1 // pred_check_branch
      %28 = sbr.rel (0) target = $region17
    $region16: #{tpu_custom_call.1} parent=1 // pred_region
      _
    $region17: #{tpu_custom_call.1} parent=1 // pred_fallthru
      _
    // Predicated region
    $region18: #{tpu_custom_call.1} parent=1 // pred_check
      _
    $region19: #{tpu_custom_call.1} parent=1 // pred_check_branch
      %30 = sbr.rel (0) target = $region21
    $region20: #{tpu_custom_call.1} parent=1 // pred_region
      %32 = vsyncadd [#allocation3], 0
      %s33 = sshll.u32 %s4, 4
      %s34 = int_to_ptr.hbm [resolvable:$true] %s33
      %s35 = sshll.u32 [#allocation2], 4
      %s36 = int_to_ptr.vmem [resolvable:$true] %s35
      %41 = dma.hbm_to_vmem [thread:$0]  %s34, 3072, %s36, [#allocation3], 192, 192, 12
    $region21: #{tpu_custom_call.1} parent=1 // pred_fallthru
      _
    // Predicated region
    $region22: #{tpu_custom_call.1} parent=1 // pred_check
      _
    $region23: #{tpu_custom_call.1} parent=1 // pred_check_branch
      %43 = sbr.rel (0) target = $region25
    $region24: #{tpu_custom_call.1} parent=1 // pred_region
      _
    $region25: #{tpu_custom_call.1} parent=1 // pred_fallthru
      _
    // Predicated region
    $region26: #{tpu_custom_call.1} parent=1 // pred_check
      _
    $region27: #{tpu_custom_call.1} parent=1 // pred_check_branch
      %45 = sbr.rel (0) target = $region29
    $region28: #{tpu_custom_call.1} parent=1 // pred_region
      _
    $region29: #{tpu_custom_call.1} parent=1 // pred_fallthru
      _
    // Predicated region
    $region30: #{tpu_custom_call.1} parent=1 // pred_check
      _
    $region31: #{tpu_custom_call.1} parent=1 // pred_check_branch
      %47 = sbr.rel (0) target = $region33
    $region32: #{tpu_custom_call.1} parent=1 // pred_region
      %49 = vsyncadd [#allocation6], 0
      %s50 = sshll.u32 %s7, 4
      %s51 = int_to_ptr.hbm [resolvable:$true] %s50
      %s52 = sshll.u32 [#allocation5], 4
      %s53 = int_to_ptr.vmem [resolvable:$true] %s52
      %58 = dma.hbm_to_vmem [thread:$0]  %s51, 768, %s53, [#allocation6], 192, 192, 12
    $region33: #{tpu_custom_call.1} parent=1 // pred_fallthru
      _
    // Predicated region
    $region34: #{tpu_custom_call.1} parent=1 // pred_check
      _
    $region35: #{tpu_custom_call.1} parent=1 // pred_check_branch
      %60 = sbr.rel (0) target = $region37
    $region36: #{tpu_custom_call.1} parent=1 // pred_region
      %62 = vsyncadd [#allocation6], 0
      %s63 = sshll.u32 %s8, 4
      %s64 = int_to_ptr.hbm [resolvable:$true] %s63
      %s65 = sshll.u32 [#allocation7], 4
      %s66 = int_to_ptr.vmem [resolvable:$true] %s65
      %71 = dma.hbm_to_vmem [thread:$0]  %s64, 3072, %s66, [#allocation6], 192, 192, 12
    $region37: #{tpu_custom_call.1} parent=1 // pred_fallthru
      _
    // Predicated region
    $region38: #{tpu_custom_call.1} parent=1 // pred_check
      _
    $region39: #{tpu_custom_call.1} parent=1 // pred_check_branch
      %73 = sbr.rel (0) target = $region41
    $region40: #{tpu_custom_call.1} parent=1 // pred_region
      _
    $region41: #{tpu_custom_call.1} parent=1 // pred_fallthru
      _
    // Predicated region
    $region42: #{tpu_custom_call.1} parent=1 // pred_check
      _
    $region43: #{tpu_custom_call.1} parent=1 // pred_check_branch
      %75 = sbr.rel (0) target = $region45
    $region44: #{tpu_custom_call.1} parent=1 // pred_region
      _
    $region45: #{tpu_custom_call.1} parent=1 // pred_fallthru
      _
    // Predicated region
    $region46: #{tpu_custom_call.1} parent=1 // pred_check
      _
    $region47: #{tpu_custom_call.1} parent=1 // pred_check_branch
      %77 = sbr.rel (0) target = $region49
    $region48: #{tpu_custom_call.1} parent=1 // pred_region
      _
    $region49: #{tpu_custom_call.1} parent=1 // pred_fallthru
      _
    // Predicated region
    $region50: #{tpu_custom_call.1} parent=1 // pred_check
      _
    $region51: #{tpu_custom_call.1} parent=1 // pred_check_branch
      %79 = sbr.rel (0) target = $region53
    $region52: #{tpu_custom_call.1} parent=1 // pred_region
      _
    $region53: #{tpu_custom_call.1} parent=1 // pred_fallthru
      _
    // Predicated region
    $region54: #{tpu_custom_call.1} parent=1 // pred_check
      _
    $region55: #{tpu_custom_call.1} parent=1 // pred_check_branch
      %81 = sbr.rel (0) target = $region57
    $region56: #{tpu_custom_call.1} parent=1 // pred_region
      %83 = dma.done [#allocation3], 3072
    $region57: #{tpu_custom_call.1} parent=1 // pred_fallthru
      _
    // Predicated region
    $region58: #{tpu_custom_call.1} parent=1 // pred_check
      _
    $region59: #{tpu_custom_call.1} parent=1 // pred_check_branch
      %85 = sbr.rel (0) target = $region61
    $region60: #{tpu_custom_call.1} parent=1 // pred_region
      %87 = dma.done [#allocation6], 768
    $region61: #{tpu_custom_call.1} parent=1 // pred_fallthru
      _
    // Predicated region
    $region62: #{tpu_custom_call.1} parent=1 // pred_check
      _
    $region63: #{tpu_custom_call.1} parent=1 // pred_check_branch
      %89 = sbr.rel (0) target = $region65
    $region64: #{tpu_custom_call.1} parent=1 // pred_region
      %91 = dma.done [#allocation6], 3072
    $region65: #{tpu_custom_call.1} parent=1 // pred_fallthru
      _
    %v93 = vld [vmem:[#allocation2] sm:$0xff]
    %v94 = vld [vmem:[#allocation2 + $0x8] sm:$0xf]
    %v95 = vld [vmem:[#allocation2 + $0xc] sm:$0xff]
    %v96 = vld [vmem:[#allocation2 + $0x14] sm:$0xf]
    %v97 = vld [vmem:[#allocation2 + $0x18] sm:$0xff]
    %v98 = vld [vmem:[#allocation2 + $0x20] sm:$0xf]
    %v99 = vld [vmem:[#allocation2 + $0x24] sm:$0xff]
    %v100 = vld [vmem:[#allocation2 + $0x2c] sm:$0xf]
    %v101 = vld [vmem:[#allocation2 + $0x30] sm:$0xff]
    %v102 = vld [vmem:[#allocation2 + $0x38] sm:$0xf]
    %v103 = vld [vmem:[#allocation2 + $0x3c] sm:$0xff]
    %v104 = vld [vmem:[#allocation2 + $0x44] sm:$0xf]
    %v105 = vld [vmem:[#allocation2 + $0x48] sm:$0xff]
    %v106 = vld [vmem:[#allocation2 + $0x50] sm:$0xf]
    %v107 = vld [vmem:[#allocation2 + $0x54] sm:$0xff]
    %v108 = vld [vmem:[#allocation2 + $0x5c] sm:$0xf]
    %v109 = vld [vmem:[#allocation2 + $0x60] sm:$0xff]
    %v110 = vld [vmem:[#allocation2 + $0x68] sm:$0xf]
    %v111 = vld [vmem:[#allocation2 + $0x6c] sm:$0xff]
    %v112 = vld [vmem:[#allocation2 + $0x74] sm:$0xf]
    %v113 = vld [vmem:[#allocation2 + $0x78] sm:$0xff]
    %v114 = vld [vmem:[#allocation2 + $0x80] sm:$0xf]
    %v115 = vld [vmem:[#allocation2 + $0x84] sm:$0xff]
    %v116 = vld [vmem:[#allocation2 + $0x8c] sm:$0xf]
    %v117 = vld [vmem:[#allocation2 + $0x90] sm:$0xff]
    %v118 = vld [vmem:[#allocation2 + $0x98] sm:$0xf]
    %v119 = vld [vmem:[#allocation2 + $0x9c] sm:$0xff]
    %v120 = vld [vmem:[#allocation2 + $0xa4] sm:$0xf]
    %v121 = vld [vmem:[#allocation2 + $0xa8] sm:$0xff]
    %v122 = vld [vmem:[#allocation2 + $0xb0] sm:$0xf]
    %v123 = vld [vmem:[#allocation2 + $0xb4] sm:$0xff]
    %v124 = vld [vmem:[#allocation2 + $0xbc] sm:$0xf]
    %v125 = vld [vmem:[#allocation7] sm:$0xff]
    %v126 = vld [vmem:[#allocation7 + $0x8] sm:$0xf]
    %v127 = vld [vmem:[#allocation7 + $0xc] sm:$0xff]
    %v128 = vld [vmem:[#allocation7 + $0x14] sm:$0xf]
    %v129 = vld [vmem:[#allocation7 + $0x18] sm:$0xff]
    %v130 = vld [vmem:[#allocation7 + $0x20] sm:$0xf]
    %v131 = vld [vmem:[#allocation7 + $0x24] sm:$0xff]
    %v132 = vld [vmem:[#allocation7 + $0x2c] sm:$0xf]
    %v133 = vld [vmem:[#allocation7 + $0x30] sm:$0xff]
    %v134 = vld [vmem:[#allocation7 + $0x38] sm:$0xf]
    %v135 = vld [vmem:[#allocation7 + $0x3c] sm:$0xff]
    %v136 = vld [vmem:[#allocation7 + $0x44] sm:$0xf]
    %v137 = vld [vmem:[#allocation7 + $0x48] sm:$0xff]
    %v138 = vld [vmem:[#allocation7 + $0x50] sm:$0xf]
    %v139 = vld [vmem:[#allocation7 + $0x54] sm:$0xff]
    %v140 = vld [vmem:[#allocation7 + $0x5c] sm:$0xf]
    %v141 = vld [vmem:[#allocation7 + $0x60] sm:$0xff]
    %v142 = vld [vmem:[#allocation7 + $0x68] sm:$0xf]
    %v143 = vld [vmem:[#allocation7 + $0x6c] sm:$0xff]
    %v144 = vld [vmem:[#allocation7 + $0x74] sm:$0xf]
    %v145 = vld [vmem:[#allocation7 + $0x78] sm:$0xff]
    %v146 = vld [vmem:[#allocation7 + $0x80] sm:$0xf]
    %v147 = vld [vmem:[#allocation7 + $0x84] sm:$0xff]
    %v148 = vld [vmem:[#allocation7 + $0x8c] sm:$0xf]
    %v149 = vld [vmem:[#allocation7 + $0x90] sm:$0xff]
    %v150 = vld [vmem:[#allocation7 + $0x98] sm:$0xf]
    %v151 = vld [vmem:[#allocation7 + $0x9c] sm:$0xff]
    %v152 = vld [vmem:[#allocation7 + $0xa4] sm:$0xf]
    %v153 = vld [vmem:[#allocation7 + $0xa8] sm:$0xff]
    %v154 = vld [vmem:[#allocation7 + $0xb0] sm:$0xf]
    %v155 = vld [vmem:[#allocation7 + $0xb4] sm:$0xff]
    %v156 = vld [vmem:[#allocation7 + $0xbc] sm:$0xf]
    %v157 = vld [vmem:[#allocation5] sm:$0xff]
    %v158 = vld [vmem:[#allocation5 + $0x8] sm:$0xf]
    %v159 = vld [vmem:[#allocation5 + $0xc] sm:$0xff]
    %v160 = vld [vmem:[#allocation5 + $0x14] sm:$0xf]
    %v161 = vld [vmem:[#allocation5 + $0x18] sm:$0xff]
    %v162 = vld [vmem:[#allocation5 + $0x20] sm:$0xf]
    %v163 = vld [vmem:[#allocation5 + $0x24] sm:$0xff]
    %v164 = vld [vmem:[#allocation5 + $0x2c] sm:$0xf]
    %v165 = vld [vmem:[%s11] sm:$0xf]
    %v166 = vld [vmem:[%s11 + $0x4] sm:$0xf]
    %v167 = vld [vmem:[%s11 + $0x8] sm:$0xf]
    %v168 = vld [vmem:[%s11 + $0xc] sm:$0xf]
    %v169 = vld [vmem:[%s11 + $0x10] sm:$0xf]
    %v170 = vld [vmem:[%s11 + $0x14] sm:$0xf]
    %v171 = vld [vmem:[%s11 + $0x18] sm:$0xf]
    %v172 = vld [vmem:[%s11 + $0x1c] sm:$0xf]
    %v173 = vld [vmem:[%s11 + $0x20] sm:$0xf]
    %v174 = vld [vmem:[%s11 + $0x24] sm:$0xf]
    %v175 = vld [vmem:[%s11 + $0x28] sm:$0xf]
    %v176 = vld [vmem:[%s11 + $0x2c] sm:$0xf]
    %v177 = vld [vmem:[%s11 + $0x30] sm:$0xf]
    %v178 = vld [vmem:[%s11 + $0x34] sm:$0xf]
    %v179 = vld [vmem:[%s11 + $0x38] sm:$0xf]
    %v180 = vld [vmem:[%s11 + $0x3c] sm:$0xf]
    %v181 = vld [vmem:[%s6] sm:$0x7]
    %v183 = vperm.slane %v181, 0
    %v184 = vperm.slane %v181, 1
    %v185 = vperm.slane %v181, 2
    %v189 = vld [vmem:[%s10] sm:$0x7]
    %v191 = vperm.slane %v189, 0
    %v192 = vperm.slane %v189, 1
    %v193 = vperm.slane %v189, 2
    %v197 = vld [vmem:[%s9] sm:$0x7]
    %v199 = vperm.slane %v197, 0
    %v200 = vperm.slane %v197, 1
    %v201 = vperm.slane %v197, 2
    %v205 = vld [vmem:[%s12] sm:$0x1]
    %v207 = vperm.slane %v205, 0
    %v209 = vld [vmem:[%s0] sm:$0xf]
    %v210 = vld [vmem:[%s0 + $0x4] sm:$0xf]
    %v211 = vld [vmem:[%s0 + $0x8] sm:$0xf]
    %v212 = vld [vmem:[%s0 + $0xc] sm:$0xf]
    %v213 = vld [vmem:[%s0 + $0x10] sm:$0xf]
    %v214 = vld [vmem:[%s0 + $0x14] sm:$0xf]
    %v215 = vld [vmem:[%s0 + $0x18] sm:$0xf]
    %v216 = vld [vmem:[%s0 + $0x1c] sm:$0xf]
    %v217 = vld [vmem:[%s3] sm:$0xff]
    %v218 = vld [vmem:[%s3 + $0x8] sm:$0xf]
    %v219 = vld [vmem:[%s3 + $0xc] sm:$0xff]
    %v220 = vld [vmem:[%s3 + $0x14] sm:$0xf]
    %v221 = vld [vmem:[%s3 + $0x18] sm:$0xff]
    %v222 = vld [vmem:[%s3 + $0x20] sm:$0xf]
    %v223 = vld [vmem:[%s3 + $0x24] sm:$0xff]
    %v224 = vld [vmem:[%s3 + $0x2c] sm:$0xf]
    %v225 = vld [vmem:[%s5] sm:$0x7]
    %v227 = vperm.slane %v225, 0
    %v228 = vperm.slane %v225, 1
    %v229 = vperm.slane %v225, 2
    %v241 = vunpack.c.l.b16 %v209
    %v242 = vunpack.c.l.b16 %v210
    %v243 = vunpack.c.l.b16 %v211
    %v244 = vunpack.c.l.b16 %v212
    %v245 = vunpack.c.l.b16 %v213
    %v246 = vunpack.c.l.b16 %v214
    %v247 = vunpack.c.l.b16 %v215
    %v248 = vunpack.c.l.b16 %v216
    %v249 = vpack.c.b16 %v242, %v241
    %v250 = vpack.c.b16 %v244, %v243
    %v251 = vpack.c.b16 %v246, %v245
    %v252 = vpack.c.b16 %v248, %v247
    %v261 = vunpack.c.l.b16 %v217
    %v262 = vunpack.c.h.b16 %v217
    %v263 = vunpack.c.l.b16 %v218
    %v264 = vunpack.c.l.b16 %v219
    %v265 = vunpack.c.h.b16 %v219
    %v266 = vunpack.c.l.b16 %v220
    %v267 = vunpack.c.l.b16 %v221
    %v268 = vunpack.c.h.b16 %v221
    %v269 = vunpack.c.l.b16 %v222
    %v270 = vunpack.c.l.b16 %v223
    %v271 = vunpack.c.h.b16 %v223
    %v272 = vunpack.c.l.b16 %v224
    %v273 = vpack.c.b16 %v264, %v261
    %v274 = vpack.c.b16 %v265, %v262
    %v275 = vpack.c.b16 %v266, %v263
    %v276 = vpack.c.b16 %v270, %v267
    %v277 = vpack.c.b16 %v271, %v268
    %v278 = vpack.c.b16 %v272, %v269
    %vm285 = vcmask 261120
    %v287 = vsel %vm285, %v249, 0
    %v290 = vsel %vm285, %v250, 0
    %v293 = vsel %vm285, %v251, 0
    %v296 = vsel %vm285, %v252, 0
    %298 = vmatpush.bf16.msra.mxu0 0
    %299 = vmatpush.bf16.msra.mxu0 0
    %300 = vmatpush.bf16.msra.mxu0 0
    %301 = vmatpush.bf16.msra.mxu0 0
    %302 = vmatpush.bf16.msra.mxu0 0
    %303 = vmatpush.bf16.msra.mxu0 0
    %304 = vmatpush.bf16.msra.mxu0 %v276
    %305 = vmatpush.bf16.msra.mxu0 %v273
    %306 = vmatmul.bf16.gmra.mxu0 %v287
    %v307 = vpop.f32.mrf.mxu0
    %v308 = vadd.f32 %v227, %v307
    %v309 = vpop.f32.mrf.mxu0
    %v310 = vadd.f32 %v227, %v309
    %311 = vmatmul.bf16.gmra.mxu0 %v290
    %v312 = vpop.f32.mrf.mxu0
    %v313 = vadd.f32 %v227, %v312
    %v314 = vpop.f32.mrf.mxu0
    %v315 = vadd.f32 %v227, %v314
    %316 = vmatmul.bf16.gmra.mxu0 %v293
    %v317 = vpop.f32.mrf.mxu0
    %v318 = vadd.f32 %v227, %v317
    %v319 = vpop.f32.mrf.mxu0
    %v320 = vadd.f32 %v227, %v319
    %321 = vmatmul.bf16.gmra.mxu0 %v296
    %v322 = vpop.f32.mrf.mxu0
    %v323 = vadd.f32 %v227, %v322
    %v324 = vpop.f32.mrf.mxu0
    %v325 = vadd.f32 %v227, %v324
    %326 = vdwg.mxu0
    %327 = vmatpush.bf16.msra.mxu0 0
    %328 = vmatpush.bf16.msra.mxu0 0
    %329 = vmatpush.bf16.msra.mxu0 0
    %330 = vmatpush.bf16.msra.mxu0 0
    %331 = vmatpush.bf16.msra.mxu0 0
    %332 = vmatpush.bf16.msra.mxu0 0
    %333 = vmatpush.bf16.msra.mxu0 %v277
    %334 = vmatpush.bf16.msra.mxu0 %v274
    %335 = vmatmul.bf16.gmra.mxu0 %v287
    %v336 = vpop.f32.mrf.mxu0
    %v337 = vadd.f32 %v228, %v336
    %v338 = vpop.f32.mrf.mxu0
    %v339 = vadd.f32 %v228, %v338
    %340 = vmatmul.bf16.gmra.mxu0 %v290
    %v341 = vpop.f32.mrf.mxu0
    %v342 = vadd.f32 %v228, %v341
    %v343 = vpop.f32.mrf.mxu0
    %v344 = vadd.f32 %v228, %v343
    %345 = vmatmul.bf16.gmra.mxu0 %v293
    %v346 = vpop.f32.mrf.mxu0
    %v347 = vadd.f32 %v228, %v346
    %v348 = vpop.f32.mrf.mxu0
    %v349 = vadd.f32 %v228, %v348
    %350 = vmatmul.bf16.gmra.mxu0 %v296
    %v351 = vpop.f32.mrf.mxu0
    %v352 = vadd.f32 %v228, %v351
    %v353 = vpop.f32.mrf.mxu0
    %v354 = vadd.f32 %v228, %v353
    %355 = vdwg.mxu0
    %356 = vmatpush.bf16.msra.mxu0 0
    %357 = vmatpush.bf16.msra.mxu0 0
    %358 = vmatpush.bf16.msra.mxu0 0
    %359 = vmatpush.bf16.msra.mxu0 0
    %360 = vmatpush.bf16.msra.mxu0 0
    %361 = vmatpush.bf16.msra.mxu0 0
    %362 = vmatpush.bf16.msra.mxu0 %v278
    %363 = vmatpush.bf16.msra.mxu0 %v275
    %364 = vmatmul.bf16.gmra.mxu0 %v287
    %v365 = vpop.f32.mrf.mxu0
    %v366 = vadd.f32 %v229, %v365
    %v367 = vpop.f32.mrf.mxu0
    %v368 = vadd.f32 %v229, %v367
    %369 = vmatmul.bf16.gmra.mxu0 %v290
    %v370 = vpop.f32.mrf.mxu0
    %v371 = vadd.f32 %v229, %v370
    %v372 = vpop.f32.mrf.mxu0
    %v373 = vadd.f32 %v229, %v372
    %374 = vmatmul.bf16.gmra.mxu0 %v293
    %v375 = vpop.f32.mrf.mxu0
    %v376 = vadd.f32 %v229, %v375
    %v377 = vpop.f32.mrf.mxu0
    %v378 = vadd.f32 %v229, %v377
    %379 = vmatmul.bf16.gmra.mxu0 %v296
    %v380 = vpop.f32.mrf.mxu0
    %v381 = vadd.f32 %v229, %v380
    %v382 = vpop.f32.mrf.mxu0
    %v383 = vadd.f32 %v229, %v382
    %384 = vdwg.mxu0
    %v385 = vld [vmem:[%s1] sm:$0xf]
    %v386 = vld [vmem:[%s1 + $0x4] sm:$0xf]
    %v387 = vld [vmem:[%s1 + $0x8] sm:$0xf]
    %v388 = vld [vmem:[%s1 + $0xc] sm:$0xf]
    %v389 = vld [vmem:[%s1 + $0x10] sm:$0xf]
    %v390 = vld [vmem:[%s1 + $0x14] sm:$0xf]
    %v391 = vld [vmem:[%s1 + $0x18] sm:$0xf]
    %v392 = vld [vmem:[%s1 + $0x1c] sm:$0xf]
    %v401 = vunpack.c.l.b16 %v385
    %v402 = vunpack.c.l.b16 %v386
    %v403 = vunpack.c.l.b16 %v387
    %v404 = vunpack.c.l.b16 %v388
    %v405 = vunpack.c.l.b16 %v389
    %v406 = vunpack.c.l.b16 %v390
    %v407 = vunpack.c.l.b16 %v391
    %v408 = vunpack.c.l.b16 %v392
    %v409 = vpack.c.b16 %v402, %v401
    %v410 = vpack.c.b16 %v404, %v403
    %v411 = vpack.c.b16 %v406, %v405
    %v412 = vpack.c.b16 %v408, %v407
    %v421 = vunpack.c.l.b16 %v157
    %v422 = vunpack.c.h.b16 %v157
    %v423 = vunpack.c.l.b16 %v158
    %v424 = vunpack.c.l.b16 %v159
    %v425 = vunpack.c.h.b16 %v159
    %v426 = vunpack.c.l.b16 %v160
    %v427 = vunpack.c.l.b16 %v161
    %v428 = vunpack.c.h.b16 %v161
    %v429 = vunpack.c.l.b16 %v162
    %v430 = vunpack.c.l.b16 %v163
    %v431 = vunpack.c.h.b16 %v163
    %v432 = vunpack.c.l.b16 %v164
    %v433 = vpack.c.b16 %v424, %v421
    %v434 = vpack.c.b16 %v425, %v422
    %v435 = vpack.c.b16 %v426, %v423
    %v436 = vpack.c.b16 %v430, %v427
    %v437 = vpack.c.b16 %v431, %v428
    %v438 = vpack.c.b16 %v432, %v429
    %v446 = vsel %vm285, %v409, 0
    %v449 = vsel %vm285, %v410, 0
    %v452 = vsel %vm285, %v411, 0
    %v455 = vsel %vm285, %v412, 0
    %457 = vmatpush.bf16.msra.mxu0 0
    %458 = vmatpush.bf16.msra.mxu0 0
    %459 = vmatpush.bf16.msra.mxu0 0
    %460 = vmatpush.bf16.msra.mxu0 0
    %461 = vmatpush.bf16.msra.mxu0 0
    %462 = vmatpush.bf16.msra.mxu0 0
    %463 = vmatpush.bf16.msra.mxu0 %v436
    %464 = vmatpush.bf16.msra.mxu0 %v433
    %465 = vmatmul.bf16.gmra.mxu0 %v446
    %v466 = vpop.f32.mrf.mxu0
    %v467 = vadd.f32 %v199, %v466
    %v468 = vpop.f32.mrf.mxu0
    %469 = vmatmul.bf16.gmra.mxu0 %v449
    %v470 = vpop.f32.mrf.mxu0
    %v471 = vpop.f32.mrf.mxu0
    %v472 = vadd.f32 %v199, %v471
    %473 = vmatmul.bf16.gmra.mxu0 %v452
    %v474 = vpop.f32.mrf.mxu0
    %v475 = vadd.f32 %v199, %v474
    %v476 = vpop.f32.mrf.mxu0
    %477 = vmatmul.bf16.gmra.mxu0 %v455
    %v478 = vpop.f32.mrf.mxu0
    %v479 = vadd.f32 %v199, %v478
    %v480 = vpop.f32.mrf.mxu0
    %481 = vdwg.mxu0
    %482 = vmatpush.bf16.msra.mxu0 0
    %483 = vmatpush.bf16.msra.mxu0 0
    %484 = vmatpush.bf16.msra.mxu0 0
    %485 = vmatpush.bf16.msra.mxu0 0
    %486 = vmatpush.bf16.msra.mxu0 0
    %487 = vmatpush.bf16.msra.mxu0 0
    %488 = vmatpush.bf16.msra.mxu0 %v437
    %489 = vmatpush.bf16.msra.mxu0 %v434
    %490 = vmatmul.bf16.gmra.mxu0 %v446
    %v491 = vpop.f32.mrf.mxu0
    %v492 = vadd.f32 %v200, %v491
    %v493 = vpop.f32.mrf.mxu0
    %494 = vmatmul.bf16.gmra.mxu0 %v449
    %v495 = vpop.f32.mrf.mxu0
    %v496 = vpop.f32.mrf.mxu0
    %v497 = vadd.f32 %v200, %v496
    %498 = vmatmul.bf16.gmra.mxu0 %v452
    %v499 = vpop.f32.mrf.mxu0
    %v500 = vadd.f32 %v200, %v499
    %v501 = vpop.f32.mrf.mxu0
    %502 = vmatmul.bf16.gmra.mxu0 %v455
    %v503 = vpop.f32.mrf.mxu0
    %v504 = vadd.f32 %v200, %v503
    %v505 = vpop.f32.mrf.mxu0
    %506 = vdwg.mxu0
    %507 = vmatpush.bf16.msra.mxu0 0
    %508 = vmatpush.bf16.msra.mxu0 0
    %509 = vmatpush.bf16.msra.mxu0 0
    %510 = vmatpush.bf16.msra.mxu0 0
    %511 = vmatpush.bf16.msra.mxu0 0
    %512 = vmatpush.bf16.msra.mxu0 0
    %513 = vmatpush.bf16.msra.mxu0 %v438
    %514 = vmatpush.bf16.msra.mxu0 %v435
    %515 = vmatmul.bf16.gmra.mxu0 %v446
    %v516 = vpop.f32.mrf.mxu0
    %v517 = vadd.f32 %v201, %v516
    %v518 = vpop.f32.mrf.mxu0
    %519 = vmatmul.bf16.gmra.mxu0 %v449
    %v520 = vpop.f32.mrf.mxu0
    %v521 = vpop.f32.mrf.mxu0
    %v522 = vadd.f32 %v201, %v521
    %523 = vmatmul.bf16.gmra.mxu0 %v452
    %v524 = vpop.f32.mrf.mxu0
    %v525 = vadd.f32 %v201, %v524
    %v526 = vpop.f32.mrf.mxu0
    %527 = vmatmul.bf16.gmra.mxu0 %v455
    %v528 = vpop.f32.mrf.mxu0
    %v529 = vadd.f32 %v201, %v528
    %v530 = vpop.f32.mrf.mxu0
    %531 = vdwg.mxu0
    %v532 = vld [vmem:[%s2] sm:$0xf]
    %v533 = vld [vmem:[%s2 + $0x4] sm:$0xf]
    %v534 = vld [vmem:[%s2 + $0x8] sm:$0xf]
    %v535 = vld [vmem:[%s2 + $0xc] sm:$0xf]
    %v536 = vld [vmem:[%s2 + $0x10] sm:$0xf]
    %v537 = vld [vmem:[%s2 + $0x14] sm:$0xf]
    %v538 = vld [vmem:[%s2 + $0x18] sm:$0xf]
    %v539 = vld [vmem:[%s2 + $0x1c] sm:$0xf]
    %v540 = vld [vmem:[%s2 + $0x20] sm:$0xf]
    %v541 = vld [vmem:[%s2 + $0x24] sm:$0xf]
    %v542 = vld [vmem:[%s2 + $0x28] sm:$0xf]
    %v543 = vld [vmem:[%s2 + $0x2c] sm:$0xf]
    %v544 = vld [vmem:[%s2 + $0x30] sm:$0xf]
    %v545 = vld [vmem:[%s2 + $0x34] sm:$0xf]
    %v546 = vld [vmem:[%s2 + $0x38] sm:$0xf]
    %v547 = vld [vmem:[%s2 + $0x3c] sm:$0xf]
    %v564 = vunpack.c.l.b16 %v532
    %v565 = vunpack.c.l.b16 %v533
    %v566 = vunpack.c.l.b16 %v534
    %v567 = vunpack.c.l.b16 %v535
    %v568 = vunpack.c.l.b16 %v536
    %v569 = vunpack.c.l.b16 %v537
    %v570 = vunpack.c.l.b16 %v538
    %v571 = vunpack.c.l.b16 %v539
    %v572 = vunpack.c.l.b16 %v540
    %v573 = vunpack.c.l.b16 %v541
    %v574 = vunpack.c.l.b16 %v542
    %v575 = vunpack.c.l.b16 %v543
    %v576 = vunpack.c.l.b16 %v544
    %v577 = vunpack.c.l.b16 %v545
    %v578 = vunpack.c.l.b16 %v546
    %v579 = vunpack.c.l.b16 %v547
    %v580 = vpack.c.b16 %v565, %v564
    %v581 = vpack.c.b16 %v567, %v566
    %v582 = vpack.c.b16 %v569, %v568
    %v583 = vpack.c.b16 %v571, %v570
    %v584 = vpack.c.b16 %v573, %v572
    %v585 = vpack.c.b16 %v575, %v574
    %v586 = vpack.c.b16 %v577, %v576
    %v587 = vpack.c.b16 %v579, %v578
    %v589 = vsel %vm285, %v580, 0
    %v592 = vsel %vm285, %v581, 0
    %v595 = vsel %vm285, %v582, 0
    %v598 = vsel %vm285, %v583, 0
    %v601 = vsel %vm285, %v584, 0
    %v604 = vsel %vm285, %v585, 0
    %v607 = vsel %vm285, %v586, 0
    %v610 = vsel %vm285, %v587, 0
    %612 = vmatpush.bf16.msra.mxu0 0
    %613 = vmatpush.bf16.msra.mxu0 0
    %614 = vmatpush.bf16.msra.mxu0 0
    %615 = vmatpush.bf16.msra.mxu0 0
    %616 = vmatpush.bf16.msra.mxu0 0
    %617 = vmatpush.bf16.msra.mxu0 0
    %618 = vmatpush.bf16.msra.mxu0 %v436
    %619 = vmatpush.bf16.msra.mxu0 %v433
    %620 = vmatmul.bf16.gmra.mxu0 %v589
    %v621 = vpop.f32.mrf.mxu0
    %v622 = vadd.f32 0.0, %v621
    %v623 = vpop.f32.mrf.mxu0
    %v624 = vadd.f32 0.0, %v623
    %625 = vmatmul.bf16.gmra.mxu0 %v592
    %v626 = vpop.f32.mrf.mxu0
    %v627 = vadd.f32 0.0, %v626
    %v628 = vpop.f32.mrf.mxu0
    %v629 = vadd.f32 0.0, %v628
    %630 = vmatmul.bf16.gmra.mxu0 %v595
    %v631 = vpop.f32.mrf.mxu0
    %v632 = vadd.f32 0.0, %v631
    %v633 = vpop.f32.mrf.mxu0
    %v634 = vadd.f32 0.0, %v633
    %635 = vmatmul.bf16.gmra.mxu0 %v598
    %v636 = vpop.f32.mrf.mxu0
    %v637 = vadd.f32 0.0, %v636
    %v638 = vpop.f32.mrf.mxu0
    %v639 = vadd.f32 0.0, %v638
    %640 = vmatmul.bf16.gmra.mxu0 %v601
    %v641 = vpop.f32.mrf.mxu0
    %v642 = vadd.f32 0.0, %v641
    %v643 = vpop.f32.mrf.mxu0
    %v644 = vadd.f32 0.0, %v643
    %645 = vmatmul.bf16.gmra.mxu0 %v604
    %v646 = vpop.f32.mrf.mxu0
    %v647 = vadd.f32 0.0, %v646
    %v648 = vpop.f32.mrf.mxu0
    %v649 = vadd.f32 0.0, %v648
    %650 = vmatmul.bf16.gmra.mxu0 %v607
    %v651 = vpop.f32.mrf.mxu0
    %v652 = vadd.f32 0.0, %v651
    %v653 = vpop.f32.mrf.mxu0
    %v654 = vadd.f32 0.0, %v653
    %655 = vmatmul.bf16.gmra.mxu0 %v610
    %v656 = vpop.f32.mrf.mxu0
    %v657 = vadd.f32 0.0, %v656
    %v658 = vpop.f32.mrf.mxu0
    %v659 = vadd.f32 0.0, %v658
    %660 = vdwg.mxu0
    %661 = vmatpush.bf16.msra.mxu0 0
    %662 = vmatpush.bf16.msra.mxu0 0
    %663 = vmatpush.bf16.msra.mxu0 0
    %664 = vmatpush.bf16.msra.mxu0 0
    %665 = vmatpush.bf16.msra.mxu0 0
    %666 = vmatpush.bf16.msra.mxu0 0
    %667 = vmatpush.bf16.msra.mxu0 %v437
    %668 = vmatpush.bf16.msra.mxu0 %v434
    %669 = vmatmul.bf16.gmra.mxu0 %v589
    %v670 = vpop.f32.mrf.mxu0
    %v671 = vadd.f32 0.0, %v670
    %v672 = vpop.f32.mrf.mxu0
    %v673 = vadd.f32 0.0, %v672
    %674 = vmatmul.bf16.gmra.mxu0 %v592
    %v675 = vpop.f32.mrf.mxu0
    %v676 = vadd.f32 0.0, %v675
    %v677 = vpop.f32.mrf.mxu0
    %v678 = vadd.f32 0.0, %v677
    %679 = vmatmul.bf16.gmra.mxu0 %v595
    %v680 = vpop.f32.mrf.mxu0
    %v681 = vadd.f32 0.0, %v680
    %v682 = vpop.f32.mrf.mxu0
    %v683 = vadd.f32 0.0, %v682
    %684 = vmatmul.bf16.gmra.mxu0 %v598
    %v685 = vpop.f32.mrf.mxu0
    %v686 = vadd.f32 0.0, %v685
    %v687 = vpop.f32.mrf.mxu0
    %v688 = vadd.f32 0.0, %v687
    %689 = vmatmul.bf16.gmra.mxu0 %v601
    %v690 = vpop.f32.mrf.mxu0
    %v691 = vadd.f32 0.0, %v690
    %v692 = vpop.f32.mrf.mxu0
    %v693 = vadd.f32 0.0, %v692
    %694 = vmatmul.bf16.gmra.mxu0 %v604
    %v695 = vpop.f32.mrf.mxu0
    %v696 = vadd.f32 0.0, %v695
    %v697 = vpop.f32.mrf.mxu0
    %v698 = vadd.f32 0.0, %v697
    %699 = vmatmul.bf16.gmra.mxu0 %v607
    %v700 = vpop.f32.mrf.mxu0
    %v701 = vadd.f32 0.0, %v700
    %v702 = vpop.f32.mrf.mxu0
    %v703 = vadd.f32 0.0, %v702
    %704 = vmatmul.bf16.gmra.mxu0 %v610
    %v705 = vpop.f32.mrf.mxu0
    %v706 = vadd.f32 0.0, %v705
    %v707 = vpop.f32.mrf.mxu0
    %v708 = vadd.f32 0.0, %v707
    %709 = vdwg.mxu0
    %710 = vmatpush.bf16.msra.mxu0 0
    %711 = vmatpush.bf16.msra.mxu0 0
    %712 = vmatpush.bf16.msra.mxu0 0
    %713 = vmatpush.bf16.msra.mxu0 0
    %714 = vmatpush.bf16.msra.mxu0 0
    %715 = vmatpush.bf16.msra.mxu0 0
    %716 = vmatpush.bf16.msra.mxu0 %v438
    %717 = vmatpush.bf16.msra.mxu0 %v435
    %718 = vmatmul.bf16.gmra.mxu0 %v589
    %v719 = vpop.f32.mrf.mxu0
    %v720 = vadd.f32 0.0, %v719
    %v721 = vpop.f32.mrf.mxu0
    %v722 = vadd.f32 0.0, %v721
    %723 = vmatmul.bf16.gmra.mxu0 %v592
    %v724 = vpop.f32.mrf.mxu0
    %v725 = vadd.f32 0.0, %v724
    %v726 = vpop.f32.mrf.mxu0
    %v727 = vadd.f32 0.0, %v726
    %728 = vmatmul.bf16.gmra.mxu0 %v595
    %v729 = vpop.f32.mrf.mxu0
    %v730 = vadd.f32 0.0, %v729
    %v731 = vpop.f32.mrf.mxu0
    %v732 = vadd.f32 0.0, %v731
    %733 = vmatmul.bf16.gmra.mxu0 %v598
    %v734 = vpop.f32.mrf.mxu0
    %v735 = vadd.f32 0.0, %v734
    %v736 = vpop.f32.mrf.mxu0
    %v737 = vadd.f32 0.0, %v736
    %738 = vmatmul.bf16.gmra.mxu0 %v601
    %v739 = vpop.f32.mrf.mxu0
    %v740 = vadd.f32 0.0, %v739
    %v741 = vpop.f32.mrf.mxu0
    %v742 = vadd.f32 0.0, %v741
    %743 = vmatmul.bf16.gmra.mxu0 %v604
    %v744 = vpop.f32.mrf.mxu0
    %v745 = vadd.f32 0.0, %v744
    %v746 = vpop.f32.mrf.mxu0
    %v747 = vadd.f32 0.0, %v746
    %748 = vmatmul.bf16.gmra.mxu0 %v607
    %v749 = vpop.f32.mrf.mxu0
    %v750 = vadd.f32 0.0, %v749
    %v751 = vpop.f32.mrf.mxu0
    %v752 = vadd.f32 0.0, %v751
    %753 = vmatmul.bf16.gmra.mxu0 %v610
    %v754 = vpop.f32.mrf.mxu0
    %v755 = vadd.f32 0.0, %v754
    %v756 = vpop.f32.mrf.mxu0
    %v757 = vadd.f32 0.0, %v756
    %758 = vdwg.mxu0
    %v759 = vpack.c.bf16 %v624, %v622
    %v760 = vpack.c.bf16 %v673, %v671
    %v761 = vpack.c.bf16 %v722, %v720
    %v762 = vpack.c.bf16 %v629, %v627
    %v763 = vpack.c.bf16 %v678, %v676
    %v764 = vpack.c.bf16 %v727, %v725
    %v765 = vpack.c.bf16 %v634, %v632
    %v766 = vpack.c.bf16 %v683, %v681
    %v767 = vpack.c.bf16 %v732, %v730
    %v768 = vpack.c.bf16 %v639, %v637
    %v769 = vpack.c.bf16 %v688, %v686
    %v770 = vpack.c.bf16 %v737, %v735
    %v771 = vpack.c.bf16 %v644, %v642
    %v772 = vpack.c.bf16 %v693, %v691
    %v773 = vpack.c.bf16 %v742, %v740
    %v774 = vpack.c.bf16 %v649, %v647
    %v775 = vpack.c.bf16 %v698, %v696
    %v776 = vpack.c.bf16 %v747, %v745
    %v777 = vpack.c.bf16 %v654, %v652
    %v778 = vpack.c.bf16 %v703, %v701
    %v779 = vpack.c.bf16 %v752, %v750
    %v780 = vpack.c.bf16 %v659, %v657
    %v781 = vpack.c.bf16 %v708, %v706
    %v782 = vpack.c.bf16 %v757, %v755
    %v815 = vunpack.c.l.b16 %v93
    %v816 = vunpack.c.h.b16 %v93
    %v817 = vunpack.c.l.b16 %v94
    %v818 = vunpack.c.l.b16 %v95
    %v819 = vunpack.c.h.b16 %v95
    %v820 = vunpack.c.l.b16 %v96
    %v821 = vunpack.c.l.b16 %v97
    %v822 = vunpack.c.h.b16 %v97
    %v823 = vunpack.c.l.b16 %v98
    %v824 = vunpack.c.l.b16 %v99
    %v825 = vunpack.c.h.b16 %v99
    %v826 = vunpack.c.l.b16 %v100
    %v827 = vunpack.c.l.b16 %v101
    %v828 = vunpack.c.h.b16 %v101
    %v829 = vunpack.c.l.b16 %v102
    %v830 = vunpack.c.l.b16 %v103
    %v831 = vunpack.c.h.b16 %v103
    %v832 = vunpack.c.l.b16 %v104
    %v833 = vunpack.c.l.b16 %v105
    %v834 = vunpack.c.h.b16 %v105
    %v835 = vunpack.c.l.b16 %v106
    %v836 = vunpack.c.l.b16 %v107
    %v837 = vunpack.c.h.b16 %v107
    %v838 = vunpack.c.l.b16 %v108
    %v839 = vunpack.c.l.b16 %v109
    %v840 = vunpack.c.h.b16 %v109
    %v841 = vunpack.c.l.b16 %v110
    %v842 = vunpack.c.l.b16 %v111
    %v843 = vunpack.c.h.b16 %v111
    %v844 = vunpack.c.l.b16 %v112
    %v845 = vunpack.c.l.b16 %v113
    %v846 = vunpack.c.h.b16 %v113
    %v847 = vunpack.c.l.b16 %v114
    %v848 = vunpack.c.l.b16 %v115
    %v849 = vunpack.c.h.b16 %v115
    %v850 = vunpack.c.l.b16 %v116
    %v851 = vunpack.c.l.b16 %v117
    %v852 = vunpack.c.h.b16 %v117
    %v853 = vunpack.c.l.b16 %v118
    %v854 = vunpack.c.l.b16 %v119
    %v855 = vunpack.c.h.b16 %v119
    %v856 = vunpack.c.l.b16 %v120
    %v857 = vunpack.c.l.b16 %v121
    %v858 = vunpack.c.h.b16 %v121
    %v859 = vunpack.c.l.b16 %v122
    %v860 = vunpack.c.l.b16 %v123
    %v861 = vunpack.c.h.b16 %v123
    %v862 = vunpack.c.l.b16 %v124
    %v863 = vpack.c.b16 %v818, %v815
    %v864 = vpack.c.b16 %v819, %v816
    %v865 = vpack.c.b16 %v820, %v817
    %v866 = vpack.c.b16 %v824, %v821
    %v867 = vpack.c.b16 %v825, %v822
    %v868 = vpack.c.b16 %v826, %v823
    %v869 = vpack.c.b16 %v830, %v827
    %v870 = vpack.c.b16 %v831, %v828
    %v871 = vpack.c.b16 %v832, %v829
    %v872 = vpack.c.b16 %v836, %v833
    %v873 = vpack.c.b16 %v837, %v834
    %v874 = vpack.c.b16 %v838, %v835
    %v875 = vpack.c.b16 %v842, %v839
    %v876 = vpack.c.b16 %v843, %v840
    %v877 = vpack.c.b16 %v844, %v841
    %v878 = vpack.c.b16 %v848, %v845
    %v879 = vpack.c.b16 %v849, %v846
    %v880 = vpack.c.b16 %v850, %v847
    %v881 = vpack.c.b16 %v854, %v851
    %v882 = vpack.c.b16 %v855, %v852
    %v883 = vpack.c.b16 %v856, %v853
    %v884 = vpack.c.b16 %v860, %v857
    %v885 = vpack.c.b16 %v861, %v858
    %v886 = vpack.c.b16 %v862, %v859
    %911 = vmatpush.bf16.msra.mxu0 %v884
    %912 = vmatpush.bf16.msra.mxu0 %v881
    %913 = vmatpush.bf16.msra.mxu0 %v878
    %914 = vmatpush.bf16.msra.mxu0 %v875
    %915 = vmatpush.bf16.msra.mxu0 %v872
    %916 = vmatpush.bf16.msra.mxu0 %v869
    %917 = vmatpush.bf16.msra.mxu0 %v866
    %918 = vmatpush.bf16.msra.mxu0 %v863
    %919 = vmatmul.bf16.gmra.mxu0 0
    %v920 = vpop.f32.mrf.mxu0
    %v921 = vadd.f32 %v183, %v920
    %v922 = vpop.f32.mrf.mxu0
    %923 = vdwg.mxu0
    %924 = vmatpush.bf16.msra.mxu0 %v885
    %925 = vmatpush.bf16.msra.mxu0 %v882
    %926 = vmatpush.bf16.msra.mxu0 %v879
    %927 = vmatpush.bf16.msra.mxu0 %v876
    %928 = vmatpush.bf16.msra.mxu0 %v873
    %929 = vmatpush.bf16.msra.mxu0 %v870
    %930 = vmatpush.bf16.msra.mxu0 %v867
    %931 = vmatpush.bf16.msra.mxu0 %v864
    %932 = vmatmul.bf16.gmra.mxu0 0
    %v933 = vpop.f32.mrf.mxu0
    %v934 = vadd.f32 %v184, %v933
    %v935 = vpop.f32.mrf.mxu0
    %936 = vdwg.mxu0
    %937 = vmatpush.bf16.msra.mxu0 %v886
    %938 = vmatpush.bf16.msra.mxu0 %v883
    %939 = vmatpush.bf16.msra.mxu0 %v880
    %940 = vmatpush.bf16.msra.mxu0 %v877
    %941 = vmatpush.bf16.msra.mxu0 %v874
    %942 = vmatpush.bf16.msra.mxu0 %v871
    %943 = vmatpush.bf16.msra.mxu0 %v868
    %944 = vmatpush.bf16.msra.mxu0 %v865
    %945 = vmatmul.bf16.gmra.mxu0 0
    %v946 = vpop.f32.mrf.mxu0
    %v947 = vadd.f32 %v185, %v946
    %v948 = vpop.f32.mrf.mxu0
    %949 = vdwg.mxu0
    %v950 = vadd.f32 %v308, %v921
    %v951 = vxor.u32 %v950, 2147483648
    %v952 = vmul.f32 %v951, 1.442695
    %v953 = vpow.pop %v952
    %v954 = vadd.f32 %v953, 1.0
    %v955 = vrcp.pop %v954
    %v956 = vmul.f32 %v954, %v955
    %v957 = vsub.f32 1.0, %v956
    %v958 = vmul.f32 %v955, %v957
    %v959 = vadd.f32 %v955, %v958
    %vm960 = vweird.f32 %v954
    %vm961 = vweird.f32 %v955
    %vm962 = vmor %vm960, %vm961
    %v963 = vsel %vm962, %v955, %v959
    %v964 = vand.u32 2147483647, %v954
    %vm965 = vcmp.eq.f32.partialorder %v964, 8.507059e+37
    %v966 = vand.u32 %v954, 2147483648
    %v967 = vor.u32 1.1754944e-38, %v966
    %v968 = vsel %vm965, %v967, %v963
    %v969 = vmul.f32 1.0, %v968
    %v970 = vadd.f32 %v337, %v934
    %v971 = vxor.u32 %v970, 2147483648
    %v972 = vmul.f32 %v971, 1.442695
    %v973 = vpow.pop %v972
    %v974 = vadd.f32 %v973, 1.0
    %v975 = vrcp.pop %v974
    %v976 = vmul.f32 %v974, %v975
    %v977 = vsub.f32 1.0, %v976
    %v978 = vmul.f32 %v975, %v977
    %v979 = vadd.f32 %v975, %v978
    %vm980 = vweird.f32 %v974
    %vm981 = vweird.f32 %v975
    %vm982 = vmor %vm980, %vm981
    %v983 = vsel %vm982, %v975, %v979
    %v984 = vand.u32 2147483647, %v974
    %vm985 = vcmp.eq.f32.partialorder %v984, 8.507059e+37
    %v986 = vand.u32 %v974, 2147483648
    %v987 = vor.u32 1.1754944e-38, %v986
    %v988 = vsel %vm985, %v987, %v983
    %v989 = vmul.f32 1.0, %v988
    %v990 = vmul.f32 %v969, %v947
    %v991 = vadd.f32 %v366, %v990
    %v992 = vtanh.pop %v991
    %v993 = vsub.f32 1.0, %v989
    %v994 = vmul.f32 %v993, %v992
    %v995 = vmul.f32 %v989, 0.0
    %v996 = vadd.f32 %v994, %v995
    %v997 = vpack.c.bf16 %v996, %v996
    %998 = vmatpush.bf16.msra.mxu0 %v884
    %999 = vmatpush.bf16.msra.mxu0 %v881
    %1000 = vmatpush.bf16.msra.mxu0 %v878
    %1001 = vmatpush.bf16.msra.mxu0 %v875
    %1002 = vmatpush.bf16.msra.mxu0 %v872
    %1003 = vmatpush.bf16.msra.mxu0 %v869
    %1004 = vmatpush.bf16.msra.mxu0 %v866
    %1005 = vmatpush.bf16.msra.mxu0 %v863
    %1006 = vmatmul.bf16.gmra.mxu0 %v997
    %v1007 = vpop.f32.mrf.mxu0
    %v1008 = vadd.f32 %v183, %v1007
    %v1009 = vpop.f32.mrf.mxu0
    %1010 = vdwg.mxu0
    %1011 = vmatpush.bf16.msra.mxu0 %v885
    %1012 = vmatpush.bf16.msra.mxu0 %v882
    %1013 = vmatpush.bf16.msra.mxu0 %v879
    %1014 = vmatpush.bf16.msra.mxu0 %v876
    %1015 = vmatpush.bf16.msra.mxu0 %v873
    %1016 = vmatpush.bf16.msra.mxu0 %v870
    %1017 = vmatpush.bf16.msra.mxu0 %v867
    %1018 = vmatpush.bf16.msra.mxu0 %v864
    %1019 = vmatmul.bf16.gmra.mxu0 %v997
    %v1020 = vpop.f32.mrf.mxu0
    %v1021 = vadd.f32 %v184, %v1020
    %v1022 = vpop.f32.mrf.mxu0
    %1023 = vdwg.mxu0
    %1024 = vmatpush.bf16.msra.mxu0 %v886
    %1025 = vmatpush.bf16.msra.mxu0 %v883
    %1026 = vmatpush.bf16.msra.mxu0 %v880
    %1027 = vmatpush.bf16.msra.mxu0 %v877
    %1028 = vmatpush.bf16.msra.mxu0 %v874
    %1029 = vmatpush.bf16.msra.mxu0 %v871
    %1030 = vmatpush.bf16.msra.mxu0 %v868
    %1031 = vmatpush.bf16.msra.mxu0 %v865
    %1032 = vmatmul.bf16.gmra.mxu0 %v997
    %v1033 = vpop.f32.mrf.mxu0
    %v1034 = vadd.f32 %v185, %v1033
    %v1035 = vpop.f32.mrf.mxu0
    %1036 = vdwg.mxu0
    %v1037 = vadd.f32 %v310, %v1008
    %v1038 = vxor.u32 %v1037, 2147483648
    %v1039 = vmul.f32 %v1038, 1.442695
    %v1040 = vpow.pop %v1039
    %v1041 = vadd.f32 %v1040, 1.0
    %v1042 = vrcp.pop %v1041
    %v1043 = vmul.f32 %v1041, %v1042
    %v1044 = vsub.f32 1.0, %v1043
    %v1045 = vmul.f32 %v1042, %v1044
    %v1046 = vadd.f32 %v1042, %v1045
    %vm1047 = vweird.f32 %v1041
    %vm1048 = vweird.f32 %v1042
    %vm1049 = vmor %vm1047, %vm1048
    %v1050 = vsel %vm1049, %v1042, %v1046
    %v1051 = vand.u32 2147483647, %v1041
    %vm1052 = vcmp.eq.f32.partialorder %v1051, 8.507059e+37
    %v1053 = vand.u32 %v1041, 2147483648
    %v1054 = vor.u32 1.1754944e-38, %v1053
    %v1055 = vsel %vm1052, %v1054, %v1050
    %v1056 = vmul.f32 1.0, %v1055
    %v1057 = vadd.f32 %v339, %v1021
    %v1058 = vxor.u32 %v1057, 2147483648
    %v1059 = vmul.f32 %v1058, 1.442695
    %v1060 = vpow.pop %v1059
    %v1061 = vadd.f32 %v1060, 1.0
    %v1062 = vrcp.pop %v1061
    %v1063 = vmul.f32 %v1061, %v1062
    %v1064 = vsub.f32 1.0, %v1063
    %v1065 = vmul.f32 %v1062, %v1064
    %v1066 = vadd.f32 %v1062, %v1065
    %vm1067 = vweird.f32 %v1061
    %vm1068 = vweird.f32 %v1062
    %vm1069 = vmor %vm1067, %vm1068
    %v1070 = vsel %vm1069, %v1062, %v1066
    %v1071 = vand.u32 2147483647, %v1061
    %vm1072 = vcmp.eq.f32.partialorder %v1071, 8.507059e+37
    %v1073 = vand.u32 %v1061, 2147483648
    %v1074 = vor.u32 1.1754944e-38, %v1073
    %v1075 = vsel %vm1072, %v1074, %v1070
    %v1076 = vmul.f32 1.0, %v1075
    %v1077 = vmul.f32 %v1056, %v1034
    %v1078 = vadd.f32 %v368, %v1077
    %v1079 = vtanh.pop %v1078
    %v1080 = vsub.f32 1.0, %v1076
    %v1081 = vmul.f32 %v1080, %v1079
    %v1082 = vmul.f32 %v1076, %v996
    %v1083 = vadd.f32 %v1081, %v1082
    %v1084 = vpack.c.bf16 %v1083, %v1083
    %1085 = vmatpush.bf16.msra.mxu0 %v884
    %1086 = vmatpush.bf16.msra.mxu0 %v881
    %1087 = vmatpush.bf16.msra.mxu0 %v878
    %1088 = vmatpush.bf16.msra.mxu0 %v875
    %1089 = vmatpush.bf16.msra.mxu0 %v872
    %1090 = vmatpush.bf16.msra.mxu0 %v869
    %1091 = vmatpush.bf16.msra.mxu0 %v866
    %1092 = vmatpush.bf16.msra.mxu0 %v863
    %1093 = vmatmul.bf16.gmra.mxu0 %v1084
    %v1094 = vpop.f32.mrf.mxu0
    %v1095 = vadd.f32 %v183, %v1094
    %v1096 = vpop.f32.mrf.mxu0
    %1097 = vdwg.mxu0
    %1098 = vmatpush.bf16.msra.mxu0 %v885
    %1099 = vmatpush.bf16.msra.mxu0 %v882
    %1100 = vmatpush.bf16.msra.mxu0 %v879
    %1101 = vmatpush.bf16.msra.mxu0 %v876
    %1102 = vmatpush.bf16.msra.mxu0 %v873
    %1103 = vmatpush.bf16.msra.mxu0 %v870
    %1104 = vmatpush.bf16.msra.mxu0 %v867
    %1105 = vmatpush.bf16.msra.mxu0 %v864
    %1106 = vmatmul.bf16.gmra.mxu0 %v1084
    %v1107 = vpop.f32.mrf.mxu0
    %v1108 = vadd.f32 %v184, %v1107
    %v1109 = vpop.f32.mrf.mxu0
    %1110 = vdwg.mxu0
    %1111 = vmatpush.bf16.msra.mxu0 %v886
    %1112 = vmatpush.bf16.msra.mxu0 %v883
    %1113 = vmatpush.bf16.msra.mxu0 %v880
    %1114 = vmatpush.bf16.msra.mxu0 %v877
    %1115 = vmatpush.bf16.msra.mxu0 %v874
    %1116 = vmatpush.bf16.msra.mxu0 %v871
    %1117 = vmatpush.bf16.msra.mxu0 %v868
    %1118 = vmatpush.bf16.msra.mxu0 %v865
    %1119 = vmatmul.bf16.gmra.mxu0 %v1084
    %v1120 = vpop.f32.mrf.mxu0
    %v1121 = vadd.f32 %v185, %v1120
    %v1122 = vpop.f32.mrf.mxu0
    %1123 = vdwg.mxu0
    %v1124 = vadd.f32 %v313, %v1095
    %v1125 = vxor.u32 %v1124, 2147483648
    %v1126 = vmul.f32 %v1125, 1.442695
    %v1127 = vpow.pop %v1126
    %v1128 = vadd.f32 %v1127, 1.0
    %v1129 = vrcp.pop %v1128
    %v1130 = vmul.f32 %v1128, %v1129
    %v1131 = vsub.f32 1.0, %v1130
    %v1132 = vmul.f32 %v1129, %v1131
    %v1133 = vadd.f32 %v1129, %v1132
    %vm1134 = vweird.f32 %v1128
    %vm1135 = vweird.f32 %v1129
    %vm1136 = vmor %vm1134, %vm1135
    %v1137 = vsel %vm1136, %v1129, %v1133
    %v1138 = vand.u32 2147483647, %v1128
    %vm1139 = vcmp.eq.f32.partialorder %v1138, 8.507059e+37
    %v1140 = vand.u32 %v1128, 2147483648
    %v1141 = vor.u32 1.1754944e-38, %v1140
    %v1142 = vsel %vm1139, %v1141, %v1137
    %v1143 = vmul.f32 1.0, %v1142
    %v1144 = vadd.f32 %v342, %v1108
    %v1145 = vxor.u32 %v1144, 2147483648
    %v1146 = vmul.f32 %v1145, 1.442695
    %v1147 = vpow.pop %v1146
    %v1148 = vadd.f32 %v1147, 1.0
    %v1149 = vrcp.pop %v1148
    %v1150 = vmul.f32 %v1148, %v1149
    %v1151 = vsub.f32 1.0, %v1150
    %v1152 = vmul.f32 %v1149, %v1151
    %v1153 = vadd.f32 %v1149, %v1152
    %vm1154 = vweird.f32 %v1148
    %vm1155 = vweird.f32 %v1149
    %vm1156 = vmor %vm1154, %vm1155
    %v1157 = vsel %vm1156, %v1149, %v1153
    %v1158 = vand.u32 2147483647, %v1148
    %vm1159 = vcmp.eq.f32.partialorder %v1158, 8.507059e+37
    %v1160 = vand.u32 %v1148, 2147483648
    %v1161 = vor.u32 1.1754944e-38, %v1160
    %v1162 = vsel %vm1159, %v1161, %v1157
    %v1163 = vmul.f32 1.0, %v1162
    %v1164 = vmul.f32 %v1143, %v1121
    %v1165 = vadd.f32 %v371, %v1164
    %v1166 = vtanh.pop %v1165
    %v1167 = vsub.f32 1.0, %v1163
    %v1168 = vmul.f32 %v1167, %v1166
    %v1169 = vmul.f32 %v1163, %v1083
    %v1170 = vadd.f32 %v1168, %v1169
    %v1171 = vpack.c.bf16 %v1170, %v1170
    %1172 = vmatpush.bf16.msra.mxu0 %v884
    %1173 = vmatpush.bf16.msra.mxu0 %v881
    %1174 = vmatpush.bf16.msra.mxu0 %v878
    %1175 = vmatpush.bf16.msra.mxu0 %v875
    %1176 = vmatpush.bf16.msra.mxu0 %v872
    %1177 = vmatpush.bf16.msra.mxu0 %v869
    %1178 = vmatpush.bf16.msra.mxu0 %v866
    %1179 = vmatpush.bf16.msra.mxu0 %v863
    %1180 = vmatmul.bf16.gmra.mxu0 %v1171
    %v1181 = vpop.f32.mrf.mxu0
    %v1182 = vadd.f32 %v183, %v1181
    %v1183 = vpop.f32.mrf.mxu0
    %1184 = vdwg.mxu0
    %1185 = vmatpush.bf16.msra.mxu0 %v885
    %1186 = vmatpush.bf16.msra.mxu0 %v882
    %1187 = vmatpush.bf16.msra.mxu0 %v879
    %1188 = vmatpush.bf16.msra.mxu0 %v876
    %1189 = vmatpush.bf16.msra.mxu0 %v873
    %1190 = vmatpush.bf16.msra.mxu0 %v870
    %1191 = vmatpush.bf16.msra.mxu0 %v867
    %1192 = vmatpush.bf16.msra.mxu0 %v864
    %1193 = vmatmul.bf16.gmra.mxu0 %v1171
    %v1194 = vpop.f32.mrf.mxu0
    %v1195 = vadd.f32 %v184, %v1194
    %v1196 = vpop.f32.mrf.mxu0
    %1197 = vdwg.mxu0
    %1198 = vmatpush.bf16.msra.mxu0 %v886
    %1199 = vmatpush.bf16.msra.mxu0 %v883
    %1200 = vmatpush.bf16.msra.mxu0 %v880
    %1201 = vmatpush.bf16.msra.mxu0 %v877
    %1202 = vmatpush.bf16.msra.mxu0 %v874
    %1203 = vmatpush.bf16.msra.mxu0 %v871
    %1204 = vmatpush.bf16.msra.mxu0 %v868
    %1205 = vmatpush.bf16.msra.mxu0 %v865
    %1206 = vmatmul.bf16.gmra.mxu0 %v1171
    %v1207 = vpop.f32.mrf.mxu0
    %v1208 = vadd.f32 %v185, %v1207
    %v1209 = vpop.f32.mrf.mxu0
    %1210 = vdwg.mxu0
    %v1211 = vadd.f32 %v315, %v1182
    %v1212 = vxor.u32 %v1211, 2147483648
    %v1213 = vmul.f32 %v1212, 1.442695
    %v1214 = vpow.pop %v1213
    %v1215 = vadd.f32 %v1214, 1.0
    %v1216 = vrcp.pop %v1215
    %v1217 = vmul.f32 %v1215, %v1216
    %v1218 = vsub.f32 1.0, %v1217
    %v1219 = vmul.f32 %v1216, %v1218
    %v1220 = vadd.f32 %v1216, %v1219
    %vm1221 = vweird.f32 %v1215
    %vm1222 = vweird.f32 %v1216
    %vm1223 = vmor %vm1221, %vm1222
    %v1224 = vsel %vm1223, %v1216, %v1220
    %v1225 = vand.u32 2147483647, %v1215
    %vm1226 = vcmp.eq.f32.partialorder %v1225, 8.507059e+37
    %v1227 = vand.u32 %v1215, 2147483648
    %v1228 = vor.u32 1.1754944e-38, %v1227
    %v1229 = vsel %vm1226, %v1228, %v1224
    %v1230 = vmul.f32 1.0, %v1229
    %v1231 = vadd.f32 %v344, %v1195
    %v1232 = vxor.u32 %v1231, 2147483648
    %v1233 = vmul.f32 %v1232, 1.442695
    %v1234 = vpow.pop %v1233
    %v1235 = vadd.f32 %v1234, 1.0
    %v1236 = vrcp.pop %v1235
    %v1237 = vmul.f32 %v1235, %v1236
    %v1238 = vsub.f32 1.0, %v1237
    %v1239 = vmul.f32 %v1236, %v1238
    %v1240 = vadd.f32 %v1236, %v1239
    %vm1241 = vweird.f32 %v1235
    %vm1242 = vweird.f32 %v1236
    %vm1243 = vmor %vm1241, %vm1242
    %v1244 = vsel %vm1243, %v1236, %v1240
    %v1245 = vand.u32 2147483647, %v1235
    %vm1246 = vcmp.eq.f32.partialorder %v1245, 8.507059e+37
    %v1247 = vand.u32 %v1235, 2147483648
    %v1248 = vor.u32 1.1754944e-38, %v1247
    %v1249 = vsel %vm1246, %v1248, %v1244
    %v1250 = vmul.f32 1.0, %v1249
    %v1251 = vmul.f32 %v1230, %v1208
    %v1252 = vadd.f32 %v373, %v1251
    %v1253 = vtanh.pop %v1252
    %v1254 = vsub.f32 1.0, %v1250
    %v1255 = vmul.f32 %v1254, %v1253
    %v1256 = vmul.f32 %v1250, %v1170
    %v1257 = vadd.f32 %v1255, %v1256
    %v1258 = vpack.c.bf16 %v1257, %v1257
    %1259 = vmatpush.bf16.msra.mxu0 %v884
    %1260 = vmatpush.bf16.msra.mxu0 %v881
    %1261 = vmatpush.bf16.msra.mxu0 %v878
    %1262 = vmatpush.bf16.msra.mxu0 %v875
    %1263 = vmatpush.bf16.msra.mxu0 %v872
    %1264 = vmatpush.bf16.msra.mxu0 %v869
    %1265 = vmatpush.bf16.msra.mxu0 %v866
    %1266 = vmatpush.bf16.msra.mxu0 %v863
    %1267 = vmatmul.bf16.gmra.mxu0 %v1258
    %v1268 = vpop.f32.mrf.mxu0
    %v1269 = vadd.f32 %v183, %v1268
    %v1270 = vpop.f32.mrf.mxu0
    %1271 = vdwg.mxu0
    %1272 = vmatpush.bf16.msra.mxu0 %v885
    %1273 = vmatpush.bf16.msra.mxu0 %v882
    %1274 = vmatpush.bf16.msra.mxu0 %v879
    %1275 = vmatpush.bf16.msra.mxu0 %v876
    %1276 = vmatpush.bf16.msra.mxu0 %v873
    %1277 = vmatpush.bf16.msra.mxu0 %v870
    %1278 = vmatpush.bf16.msra.mxu0 %v867
    %1279 = vmatpush.bf16.msra.mxu0 %v864
    %1280 = vmatmul.bf16.gmra.mxu0 %v1258
    %v1281 = vpop.f32.mrf.mxu0
    %v1282 = vadd.f32 %v184, %v1281
    %v1283 = vpop.f32.mrf.mxu0
    %1284 = vdwg.mxu0
    %1285 = vmatpush.bf16.msra.mxu0 %v886
    %1286 = vmatpush.bf16.msra.mxu0 %v883
    %1287 = vmatpush.bf16.msra.mxu0 %v880
    %1288 = vmatpush.bf16.msra.mxu0 %v877
    %1289 = vmatpush.bf16.msra.mxu0 %v874
    %1290 = vmatpush.bf16.msra.mxu0 %v871
    %1291 = vmatpush.bf16.msra.mxu0 %v868
    %1292 = vmatpush.bf16.msra.mxu0 %v865
    %1293 = vmatmul.bf16.gmra.mxu0 %v1258
    %v1294 = vpop.f32.mrf.mxu0
    %v1295 = vadd.f32 %v185, %v1294
    %v1296 = vpop.f32.mrf.mxu0
    %1297 = vdwg.mxu0
    %v1298 = vadd.f32 %v318, %v1269
    %v1299 = vxor.u32 %v1298, 2147483648
    %v1300 = vmul.f32 %v1299, 1.442695
    %v1301 = vpow.pop %v1300
    %v1302 = vadd.f32 %v1301, 1.0
    %v1303 = vrcp.pop %v1302
    %v1304 = vmul.f32 %v1302, %v1303
    %v1305 = vsub.f32 1.0, %v1304
    %v1306 = vmul.f32 %v1303, %v1305
    %v1307 = vadd.f32 %v1303, %v1306
    %vm1308 = vweird.f32 %v1302
    %vm1309 = vweird.f32 %v1303
    %vm1310 = vmor %vm1308, %vm1309
    %v1311 = vsel %vm1310, %v1303, %v1307
    %v1312 = vand.u32 2147483647, %v1302
    %vm1313 = vcmp.eq.f32.partialorder %v1312, 8.507059e+37
    %v1314 = vand.u32 %v1302, 2147483648
    %v1315 = vor.u32 1.1754944e-38, %v1314
    %v1316 = vsel %vm1313, %v1315, %v1311
    %v1317 = vmul.f32 1.0, %v1316
    %v1318 = vadd.f32 %v347, %v1282
    %v1319 = vxor.u32 %v1318, 2147483648
    %v1320 = vmul.f32 %v1319, 1.442695
    %v1321 = vpow.pop %v1320
    %v1322 = vadd.f32 %v1321, 1.0
    %v1323 = vrcp.pop %v1322
    %v1324 = vmul.f32 %v1322, %v1323
    %v1325 = vsub.f32 1.0, %v1324
    %v1326 = vmul.f32 %v1323, %v1325
    %v1327 = vadd.f32 %v1323, %v1326
    %vm1328 = vweird.f32 %v1322
    %vm1329 = vweird.f32 %v1323
    %vm1330 = vmor %vm1328, %vm1329
    %v1331 = vsel %vm1330, %v1323, %v1327
    %v1332 = vand.u32 2147483647, %v1322
    %vm1333 = vcmp.eq.f32.partialorder %v1332, 8.507059e+37
    %v1334 = vand.u32 %v1322, 2147483648
    %v1335 = vor.u32 1.1754944e-38, %v1334
    %v1336 = vsel %vm1333, %v1335, %v1331
    %v1337 = vmul.f32 1.0, %v1336
    %v1338 = vmul.f32 %v1317, %v1295
    %v1339 = vadd.f32 %v376, %v1338
    %v1340 = vtanh.pop %v1339
    %v1341 = vsub.f32 1.0, %v1337
    %v1342 = vmul.f32 %v1341, %v1340
    %v1343 = vmul.f32 %v1337, %v1257
    %v1344 = vadd.f32 %v1342, %v1343
    %v1345 = vpack.c.bf16 %v1344, %v1344
    %1346 = vmatpush.bf16.msra.mxu0 %v884
    %1347 = vmatpush.bf16.msra.mxu0 %v881
    %1348 = vmatpush.bf16.msra.mxu0 %v878
    %1349 = vmatpush.bf16.msra.mxu0 %v875
    %1350 = vmatpush.bf16.msra.mxu0 %v872
    %1351 = vmatpush.bf16.msra.mxu0 %v869
    %1352 = vmatpush.bf16.msra.mxu0 %v866
    %1353 = vmatpush.bf16.msra.mxu0 %v863
    %1354 = vmatmul.bf16.gmra.mxu0 %v1345
    %v1355 = vpop.f32.mrf.mxu0
    %v1356 = vadd.f32 %v183, %v1355
    %v1357 = vpop.f32.mrf.mxu0
    %1358 = vdwg.mxu0
    %1359 = vmatpush.bf16.msra.mxu0 %v885
    %1360 = vmatpush.bf16.msra.mxu0 %v882
    %1361 = vmatpush.bf16.msra.mxu0 %v879
    %1362 = vmatpush.bf16.msra.mxu0 %v876
    %1363 = vmatpush.bf16.msra.mxu0 %v873
    %1364 = vmatpush.bf16.msra.mxu0 %v870
    %1365 = vmatpush.bf16.msra.mxu0 %v867
    %1366 = vmatpush.bf16.msra.mxu0 %v864
    %1367 = vmatmul.bf16.gmra.mxu0 %v1345
    %v1368 = vpop.f32.mrf.mxu0
    %v1369 = vadd.f32 %v184, %v1368
    %v1370 = vpop.f32.mrf.mxu0
    %1371 = vdwg.mxu0
    %1372 = vmatpush.bf16.msra.mxu0 %v886
    %1373 = vmatpush.bf16.msra.mxu0 %v883
    %1374 = vmatpush.bf16.msra.mxu0 %v880
    %1375 = vmatpush.bf16.msra.mxu0 %v877
    %1376 = vmatpush.bf16.msra.mxu0 %v874
    %1377 = vmatpush.bf16.msra.mxu0 %v871
    %1378 = vmatpush.bf16.msra.mxu0 %v868
    %1379 = vmatpush.bf16.msra.mxu0 %v865
    %1380 = vmatmul.bf16.gmra.mxu0 %v1345
    %v1381 = vpop.f32.mrf.mxu0
    %v1382 = vadd.f32 %v185, %v1381
    %v1383 = vpop.f32.mrf.mxu0
    %1384 = vdwg.mxu0
    %v1385 = vadd.f32 %v320, %v1356
    %v1386 = vxor.u32 %v1385, 2147483648
    %v1387 = vmul.f32 %v1386, 1.442695
    %v1388 = vpow.pop %v1387
    %v1389 = vadd.f32 %v1388, 1.0
    %v1390 = vrcp.pop %v1389
    %v1391 = vmul.f32 %v1389, %v1390
    %v1392 = vsub.f32 1.0, %v1391
    %v1393 = vmul.f32 %v1390, %v1392
    %v1394 = vadd.f32 %v1390, %v1393
    %vm1395 = vweird.f32 %v1389
    %vm1396 = vweird.f32 %v1390
    %vm1397 = vmor %vm1395, %vm1396
    %v1398 = vsel %vm1397, %v1390, %v1394
    %v1399 = vand.u32 2147483647, %v1389
    %vm1400 = vcmp.eq.f32.partialorder %v1399, 8.507059e+37
    %v1401 = vand.u32 %v1389, 2147483648
    %v1402 = vor.u32 1.1754944e-38, %v1401
    %v1403 = vsel %vm1400, %v1402, %v1398
    %v1404 = vmul.f32 1.0, %v1403
    %v1405 = vadd.f32 %v349, %v1369
    %v1406 = vxor.u32 %v1405, 2147483648
    %v1407 = vmul.f32 %v1406, 1.442695
    %v1408 = vpow.pop %v1407
    %v1409 = vadd.f32 %v1408, 1.0
    %v1410 = vrcp.pop %v1409
    %v1411 = vmul.f32 %v1409, %v1410
    %v1412 = vsub.f32 1.0, %v1411
    %v1413 = vmul.f32 %v1410, %v1412
    %v1414 = vadd.f32 %v1410, %v1413
    %vm1415 = vweird.f32 %v1409
    %vm1416 = vweird.f32 %v1410
    %vm1417 = vmor %vm1415, %vm1416
    %v1418 = vsel %vm1417, %v1410, %v1414
    %v1419 = vand.u32 2147483647, %v1409
    %vm1420 = vcmp.eq.f32.partialorder %v1419, 8.507059e+37
    %v1421 = vand.u32 %v1409, 2147483648
    %v1422 = vor.u32 1.1754944e-38, %v1421
    %v1423 = vsel %vm1420, %v1422, %v1418
    %v1424 = vmul.f32 1.0, %v1423
    %v1425 = vmul.f32 %v1404, %v1382
    %v1426 = vadd.f32 %v378, %v1425
    %v1427 = vtanh.pop %v1426
    %v1428 = vsub.f32 1.0, %v1424
    %v1429 = vmul.f32 %v1428, %v1427
    %v1430 = vmul.f32 %v1424, %v1344
    %v1431 = vadd.f32 %v1429, %v1430
    %v1432 = vpack.c.bf16 %v1431, %v1431
    %1433 = vmatpush.bf16.msra.mxu0 %v884
    %1434 = vmatpush.bf16.msra.mxu0 %v881
    %1435 = vmatpush.bf16.msra.mxu0 %v878
    %1436 = vmatpush.bf16.msra.mxu0 %v875
    %1437 = vmatpush.bf16.msra.mxu0 %v872
    %1438 = vmatpush.bf16.msra.mxu0 %v869
    %1439 = vmatpush.bf16.msra.mxu0 %v866
    %1440 = vmatpush.bf16.msra.mxu0 %v863
    %1441 = vmatmul.bf16.gmra.mxu0 %v1432
    %v1442 = vpop.f32.mrf.mxu0
    %v1443 = vadd.f32 %v183, %v1442
    %v1444 = vpop.f32.mrf.mxu0
    %1445 = vdwg.mxu0
    %1446 = vmatpush.bf16.msra.mxu0 %v885
    %1447 = vmatpush.bf16.msra.mxu0 %v882
    %1448 = vmatpush.bf16.msra.mxu0 %v879
    %1449 = vmatpush.bf16.msra.mxu0 %v876
    %1450 = vmatpush.bf16.msra.mxu0 %v873
    %1451 = vmatpush.bf16.msra.mxu0 %v870
    %1452 = vmatpush.bf16.msra.mxu0 %v867
    %1453 = vmatpush.bf16.msra.mxu0 %v864
    %1454 = vmatmul.bf16.gmra.mxu0 %v1432
    %v1455 = vpop.f32.mrf.mxu0
    %v1456 = vadd.f32 %v184, %v1455
    %v1457 = vpop.f32.mrf.mxu0
    %1458 = vdwg.mxu0
    %1459 = vmatpush.bf16.msra.mxu0 %v886
    %1460 = vmatpush.bf16.msra.mxu0 %v883
    %1461 = vmatpush.bf16.msra.mxu0 %v880
    %1462 = vmatpush.bf16.msra.mxu0 %v877
    %1463 = vmatpush.bf16.msra.mxu0 %v874
    %1464 = vmatpush.bf16.msra.mxu0 %v871
    %1465 = vmatpush.bf16.msra.mxu0 %v868
    %1466 = vmatpush.bf16.msra.mxu0 %v865
    %1467 = vmatmul.bf16.gmra.mxu0 %v1432
    %v1468 = vpop.f32.mrf.mxu0
    %v1469 = vadd.f32 %v185, %v1468
    %v1470 = vpop.f32.mrf.mxu0
    %1471 = vdwg.mxu0
    %v1472 = vadd.f32 %v323, %v1443
    %v1473 = vxor.u32 %v1472, 2147483648
    %v1474 = vmul.f32 %v1473, 1.442695
    %v1475 = vpow.pop %v1474
    %v1476 = vadd.f32 %v1475, 1.0
    %v1477 = vrcp.pop %v1476
    %v1478 = vmul.f32 %v1476, %v1477
    %v1479 = vsub.f32 1.0, %v1478
    %v1480 = vmul.f32 %v1477, %v1479
    %v1481 = vadd.f32 %v1477, %v1480
    %vm1482 = vweird.f32 %v1476
    %vm1483 = vweird.f32 %v1477
    %vm1484 = vmor %vm1482, %vm1483
    %v1485 = vsel %vm1484, %v1477, %v1481
    %v1486 = vand.u32 2147483647, %v1476
    %vm1487 = vcmp.eq.f32.partialorder %v1486, 8.507059e+37
    %v1488 = vand.u32 %v1476, 2147483648
    %v1489 = vor.u32 1.1754944e-38, %v1488
    %v1490 = vsel %vm1487, %v1489, %v1485
    %v1491 = vmul.f32 1.0, %v1490
    %v1492 = vadd.f32 %v352, %v1456
    %v1493 = vxor.u32 %v1492, 2147483648
    %v1494 = vmul.f32 %v1493, 1.442695
    %v1495 = vpow.pop %v1494
    %v1496 = vadd.f32 %v1495, 1.0
    %v1497 = vrcp.pop %v1496
    %v1498 = vmul.f32 %v1496, %v1497
    %v1499 = vsub.f32 1.0, %v1498
    %v1500 = vmul.f32 %v1497, %v1499
    %v1501 = vadd.f32 %v1497, %v1500
    %vm1502 = vweird.f32 %v1496
    %vm1503 = vweird.f32 %v1497
    %vm1504 = vmor %vm1502, %vm1503
    %v1505 = vsel %vm1504, %v1497, %v1501
    %v1506 = vand.u32 2147483647, %v1496
    %vm1507 = vcmp.eq.f32.partialorder %v1506, 8.507059e+37
    %v1508 = vand.u32 %v1496, 2147483648
    %v1509 = vor.u32 1.1754944e-38, %v1508
    %v1510 = vsel %vm1507, %v1509, %v1505
    %v1511 = vmul.f32 1.0, %v1510
    %v1512 = vmul.f32 %v1491, %v1469
    %v1513 = vadd.f32 %v381, %v1512
    %v1514 = vtanh.pop %v1513
    %v1515 = vsub.f32 1.0, %v1511
    %v1516 = vmul.f32 %v1515, %v1514
    %v1517 = vmul.f32 %v1511, %v1431
    %v1518 = vadd.f32 %v1516, %v1517
    %v1519 = vpack.c.bf16 %v1518, %v1518
    %1520 = vmatpush.bf16.msra.mxu0 %v884
    %1521 = vmatpush.bf16.msra.mxu0 %v881
    %1522 = vmatpush.bf16.msra.mxu0 %v878
    %1523 = vmatpush.bf16.msra.mxu0 %v875
    %1524 = vmatpush.bf16.msra.mxu0 %v872
    %1525 = vmatpush.bf16.msra.mxu0 %v869
    %1526 = vmatpush.bf16.msra.mxu0 %v866
    %1527 = vmatpush.bf16.msra.mxu0 %v863
    %1528 = vmatmul.bf16.gmra.mxu0 %v1519
    %v1529 = vpop.f32.mrf.mxu0
    %v1530 = vadd.f32 %v183, %v1529
    %v1531 = vpop.f32.mrf.mxu0
    %1532 = vdwg.mxu0
    %1533 = vmatpush.bf16.msra.mxu0 %v885
    %1534 = vmatpush.bf16.msra.mxu0 %v882
    %1535 = vmatpush.bf16.msra.mxu0 %v879
    %1536 = vmatpush.bf16.msra.mxu0 %v876
    %1537 = vmatpush.bf16.msra.mxu0 %v873
    %1538 = vmatpush.bf16.msra.mxu0 %v870
    %1539 = vmatpush.bf16.msra.mxu0 %v867
    %1540 = vmatpush.bf16.msra.mxu0 %v864
    %1541 = vmatmul.bf16.gmra.mxu0 %v1519
    %v1542 = vpop.f32.mrf.mxu0
    %v1543 = vadd.f32 %v184, %v1542
    %v1544 = vpop.f32.mrf.mxu0
    %1545 = vdwg.mxu0
    %1546 = vmatpush.bf16.msra.mxu0 %v886
    %1547 = vmatpush.bf16.msra.mxu0 %v883
    %1548 = vmatpush.bf16.msra.mxu0 %v880
    %1549 = vmatpush.bf16.msra.mxu0 %v877
    %1550 = vmatpush.bf16.msra.mxu0 %v874
    %1551 = vmatpush.bf16.msra.mxu0 %v871
    %1552 = vmatpush.bf16.msra.mxu0 %v868
    %1553 = vmatpush.bf16.msra.mxu0 %v865
    %1554 = vmatmul.bf16.gmra.mxu0 %v1519
    %v1555 = vpop.f32.mrf.mxu0
    %v1556 = vadd.f32 %v185, %v1555
    %v1557 = vpop.f32.mrf.mxu0
    %1558 = vdwg.mxu0
    %v1559 = vadd.f32 %v325, %v1530
    %v1560 = vxor.u32 %v1559, 2147483648
    %v1561 = vmul.f32 %v1560, 1.442695
    %v1562 = vpow.pop %v1561
    %v1563 = vadd.f32 %v1562, 1.0
    %v1564 = vrcp.pop %v1563
    %v1565 = vmul.f32 %v1563, %v1564
    %v1566 = vsub.f32 1.0, %v1565
    %v1567 = vmul.f32 %v1564, %v1566
    %v1568 = vadd.f32 %v1564, %v1567
    %vm1569 = vweird.f32 %v1563
    %vm1570 = vweird.f32 %v1564
    %vm1571 = vmor %vm1569, %vm1570
    %v1572 = vsel %vm1571, %v1564, %v1568
    %v1573 = vand.u32 2147483647, %v1563
    %vm1574 = vcmp.eq.f32.partialorder %v1573, 8.507059e+37
    %v1575 = vand.u32 %v1563, 2147483648
    %v1576 = vor.u32 1.1754944e-38, %v1575
    %v1577 = vsel %vm1574, %v1576, %v1572
    %v1578 = vmul.f32 1.0, %v1577
    %v1579 = vadd.f32 %v354, %v1543
    %v1580 = vxor.u32 %v1579, 2147483648
    %v1581 = vmul.f32 %v1580, 1.442695
    %v1582 = vpow.pop %v1581
    %v1583 = vadd.f32 %v1582, 1.0
    %v1584 = vrcp.pop %v1583
    %v1585 = vmul.f32 %v1583, %v1584
    %v1586 = vsub.f32 1.0, %v1585
    %v1587 = vmul.f32 %v1584, %v1586
    %v1588 = vadd.f32 %v1584, %v1587
    %vm1589 = vweird.f32 %v1583
    %vm1590 = vweird.f32 %v1584
    %vm1591 = vmor %vm1589, %vm1590
    %v1592 = vsel %vm1591, %v1584, %v1588
    %v1593 = vand.u32 2147483647, %v1583
    %vm1594 = vcmp.eq.f32.partialorder %v1593, 8.507059e+37
    %v1595 = vand.u32 %v1583, 2147483648
    %v1596 = vor.u32 1.1754944e-38, %v1595
    %v1597 = vsel %vm1594, %v1596, %v1592
    %v1598 = vmul.f32 1.0, %v1597
    %v1599 = vmul.f32 %v1578, %v1556
    %v1600 = vadd.f32 %v383, %v1599
    %v1601 = vtanh.pop %v1600
    %v1602 = vsub.f32 1.0, %v1598
    %v1603 = vmul.f32 %v1602, %v1601
    %v1604 = vmul.f32 %v1598, %v1518
    %v1605 = vadd.f32 %v1603, %v1604
    %1606 = vst [vmem:[#allocation8] sm:$0xff] 0.0
    %v1607 = vpack.c.bf16 %v1605, %v1605
    %v1640 = vunpack.c.l.b16 %v125
    %v1641 = vunpack.c.h.b16 %v125
    %v1642 = vunpack.c.l.b16 %v126
    %v1643 = vunpack.c.l.b16 %v127
    %v1644 = vunpack.c.h.b16 %v127
    %v1645 = vunpack.c.l.b16 %v128
    %v1646 = vunpack.c.l.b16 %v129
    %v1647 = vunpack.c.h.b16 %v129
    %v1648 = vunpack.c.l.b16 %v130
    %v1649 = vunpack.c.l.b16 %v131
    %v1650 = vunpack.c.h.b16 %v131
    %v1651 = vunpack.c.l.b16 %v132
    %v1652 = vunpack.c.l.b16 %v133
    %v1653 = vunpack.c.h.b16 %v133
    %v1654 = vunpack.c.l.b16 %v134
    %v1655 = vunpack.c.l.b16 %v135
    %v1656 = vunpack.c.h.b16 %v135
    %v1657 = vunpack.c.l.b16 %v136
    %v1658 = vunpack.c.l.b16 %v137
    %v1659 = vunpack.c.h.b16 %v137
    %v1660 = vunpack.c.l.b16 %v138
    %v1661 = vunpack.c.l.b16 %v139
    %v1662 = vunpack.c.h.b16 %v139
    %v1663 = vunpack.c.l.b16 %v140
    %v1664 = vunpack.c.l.b16 %v141
    %v1665 = vunpack.c.h.b16 %v141
    %v1666 = vunpack.c.l.b16 %v142
    %v1667 = vunpack.c.l.b16 %v143
    %v1668 = vunpack.c.h.b16 %v143
    %v1669 = vunpack.c.l.b16 %v144
    %v1670 = vunpack.c.l.b16 %v145
    %v1671 = vunpack.c.h.b16 %v145
    %v1672 = vunpack.c.l.b16 %v146
    %v1673 = vunpack.c.l.b16 %v147
    %v1674 = vunpack.c.h.b16 %v147
    %v1675 = vunpack.c.l.b16 %v148
    %v1676 = vunpack.c.l.b16 %v149
    %v1677 = vunpack.c.h.b16 %v149
    %v1678 = vunpack.c.l.b16 %v150
    %v1679 = vunpack.c.l.b16 %v151
    %v1680 = vunpack.c.h.b16 %v151
    %v1681 = vunpack.c.l.b16 %v152
    %v1682 = vunpack.c.l.b16 %v153
    %v1683 = vunpack.c.h.b16 %v153
    %v1684 = vunpack.c.l.b16 %v154
    %v1685 = vunpack.c.l.b16 %v155
    %v1686 = vunpack.c.h.b16 %v155
    %v1687 = vunpack.c.l.b16 %v156
    %v1688 = vpack.c.b16 %v1643, %v1640
    %v1689 = vpack.c.b16 %v1644, %v1641
    %v1690 = vpack.c.b16 %v1645, %v1642
    %v1691 = vpack.c.b16 %v1649, %v1646
    %v1692 = vpack.c.b16 %v1650, %v1647
    %v1693 = vpack.c.b16 %v1651, %v1648
    %v1694 = vpack.c.b16 %v1655, %v1652
    %v1695 = vpack.c.b16 %v1656, %v1653
    %v1696 = vpack.c.b16 %v1657, %v1654
    %v1697 = vpack.c.b16 %v1661, %v1658
    %v1698 = vpack.c.b16 %v1662, %v1659
    %v1699 = vpack.c.b16 %v1663, %v1660
    %v1700 = vpack.c.b16 %v1667, %v1664
    %v1701 = vpack.c.b16 %v1668, %v1665
    %v1702 = vpack.c.b16 %v1669, %v1666
    %v1703 = vpack.c.b16 %v1673, %v1670
    %v1704 = vpack.c.b16 %v1674, %v1671
    %v1705 = vpack.c.b16 %v1675, %v1672
    %v1706 = vpack.c.b16 %v1679, %v1676
    %v1707 = vpack.c.b16 %v1680, %v1677
    %v1708 = vpack.c.b16 %v1681, %v1678
    %v1709 = vpack.c.b16 %v1685, %v1682
    %v1710 = vpack.c.b16 %v1686, %v1683
    %v1711 = vpack.c.b16 %v1687, %v1684
    %1736 = vmatpush.bf16.msra.mxu0 %v1709
    %1737 = vmatpush.bf16.msra.mxu0 %v1706
    %1738 = vmatpush.bf16.msra.mxu0 %v1703
    %1739 = vmatpush.bf16.msra.mxu0 %v1700
    %1740 = vmatpush.bf16.msra.mxu0 %v1697
    %1741 = vmatpush.bf16.msra.mxu0 %v1694
    %1742 = vmatpush.bf16.msra.mxu0 %v1691
    %1743 = vmatpush.bf16.msra.mxu0 %v1688
    %1744 = vmatmul.bf16.gmra.mxu0 %v1607
    %v1745 = vpop.f32.mrf.mxu0
    %v1746 = vadd.f32 %v191, %v1745
    %v1747 = vpop.f32.mrf.mxu0
    %1748 = vdwg.mxu0
    %1749 = vmatpush.bf16.msra.mxu0 %v1710
    %1750 = vmatpush.bf16.msra.mxu0 %v1707
    %1751 = vmatpush.bf16.msra.mxu0 %v1704
    %1752 = vmatpush.bf16.msra.mxu0 %v1701
    %1753 = vmatpush.bf16.msra.mxu0 %v1698
    %1754 = vmatpush.bf16.msra.mxu0 %v1695
    %1755 = vmatpush.bf16.msra.mxu0 %v1692
    %1756 = vmatpush.bf16.msra.mxu0 %v1689
    %1757 = vmatmul.bf16.gmra.mxu0 %v1607
    %v1758 = vpop.f32.mrf.mxu0
    %v1759 = vadd.f32 %v192, %v1758
    %v1760 = vpop.f32.mrf.mxu0
    %1761 = vdwg.mxu0
    %1762 = vmatpush.bf16.msra.mxu0 %v1711
    %1763 = vmatpush.bf16.msra.mxu0 %v1708
    %1764 = vmatpush.bf16.msra.mxu0 %v1705
    %1765 = vmatpush.bf16.msra.mxu0 %v1702
    %1766 = vmatpush.bf16.msra.mxu0 %v1699
    %1767 = vmatpush.bf16.msra.mxu0 %v1696
    %1768 = vmatpush.bf16.msra.mxu0 %v1693
    %1769 = vmatpush.bf16.msra.mxu0 %v1690
    %1770 = vmatmul.bf16.gmra.mxu0 %v1607
    %v1771 = vpop.f32.mrf.mxu0
    %v1772 = vadd.f32 %v193, %v1771
    %v1773 = vpop.f32.mrf.mxu0
    %1774 = vdwg.mxu0
    %v1775 = vadd.f32 %v467, %v1746
    %v1776 = vxor.u32 %v1775, 2147483648
    %v1777 = vmul.f32 %v1776, 1.442695
    %v1778 = vpow.pop %v1777
    %v1779 = vadd.f32 %v1778, 1.0
    %v1780 = vrcp.pop %v1779
    %v1781 = vmul.f32 %v1779, %v1780
    %v1782 = vsub.f32 1.0, %v1781
    %v1783 = vmul.f32 %v1780, %v1782
    %v1784 = vadd.f32 %v1780, %v1783
    %vm1785 = vweird.f32 %v1779
    %vm1786 = vweird.f32 %v1780
    %vm1787 = vmor %vm1785, %vm1786
    %v1788 = vsel %vm1787, %v1780, %v1784
    %v1789 = vand.u32 2147483647, %v1779
    %vm1790 = vcmp.eq.f32.partialorder %v1789, 8.507059e+37
    %v1791 = vand.u32 %v1779, 2147483648
    %v1792 = vor.u32 1.1754944e-38, %v1791
    %v1793 = vsel %vm1790, %v1792, %v1788
    %v1794 = vmul.f32 1.0, %v1793
    %v1795 = vadd.f32 %v492, %v1759
    %v1796 = vxor.u32 %v1795, 2147483648
    %v1797 = vmul.f32 %v1796, 1.442695
    %v1798 = vpow.pop %v1797
    %v1799 = vadd.f32 %v1798, 1.0
    %v1800 = vrcp.pop %v1799
    %v1801 = vmul.f32 %v1799, %v1800
    %v1802 = vsub.f32 1.0, %v1801
    %v1803 = vmul.f32 %v1800, %v1802
    %v1804 = vadd.f32 %v1800, %v1803
    %vm1805 = vweird.f32 %v1799
    %vm1806 = vweird.f32 %v1800
    %vm1807 = vmor %vm1805, %vm1806
    %v1808 = vsel %vm1807, %v1800, %v1804
    %v1809 = vand.u32 2147483647, %v1799
    %vm1810 = vcmp.eq.f32.partialorder %v1809, 8.507059e+37
    %v1811 = vand.u32 %v1799, 2147483648
    %v1812 = vor.u32 1.1754944e-38, %v1811
    %v1813 = vsel %vm1810, %v1812, %v1808
    %v1814 = vmul.f32 1.0, %v1813
    %v1815 = vmul.f32 %v1794, %v1772
    %v1816 = vadd.f32 %v517, %v1815
    %v1817 = vtanh.pop %v1816
    %v1818 = vsub.f32 1.0, %v1814
    %v1819 = vmul.f32 %v1818, %v1817
    %v1820 = vmul.f32 %v1814, %v1605
    %v1821 = vadd.f32 %v1819, %v1820
    %v1822 = vpack.c.bf16 %v1821, %v1821
    %v1839 = vunpack.c.l.b16 %v165
    %v1840 = vunpack.c.l.b16 %v166
    %v1841 = vunpack.c.l.b16 %v167
    %v1842 = vunpack.c.l.b16 %v168
    %v1843 = vunpack.c.l.b16 %v169
    %v1844 = vunpack.c.l.b16 %v170
    %v1845 = vunpack.c.l.b16 %v171
    %v1846 = vunpack.c.l.b16 %v172
    %v1847 = vunpack.c.l.b16 %v173
    %v1848 = vunpack.c.l.b16 %v174
    %v1849 = vunpack.c.l.b16 %v175
    %v1850 = vunpack.c.l.b16 %v176
    %v1851 = vunpack.c.l.b16 %v177
    %v1852 = vunpack.c.l.b16 %v178
    %v1853 = vunpack.c.l.b16 %v179
    %v1854 = vunpack.c.l.b16 %v180
    %v1855 = vpack.c.b16 %v1840, %v1839
    %v1856 = vpack.c.b16 %v1842, %v1841
    %v1857 = vpack.c.b16 %v1844, %v1843
    %v1858 = vpack.c.b16 %v1846, %v1845
    %v1859 = vpack.c.b16 %v1848, %v1847
    %v1860 = vpack.c.b16 %v1850, %v1849
    %v1861 = vpack.c.b16 %v1852, %v1851
    %v1862 = vpack.c.b16 %v1854, %v1853
    %1871 = vmatpush.bf16.msra.mxu0 %v1862
    %1872 = vmatpush.bf16.msra.mxu0 %v1861
    %1873 = vmatpush.bf16.msra.mxu0 %v1860
    %1874 = vmatpush.bf16.msra.mxu0 %v1859
    %1875 = vmatpush.bf16.msra.mxu0 %v1858
    %1876 = vmatpush.bf16.msra.mxu0 %v1857
    %1877 = vmatpush.bf16.msra.mxu0 %v1856
    %1878 = vmatpush.bf16.msra.mxu0 %v1855
    %1879 = vmatmul.bf16.gmra.mxu0 %v1822
    %v1880 = vpop.f32.mrf.mxu0
    %v1881 = vadd.f32 %v207, %v1880
    %v1882 = vpop.f32.mrf.mxu0
    %1883 = vdwg.mxu0
    %s1884 = scalar_lea.vmem [#allocation8], 8
    %1885 = vst [vmem:[%s1884] sm:$0xff] %v1881
    %1886 = vmax.index.xlane.f32.xlu0 %v1881
    %v1887 = vpop.xlane.xlu0 %1886
    %v1888 = vlaneseq
    %v1889 = vand.u32 %v1888, 127
    %vm1890 = vcmp.eq.s32.totalorder %v1889, %v1887
    %v1891 = vsel %vm1890, 1, 0
    %v1892 = vcvt.s32.f32 %v1891
    %v1893 = vpack.c.bf16 %v1892, %v1892
    %1894 = vmatpush.bf16.msra.mxu0 %v780
    %1895 = vmatpush.bf16.msra.mxu0 %v777
    %1896 = vmatpush.bf16.msra.mxu0 %v774
    %1897 = vmatpush.bf16.msra.mxu0 %v771
    %1898 = vmatpush.bf16.msra.mxu0 %v768
    %1899 = vmatpush.bf16.msra.mxu0 %v765
    %1900 = vmatpush.bf16.msra.mxu0 %v762
    %1901 = vmatpush.bf16.msra.mxu0 %v759
    %1902 = vmatmul.bf16.gmra.mxu0 %v1893
    %v1903 = vpop.f32.mrf.mxu0
    %v1904 = vadd.f32 %v199, %v1903
    %v1905 = vpop.f32.mrf.mxu0
    %1906 = vdwg.mxu0
    %1907 = vmatpush.bf16.msra.mxu0 %v781
    %1908 = vmatpush.bf16.msra.mxu0 %v778
    %1909 = vmatpush.bf16.msra.mxu0 %v775
    %1910 = vmatpush.bf16.msra.mxu0 %v772
    %1911 = vmatpush.bf16.msra.mxu0 %v769
    %1912 = vmatpush.bf16.msra.mxu0 %v766
    %1913 = vmatpush.bf16.msra.mxu0 %v763
    %1914 = vmatpush.bf16.msra.mxu0 %v760
    %1915 = vmatmul.bf16.gmra.mxu0 %v1893
    %v1916 = vpop.f32.mrf.mxu0
    %v1917 = vadd.f32 %v200, %v1916
    %v1918 = vpop.f32.mrf.mxu0
    %1919 = vdwg.mxu0
    %1920 = vmatpush.bf16.msra.mxu0 %v782
    %1921 = vmatpush.bf16.msra.mxu0 %v779
    %1922 = vmatpush.bf16.msra.mxu0 %v776
    %1923 = vmatpush.bf16.msra.mxu0 %v773
    %1924 = vmatpush.bf16.msra.mxu0 %v770
    %1925 = vmatpush.bf16.msra.mxu0 %v767
    %1926 = vmatpush.bf16.msra.mxu0 %v764
    %1927 = vmatpush.bf16.msra.mxu0 %v761
    %1928 = vmatmul.bf16.gmra.mxu0 %v1893
    %v1929 = vpop.f32.mrf.mxu0
    %v1930 = vadd.f32 %v201, %v1929
    %v1931 = vpop.f32.mrf.mxu0
    %1932 = vdwg.mxu0
    %1933 = vmatpush.bf16.msra.mxu0 %v1709
    %1934 = vmatpush.bf16.msra.mxu0 %v1706
    %1935 = vmatpush.bf16.msra.mxu0 %v1703
    %1936 = vmatpush.bf16.msra.mxu0 %v1700
    %1937 = vmatpush.bf16.msra.mxu0 %v1697
    %1938 = vmatpush.bf16.msra.mxu0 %v1694
    %1939 = vmatpush.bf16.msra.mxu0 %v1691
    %1940 = vmatpush.bf16.msra.mxu0 %v1688
    %1941 = vmatmul.bf16.gmra.mxu0 %v1822
    %v1942 = vpop.f32.mrf.mxu0
    %v1943 = vadd.f32 %v191, %v1942
    %v1944 = vpop.f32.mrf.mxu0
    %1945 = vdwg.mxu0
    %1946 = vmatpush.bf16.msra.mxu0 %v1710
    %1947 = vmatpush.bf16.msra.mxu0 %v1707
    %1948 = vmatpush.bf16.msra.mxu0 %v1704
    %1949 = vmatpush.bf16.msra.mxu0 %v1701
    %1950 = vmatpush.bf16.msra.mxu0 %v1698
    %1951 = vmatpush.bf16.msra.mxu0 %v1695
    %1952 = vmatpush.bf16.msra.mxu0 %v1692
    %1953 = vmatpush.bf16.msra.mxu0 %v1689
    %1954 = vmatmul.bf16.gmra.mxu0 %v1822
    %v1955 = vpop.f32.mrf.mxu0
    %v1956 = vadd.f32 %v192, %v1955
    %v1957 = vpop.f32.mrf.mxu0
    %1958 = vdwg.mxu0
    %1959 = vmatpush.bf16.msra.mxu0 %v1711
    %1960 = vmatpush.bf16.msra.mxu0 %v1708
    %1961 = vmatpush.bf16.msra.mxu0 %v1705
    %1962 = vmatpush.bf16.msra.mxu0 %v1702
    %1963 = vmatpush.bf16.msra.mxu0 %v1699
    %1964 = vmatpush.bf16.msra.mxu0 %v1696
    %1965 = vmatpush.bf16.msra.mxu0 %v1693
    %1966 = vmatpush.bf16.msra.mxu0 %v1690
    %1967 = vmatmul.bf16.gmra.mxu0 %v1822
    %v1968 = vpop.f32.mrf.mxu0
    %v1969 = vadd.f32 %v193, %v1968
    %v1970 = vpop.f32.mrf.mxu0
    %1971 = vdwg.mxu0
    %v1972 = vadd.f32 %v1904, %v1943
    %v1973 = vxor.u32 %v1972, 2147483648
    %v1974 = vmul.f32 %v1973, 1.442695
    %v1975 = vpow.pop %v1974
    %v1976 = vadd.f32 %v1975, 1.0
    %v1977 = vrcp.pop %v1976
    %v1978 = vmul.f32 %v1976, %v1977
    %v1979 = vsub.f32 1.0, %v1978
    %v1980 = vmul.f32 %v1977, %v1979
    %v1981 = vadd.f32 %v1977, %v1980
    %vm1982 = vweird.f32 %v1976
    %vm1983 = vweird.f32 %v1977
    %vm1984 = vmor %vm1982, %vm1983
    %v1985 = vsel %vm1984, %v1977, %v1981
    %v1986 = vand.u32 2147483647, %v1976
    %vm1987 = vcmp.eq.f32.partialorder %v1986, 8.507059e+37
    %v1988 = vand.u32 %v1976, 2147483648
    %v1989 = vor.u32 1.1754944e-38, %v1988
    %v1990 = vsel %vm1987, %v1989, %v1985
    %v1991 = vmul.f32 1.0, %v1990
    %v1992 = vadd.f32 %v1917, %v1956
    %v1993 = vxor.u32 %v1992, 2147483648
    %v1994 = vmul.f32 %v1993, 1.442695
    %v1995 = vpow.pop %v1994
    %v1996 = vadd.f32 %v1995, 1.0
    %v1997 = vrcp.pop %v1996
    %v1998 = vmul.f32 %v1996, %v1997
    %v1999 = vsub.f32 1.0, %v1998
    %v2000 = vmul.f32 %v1997, %v1999
    %v2001 = vadd.f32 %v1997, %v2000
    %vm2002 = vweird.f32 %v1996
    %vm2003 = vweird.f32 %v1997
    %vm2004 = vmor %vm2002, %vm2003
    %v2005 = vsel %vm2004, %v1997, %v2001
    %v2006 = vand.u32 2147483647, %v1996
    %vm2007 = vcmp.eq.f32.partialorder %v2006, 8.507059e+37
    %v2008 = vand.u32 %v1996, 2147483648
    %v2009 = vor.u32 1.1754944e-38, %v2008
    %v2010 = vsel %vm2007, %v2009, %v2005
    %v2011 = vmul.f32 1.0, %v2010
    %v2012 = vmul.f32 %v1991, %v1969
    %v2013 = vadd.f32 %v1930, %v2012
    %v2014 = vtanh.pop %v2013
    %v2015 = vsub.f32 1.0, %v2011
    %v2016 = vmul.f32 %v2015, %v2014
    %v2017 = vmul.f32 %v2011, %v1821
    %v2018 = vadd.f32 %v2016, %v2017
    %v2019 = vpack.c.bf16 %v2018, %v2018
    %2020 = vmatpush.bf16.msra.mxu0 %v1862
    %2021 = vmatpush.bf16.msra.mxu0 %v1861
    %2022 = vmatpush.bf16.msra.mxu0 %v1860
    %2023 = vmatpush.bf16.msra.mxu0 %v1859
    %2024 = vmatpush.bf16.msra.mxu0 %v1858
    %2025 = vmatpush.bf16.msra.mxu0 %v1857
    %2026 = vmatpush.bf16.msra.mxu0 %v1856
    %2027 = vmatpush.bf16.msra.mxu0 %v1855
    %2028 = vmatmul.bf16.gmra.mxu0 %v2019
    %v2029 = vpop.f32.mrf.mxu0
    %v2030 = vadd.f32 %v207, %v2029
    %v2031 = vpop.f32.mrf.mxu0
    %2032 = vdwg.mxu0
    %s2033 = scalar_lea.vmem [#allocation8], 16
    %2034 = vst [vmem:[%s2033] sm:$0xff] %v2030
    %2035 = vmax.index.xlane.f32.xlu0 %v2030
    %v2036 = vpop.xlane.xlu0 %2035
    %vm2037 = vcmp.eq.s32.totalorder %v1889, %v2036
    %v2038 = vsel %vm2037, 1, 0
    %v2039 = vcvt.s32.f32 %v2038
    %v2040 = vpack.c.bf16 %v2039, %v2039
    %2041 = vmatpush.bf16.msra.mxu0 %v780
    %2042 = vmatpush.bf16.msra.mxu0 %v777
    %2043 = vmatpush.bf16.msra.mxu0 %v774
    %2044 = vmatpush.bf16.msra.mxu0 %v771
    %2045 = vmatpush.bf16.msra.mxu0 %v768
    %2046 = vmatpush.bf16.msra.mxu0 %v765
    %2047 = vmatpush.bf16.msra.mxu0 %v762
    %2048 = vmatpush.bf16.msra.mxu0 %v759
    %2049 = vmatmul.bf16.gmra.mxu0 %v2040
    %v2050 = vpop.f32.mrf.mxu0
    %v2051 = vadd.f32 %v199, %v2050
    %v2052 = vpop.f32.mrf.mxu0
    %2053 = vdwg.mxu0
    %2054 = vmatpush.bf16.msra.mxu0 %v781
    %2055 = vmatpush.bf16.msra.mxu0 %v778
    %2056 = vmatpush.bf16.msra.mxu0 %v775
    %2057 = vmatpush.bf16.msra.mxu0 %v772
    %2058 = vmatpush.bf16.msra.mxu0 %v769
    %2059 = vmatpush.bf16.msra.mxu0 %v766
    %2060 = vmatpush.bf16.msra.mxu0 %v763
    %2061 = vmatpush.bf16.msra.mxu0 %v760
    %2062 = vmatmul.bf16.gmra.mxu0 %v2040
    %v2063 = vpop.f32.mrf.mxu0
    %v2064 = vadd.f32 %v200, %v2063
    %v2065 = vpop.f32.mrf.mxu0
    %2066 = vdwg.mxu0
    %2067 = vmatpush.bf16.msra.mxu0 %v782
    %2068 = vmatpush.bf16.msra.mxu0 %v779
    %2069 = vmatpush.bf16.msra.mxu0 %v776
    %2070 = vmatpush.bf16.msra.mxu0 %v773
    %2071 = vmatpush.bf16.msra.mxu0 %v770
    %2072 = vmatpush.bf16.msra.mxu0 %v767
    %2073 = vmatpush.bf16.msra.mxu0 %v764
    %2074 = vmatpush.bf16.msra.mxu0 %v761
    %2075 = vmatmul.bf16.gmra.mxu0 %v2040
    %v2076 = vpop.f32.mrf.mxu0
    %v2077 = vadd.f32 %v201, %v2076
    %v2078 = vpop.f32.mrf.mxu0
    %2079 = vdwg.mxu0
    %2080 = vmatpush.bf16.msra.mxu0 %v1709
    %2081 = vmatpush.bf16.msra.mxu0 %v1706
    %2082 = vmatpush.bf16.msra.mxu0 %v1703
    %2083 = vmatpush.bf16.msra.mxu0 %v1700
    %2084 = vmatpush.bf16.msra.mxu0 %v1697
    %2085 = vmatpush.bf16.msra.mxu0 %v1694
    %2086 = vmatpush.bf16.msra.mxu0 %v1691
    %2087 = vmatpush.bf16.msra.mxu0 %v1688
    %2088 = vmatmul.bf16.gmra.mxu0 %v2019
    %v2089 = vpop.f32.mrf.mxu0
    %v2090 = vadd.f32 %v191, %v2089
    %v2091 = vpop.f32.mrf.mxu0
    %2092 = vdwg.mxu0
    %2093 = vmatpush.bf16.msra.mxu0 %v1710
    %2094 = vmatpush.bf16.msra.mxu0 %v1707
    %2095 = vmatpush.bf16.msra.mxu0 %v1704
    %2096 = vmatpush.bf16.msra.mxu0 %v1701
    %2097 = vmatpush.bf16.msra.mxu0 %v1698
    %2098 = vmatpush.bf16.msra.mxu0 %v1695
    %2099 = vmatpush.bf16.msra.mxu0 %v1692
    %2100 = vmatpush.bf16.msra.mxu0 %v1689
    %2101 = vmatmul.bf16.gmra.mxu0 %v2019
    %v2102 = vpop.f32.mrf.mxu0
    %v2103 = vadd.f32 %v192, %v2102
    %v2104 = vpop.f32.mrf.mxu0
    %2105 = vdwg.mxu0
    %2106 = vmatpush.bf16.msra.mxu0 %v1711
    %2107 = vmatpush.bf16.msra.mxu0 %v1708
    %2108 = vmatpush.bf16.msra.mxu0 %v1705
    %2109 = vmatpush.bf16.msra.mxu0 %v1702
    %2110 = vmatpush.bf16.msra.mxu0 %v1699
    %2111 = vmatpush.bf16.msra.mxu0 %v1696
    %2112 = vmatpush.bf16.msra.mxu0 %v1693
    %2113 = vmatpush.bf16.msra.mxu0 %v1690
    %2114 = vmatmul.bf16.gmra.mxu0 %v2019
    %v2115 = vpop.f32.mrf.mxu0
    %v2116 = vadd.f32 %v193, %v2115
    %v2117 = vpop.f32.mrf.mxu0
    %2118 = vdwg.mxu0
    %v2119 = vadd.f32 %v2051, %v2090
    %v2120 = vxor.u32 %v2119, 2147483648
    %v2121 = vmul.f32 %v2120, 1.442695
    %v2122 = vpow.pop %v2121
    %v2123 = vadd.f32 %v2122, 1.0
    %v2124 = vrcp.pop %v2123
    %v2125 = vmul.f32 %v2123, %v2124
    %v2126 = vsub.f32 1.0, %v2125
    %v2127 = vmul.f32 %v2124, %v2126
    %v2128 = vadd.f32 %v2124, %v2127
    %vm2129 = vweird.f32 %v2123
    %vm2130 = vweird.f32 %v2124
    %vm2131 = vmor %vm2129, %vm2130
    %v2132 = vsel %vm2131, %v2124, %v2128
    %v2133 = vand.u32 2147483647, %v2123
    %vm2134 = vcmp.eq.f32.partialorder %v2133, 8.507059e+37
    %v2135 = vand.u32 %v2123, 2147483648
    %v2136 = vor.u32 1.1754944e-38, %v2135
    %v2137 = vsel %vm2134, %v2136, %v2132
    %v2138 = vmul.f32 1.0, %v2137
    %v2139 = vadd.f32 %v2064, %v2103
    %v2140 = vxor.u32 %v2139, 2147483648
    %v2141 = vmul.f32 %v2140, 1.442695
    %v2142 = vpow.pop %v2141
    %v2143 = vadd.f32 %v2142, 1.0
    %v2144 = vrcp.pop %v2143
    %v2145 = vmul.f32 %v2143, %v2144
    %v2146 = vsub.f32 1.0, %v2145
    %v2147 = vmul.f32 %v2144, %v2146
    %v2148 = vadd.f32 %v2144, %v2147
    %vm2149 = vweird.f32 %v2143
    %vm2150 = vweird.f32 %v2144
    %vm2151 = vmor %vm2149, %vm2150
    %v2152 = vsel %vm2151, %v2144, %v2148
    %v2153 = vand.u32 2147483647, %v2143
    %vm2154 = vcmp.eq.f32.partialorder %v2153, 8.507059e+37
    %v2155 = vand.u32 %v2143, 2147483648
    %v2156 = vor.u32 1.1754944e-38, %v2155
    %v2157 = vsel %vm2154, %v2156, %v2152
    %v2158 = vmul.f32 1.0, %v2157
    %v2159 = vmul.f32 %v2138, %v2116
    %v2160 = vadd.f32 %v2077, %v2159
    %v2161 = vtanh.pop %v2160
    %v2162 = vsub.f32 1.0, %v2158
    %v2163 = vmul.f32 %v2162, %v2161
    %v2164 = vmul.f32 %v2158, %v2018
    %v2165 = vadd.f32 %v2163, %v2164
    %v2166 = vpack.c.bf16 %v2165, %v2165
    %2167 = vmatpush.bf16.msra.mxu0 %v1709
    %2168 = vmatpush.bf16.msra.mxu0 %v1706
    %2169 = vmatpush.bf16.msra.mxu0 %v1703
    %2170 = vmatpush.bf16.msra.mxu0 %v1700
    %2171 = vmatpush.bf16.msra.mxu0 %v1697
    %2172 = vmatpush.bf16.msra.mxu0 %v1694
    %2173 = vmatpush.bf16.msra.mxu0 %v1691
    %2174 = vmatpush.bf16.msra.mxu0 %v1688
    %2175 = vmatmul.bf16.gmra.mxu0 %v2166
    %v2176 = vpop.f32.mrf.mxu0
    %v2177 = vadd.f32 %v191, %v2176
    %v2178 = vpop.f32.mrf.mxu0
    %2179 = vdwg.mxu0
    %2180 = vmatpush.bf16.msra.mxu0 %v1710
    %2181 = vmatpush.bf16.msra.mxu0 %v1707
    %2182 = vmatpush.bf16.msra.mxu0 %v1704
    %2183 = vmatpush.bf16.msra.mxu0 %v1701
    %2184 = vmatpush.bf16.msra.mxu0 %v1698
    %2185 = vmatpush.bf16.msra.mxu0 %v1695
    %2186 = vmatpush.bf16.msra.mxu0 %v1692
    %2187 = vmatpush.bf16.msra.mxu0 %v1689
    %2188 = vmatmul.bf16.gmra.mxu0 %v2166
    %v2189 = vpop.f32.mrf.mxu0
    %v2190 = vadd.f32 %v192, %v2189
    %v2191 = vpop.f32.mrf.mxu0
    %2192 = vdwg.mxu0
    %2193 = vmatpush.bf16.msra.mxu0 %v1711
    %2194 = vmatpush.bf16.msra.mxu0 %v1708
    %2195 = vmatpush.bf16.msra.mxu0 %v1705
    %2196 = vmatpush.bf16.msra.mxu0 %v1702
    %2197 = vmatpush.bf16.msra.mxu0 %v1699
    %2198 = vmatpush.bf16.msra.mxu0 %v1696
    %2199 = vmatpush.bf16.msra.mxu0 %v1693
    %2200 = vmatpush.bf16.msra.mxu0 %v1690
    %2201 = vmatmul.bf16.gmra.mxu0 %v2166
    %v2202 = vpop.f32.mrf.mxu0
    %v2203 = vadd.f32 %v193, %v2202
    %v2204 = vpop.f32.mrf.mxu0
    %2205 = vdwg.mxu0
    %v2206 = vadd.f32 %v472, %v2177
    %v2207 = vxor.u32 %v2206, 2147483648
    %v2208 = vmul.f32 %v2207, 1.442695
    %v2209 = vpow.pop %v2208
    %v2210 = vadd.f32 %v2209, 1.0
    %v2211 = vrcp.pop %v2210
    %v2212 = vmul.f32 %v2210, %v2211
    %v2213 = vsub.f32 1.0, %v2212
    %v2214 = vmul.f32 %v2211, %v2213
    %v2215 = vadd.f32 %v2211, %v2214
    %vm2216 = vweird.f32 %v2210
    %vm2217 = vweird.f32 %v2211
    %vm2218 = vmor %vm2216, %vm2217
    %v2219 = vsel %vm2218, %v2211, %v2215
    %v2220 = vand.u32 2147483647, %v2210
    %vm2221 = vcmp.eq.f32.partialorder %v2220, 8.507059e+37
    %v2222 = vand.u32 %v2210, 2147483648
    %v2223 = vor.u32 1.1754944e-38, %v2222
    %v2224 = vsel %vm2221, %v2223, %v2219
    %v2225 = vmul.f32 1.0, %v2224
    %v2226 = vadd.f32 %v497, %v2190
    %v2227 = vxor.u32 %v2226, 2147483648
    %v2228 = vmul.f32 %v2227, 1.442695
    %v2229 = vpow.pop %v2228
    %v2230 = vadd.f32 %v2229, 1.0
    %v2231 = vrcp.pop %v2230
    %v2232 = vmul.f32 %v2230, %v2231
    %v2233 = vsub.f32 1.0, %v2232
    %v2234 = vmul.f32 %v2231, %v2233
    %v2235 = vadd.f32 %v2231, %v2234
    %vm2236 = vweird.f32 %v2230
    %vm2237 = vweird.f32 %v2231
    %vm2238 = vmor %vm2236, %vm2237
    %v2239 = vsel %vm2238, %v2231, %v2235
    %v2240 = vand.u32 2147483647, %v2230
    %vm2241 = vcmp.eq.f32.partialorder %v2240, 8.507059e+37
    %v2242 = vand.u32 %v2230, 2147483648
    %v2243 = vor.u32 1.1754944e-38, %v2242
    %v2244 = vsel %vm2241, %v2243, %v2239
    %v2245 = vmul.f32 1.0, %v2244
    %v2246 = vmul.f32 %v2225, %v2203
    %v2247 = vadd.f32 %v522, %v2246
    %v2248 = vtanh.pop %v2247
    %v2249 = vsub.f32 1.0, %v2245
    %v2250 = vmul.f32 %v2249, %v2248
    %v2251 = vmul.f32 %v2245, %v2165
    %v2252 = vadd.f32 %v2250, %v2251
    %v2253 = vpack.c.bf16 %v2252, %v2252
    %2254 = vmatpush.bf16.msra.mxu0 %v1709
    %2255 = vmatpush.bf16.msra.mxu0 %v1706
    %2256 = vmatpush.bf16.msra.mxu0 %v1703
    %2257 = vmatpush.bf16.msra.mxu0 %v1700
    %2258 = vmatpush.bf16.msra.mxu0 %v1697
    %2259 = vmatpush.bf16.msra.mxu0 %v1694
    %2260 = vmatpush.bf16.msra.mxu0 %v1691
    %2261 = vmatpush.bf16.msra.mxu0 %v1688
    %2262 = vmatmul.bf16.gmra.mxu0 %v2253
    %v2263 = vpop.f32.mrf.mxu0
    %v2264 = vadd.f32 %v191, %v2263
    %v2265 = vpop.f32.mrf.mxu0
    %2266 = vdwg.mxu0
    %2267 = vmatpush.bf16.msra.mxu0 %v1710
    %2268 = vmatpush.bf16.msra.mxu0 %v1707
    %2269 = vmatpush.bf16.msra.mxu0 %v1704
    %2270 = vmatpush.bf16.msra.mxu0 %v1701
    %2271 = vmatpush.bf16.msra.mxu0 %v1698
    %2272 = vmatpush.bf16.msra.mxu0 %v1695
    %2273 = vmatpush.bf16.msra.mxu0 %v1692
    %2274 = vmatpush.bf16.msra.mxu0 %v1689
    %2275 = vmatmul.bf16.gmra.mxu0 %v2253
    %v2276 = vpop.f32.mrf.mxu0
    %v2277 = vadd.f32 %v192, %v2276
    %v2278 = vpop.f32.mrf.mxu0
    %2279 = vdwg.mxu0
    %2280 = vmatpush.bf16.msra.mxu0 %v1711
    %2281 = vmatpush.bf16.msra.mxu0 %v1708
    %2282 = vmatpush.bf16.msra.mxu0 %v1705
    %2283 = vmatpush.bf16.msra.mxu0 %v1702
    %2284 = vmatpush.bf16.msra.mxu0 %v1699
    %2285 = vmatpush.bf16.msra.mxu0 %v1696
    %2286 = vmatpush.bf16.msra.mxu0 %v1693
    %2287 = vmatpush.bf16.msra.mxu0 %v1690
    %2288 = vmatmul.bf16.gmra.mxu0 %v2253
    %v2289 = vpop.f32.mrf.mxu0
    %v2290 = vadd.f32 %v193, %v2289
    %v2291 = vpop.f32.mrf.mxu0
    %2292 = vdwg.mxu0
    %v2293 = vadd.f32 %v475, %v2264
    %v2294 = vxor.u32 %v2293, 2147483648
    %v2295 = vmul.f32 %v2294, 1.442695
    %v2296 = vpow.pop %v2295
    %v2297 = vadd.f32 %v2296, 1.0
    %v2298 = vrcp.pop %v2297
    %v2299 = vmul.f32 %v2297, %v2298
    %v2300 = vsub.f32 1.0, %v2299
    %v2301 = vmul.f32 %v2298, %v2300
    %v2302 = vadd.f32 %v2298, %v2301
    %vm2303 = vweird.f32 %v2297
    %vm2304 = vweird.f32 %v2298
    %vm2305 = vmor %vm2303, %vm2304
    %v2306 = vsel %vm2305, %v2298, %v2302
    %v2307 = vand.u32 2147483647, %v2297
    %vm2308 = vcmp.eq.f32.partialorder %v2307, 8.507059e+37
    %v2309 = vand.u32 %v2297, 2147483648
    %v2310 = vor.u32 1.1754944e-38, %v2309
    %v2311 = vsel %vm2308, %v2310, %v2306
    %v2312 = vmul.f32 1.0, %v2311
    %v2313 = vadd.f32 %v500, %v2277
    %v2314 = vxor.u32 %v2313, 2147483648
    %v2315 = vmul.f32 %v2314, 1.442695
    %v2316 = vpow.pop %v2315
    %v2317 = vadd.f32 %v2316, 1.0
    %v2318 = vrcp.pop %v2317
    %v2319 = vmul.f32 %v2317, %v2318
    %v2320 = vsub.f32 1.0, %v2319
    %v2321 = vmul.f32 %v2318, %v2320
    %v2322 = vadd.f32 %v2318, %v2321
    %vm2323 = vweird.f32 %v2317
    %vm2324 = vweird.f32 %v2318
    %vm2325 = vmor %vm2323, %vm2324
    %v2326 = vsel %vm2325, %v2318, %v2322
    %v2327 = vand.u32 2147483647, %v2317
    %vm2328 = vcmp.eq.f32.partialorder %v2327, 8.507059e+37
    %v2329 = vand.u32 %v2317, 2147483648
    %v2330 = vor.u32 1.1754944e-38, %v2329
    %v2331 = vsel %vm2328, %v2330, %v2326
    %v2332 = vmul.f32 1.0, %v2331
    %v2333 = vmul.f32 %v2312, %v2290
    %v2334 = vadd.f32 %v525, %v2333
    %v2335 = vtanh.pop %v2334
    %v2336 = vsub.f32 1.0, %v2332
    %v2337 = vmul.f32 %v2336, %v2335
    %v2338 = vmul.f32 %v2332, %v2252
    %v2339 = vadd.f32 %v2337, %v2338
    %v2340 = vpack.c.bf16 %v2339, %v2339
    %2341 = vmatpush.bf16.msra.mxu0 %v1862
    %2342 = vmatpush.bf16.msra.mxu0 %v1861
    %2343 = vmatpush.bf16.msra.mxu0 %v1860
    %2344 = vmatpush.bf16.msra.mxu0 %v1859
    %2345 = vmatpush.bf16.msra.mxu0 %v1858
    %2346 = vmatpush.bf16.msra.mxu0 %v1857
    %2347 = vmatpush.bf16.msra.mxu0 %v1856
    %2348 = vmatpush.bf16.msra.mxu0 %v1855
    %2349 = vmatmul.bf16.gmra.mxu0 %v2340
    %v2350 = vpop.f32.mrf.mxu0
    %v2351 = vadd.f32 %v207, %v2350
    %v2352 = vpop.f32.mrf.mxu0
    %2353 = vdwg.mxu0
    %s2354 = scalar_lea.vmem [#allocation8], 40
    %2355 = vst [vmem:[%s2354] sm:$0xff] %v2351
    %2356 = vmax.index.xlane.f32.xlu0 %v2351
    %v2357 = vpop.xlane.xlu0 %2356
    %vm2358 = vcmp.eq.s32.totalorder %v1889, %v2357
    %v2359 = vsel %vm2358, 1, 0
    %v2360 = vcvt.s32.f32 %v2359
    %v2361 = vpack.c.bf16 %v2360, %v2360
    %2362 = vmatpush.bf16.msra.mxu0 %v780
    %2363 = vmatpush.bf16.msra.mxu0 %v777
    %2364 = vmatpush.bf16.msra.mxu0 %v774
    %2365 = vmatpush.bf16.msra.mxu0 %v771
    %2366 = vmatpush.bf16.msra.mxu0 %v768
    %2367 = vmatpush.bf16.msra.mxu0 %v765
    %2368 = vmatpush.bf16.msra.mxu0 %v762
    %2369 = vmatpush.bf16.msra.mxu0 %v759
    %2370 = vmatmul.bf16.gmra.mxu0 %v2361
    %v2371 = vpop.f32.mrf.mxu0
    %v2372 = vadd.f32 %v199, %v2371
    %v2373 = vpop.f32.mrf.mxu0
    %2374 = vdwg.mxu0
    %2375 = vmatpush.bf16.msra.mxu0 %v781
    %2376 = vmatpush.bf16.msra.mxu0 %v778
    %2377 = vmatpush.bf16.msra.mxu0 %v775
    %2378 = vmatpush.bf16.msra.mxu0 %v772
    %2379 = vmatpush.bf16.msra.mxu0 %v769
    %2380 = vmatpush.bf16.msra.mxu0 %v766
    %2381 = vmatpush.bf16.msra.mxu0 %v763
    %2382 = vmatpush.bf16.msra.mxu0 %v760
    %2383 = vmatmul.bf16.gmra.mxu0 %v2361
    %v2384 = vpop.f32.mrf.mxu0
    %v2385 = vadd.f32 %v200, %v2384
    %v2386 = vpop.f32.mrf.mxu0
    %2387 = vdwg.mxu0
    %2388 = vmatpush.bf16.msra.mxu0 %v782
    %2389 = vmatpush.bf16.msra.mxu0 %v779
    %2390 = vmatpush.bf16.msra.mxu0 %v776
    %2391 = vmatpush.bf16.msra.mxu0 %v773
    %2392 = vmatpush.bf16.msra.mxu0 %v770
    %2393 = vmatpush.bf16.msra.mxu0 %v767
    %2394 = vmatpush.bf16.msra.mxu0 %v764
    %2395 = vmatpush.bf16.msra.mxu0 %v761
    %2396 = vmatmul.bf16.gmra.mxu0 %v2361
    %v2397 = vpop.f32.mrf.mxu0
    %v2398 = vadd.f32 %v201, %v2397
    %v2399 = vpop.f32.mrf.mxu0
    %2400 = vdwg.mxu0
    %2401 = vmatpush.bf16.msra.mxu0 %v1709
    %2402 = vmatpush.bf16.msra.mxu0 %v1706
    %2403 = vmatpush.bf16.msra.mxu0 %v1703
    %2404 = vmatpush.bf16.msra.mxu0 %v1700
    %2405 = vmatpush.bf16.msra.mxu0 %v1697
    %2406 = vmatpush.bf16.msra.mxu0 %v1694
    %2407 = vmatpush.bf16.msra.mxu0 %v1691
    %2408 = vmatpush.bf16.msra.mxu0 %v1688
    %2409 = vmatmul.bf16.gmra.mxu0 %v2340
    %v2410 = vpop.f32.mrf.mxu0
    %v2411 = vadd.f32 %v191, %v2410
    %v2412 = vpop.f32.mrf.mxu0
    %2413 = vdwg.mxu0
    %2414 = vmatpush.bf16.msra.mxu0 %v1710
    %2415 = vmatpush.bf16.msra.mxu0 %v1707
    %2416 = vmatpush.bf16.msra.mxu0 %v1704
    %2417 = vmatpush.bf16.msra.mxu0 %v1701
    %2418 = vmatpush.bf16.msra.mxu0 %v1698
    %2419 = vmatpush.bf16.msra.mxu0 %v1695
    %2420 = vmatpush.bf16.msra.mxu0 %v1692
    %2421 = vmatpush.bf16.msra.mxu0 %v1689
    %2422 = vmatmul.bf16.gmra.mxu0 %v2340
    %v2423 = vpop.f32.mrf.mxu0
    %v2424 = vadd.f32 %v192, %v2423
    %v2425 = vpop.f32.mrf.mxu0
    %2426 = vdwg.mxu0
    %2427 = vmatpush.bf16.msra.mxu0 %v1711
    %2428 = vmatpush.bf16.msra.mxu0 %v1708
    %2429 = vmatpush.bf16.msra.mxu0 %v1705
    %2430 = vmatpush.bf16.msra.mxu0 %v1702
    %2431 = vmatpush.bf16.msra.mxu0 %v1699
    %2432 = vmatpush.bf16.msra.mxu0 %v1696
    %2433 = vmatpush.bf16.msra.mxu0 %v1693
    %2434 = vmatpush.bf16.msra.mxu0 %v1690
    %2435 = vmatmul.bf16.gmra.mxu0 %v2340
    %v2436 = vpop.f32.mrf.mxu0
    %v2437 = vadd.f32 %v193, %v2436
    %v2438 = vpop.f32.mrf.mxu0
    %2439 = vdwg.mxu0
    %v2440 = vadd.f32 %v2372, %v2411
    %v2441 = vxor.u32 %v2440, 2147483648
    %v2442 = vmul.f32 %v2441, 1.442695
    %v2443 = vpow.pop %v2442
    %v2444 = vadd.f32 %v2443, 1.0
    %v2445 = vrcp.pop %v2444
    %v2446 = vmul.f32 %v2444, %v2445
    %v2447 = vsub.f32 1.0, %v2446
    %v2448 = vmul.f32 %v2445, %v2447
    %v2449 = vadd.f32 %v2445, %v2448
    %vm2450 = vweird.f32 %v2444
    %vm2451 = vweird.f32 %v2445
    %vm2452 = vmor %vm2450, %vm2451
    %v2453 = vsel %vm2452, %v2445, %v2449
    %v2454 = vand.u32 2147483647, %v2444
    %vm2455 = vcmp.eq.f32.partialorder %v2454, 8.507059e+37
    %v2456 = vand.u32 %v2444, 2147483648
    %v2457 = vor.u32 1.1754944e-38, %v2456
    %v2458 = vsel %vm2455, %v2457, %v2453
    %v2459 = vmul.f32 1.0, %v2458
    %v2460 = vadd.f32 %v2385, %v2424
    %v2461 = vxor.u32 %v2460, 2147483648
    %v2462 = vmul.f32 %v2461, 1.442695
    %v2463 = vpow.pop %v2462
    %v2464 = vadd.f32 %v2463, 1.0
    %v2465 = vrcp.pop %v2464
    %v2466 = vmul.f32 %v2464, %v2465
    %v2467 = vsub.f32 1.0, %v2466
    %v2468 = vmul.f32 %v2465, %v2467
    %v2469 = vadd.f32 %v2465, %v2468
    %vm2470 = vweird.f32 %v2464
    %vm2471 = vweird.f32 %v2465
    %vm2472 = vmor %vm2470, %vm2471
    %v2473 = vsel %vm2472, %v2465, %v2469
    %v2474 = vand.u32 2147483647, %v2464
    %vm2475 = vcmp.eq.f32.partialorder %v2474, 8.507059e+37
    %v2476 = vand.u32 %v2464, 2147483648
    %v2477 = vor.u32 1.1754944e-38, %v2476
    %v2478 = vsel %vm2475, %v2477, %v2473
    %v2479 = vmul.f32 1.0, %v2478
    %v2480 = vmul.f32 %v2459, %v2437
    %v2481 = vadd.f32 %v2398, %v2480
    %v2482 = vtanh.pop %v2481
    %v2483 = vsub.f32 1.0, %v2479
    %v2484 = vmul.f32 %v2483, %v2482
    %v2485 = vmul.f32 %v2479, %v2339
    %v2486 = vadd.f32 %v2484, %v2485
    %v2487 = vpack.c.bf16 %v2486, %v2486
    %2488 = vmatpush.bf16.msra.mxu0 %v1709
    %2489 = vmatpush.bf16.msra.mxu0 %v1706
    %2490 = vmatpush.bf16.msra.mxu0 %v1703
    %2491 = vmatpush.bf16.msra.mxu0 %v1700
    %2492 = vmatpush.bf16.msra.mxu0 %v1697
    %2493 = vmatpush.bf16.msra.mxu0 %v1694
    %2494 = vmatpush.bf16.msra.mxu0 %v1691
    %2495 = vmatpush.bf16.msra.mxu0 %v1688
    %2496 = vmatmul.bf16.gmra.mxu0 %v2487
    %v2497 = vpop.f32.mrf.mxu0
    %v2498 = vadd.f32 %v191, %v2497
    %v2499 = vpop.f32.mrf.mxu0
    %2500 = vdwg.mxu0
    %2501 = vmatpush.bf16.msra.mxu0 %v1710
    %2502 = vmatpush.bf16.msra.mxu0 %v1707
    %2503 = vmatpush.bf16.msra.mxu0 %v1704
    %2504 = vmatpush.bf16.msra.mxu0 %v1701
    %2505 = vmatpush.bf16.msra.mxu0 %v1698
    %2506 = vmatpush.bf16.msra.mxu0 %v1695
    %2507 = vmatpush.bf16.msra.mxu0 %v1692
    %2508 = vmatpush.bf16.msra.mxu0 %v1689
    %2509 = vmatmul.bf16.gmra.mxu0 %v2487
    %v2510 = vpop.f32.mrf.mxu0
    %v2511 = vadd.f32 %v192, %v2510
    %v2512 = vpop.f32.mrf.mxu0
    %2513 = vdwg.mxu0
    %2514 = vmatpush.bf16.msra.mxu0 %v1711
    %2515 = vmatpush.bf16.msra.mxu0 %v1708
    %2516 = vmatpush.bf16.msra.mxu0 %v1705
    %2517 = vmatpush.bf16.msra.mxu0 %v1702
    %2518 = vmatpush.bf16.msra.mxu0 %v1699
    %2519 = vmatpush.bf16.msra.mxu0 %v1696
    %2520 = vmatpush.bf16.msra.mxu0 %v1693
    %2521 = vmatpush.bf16.msra.mxu0 %v1690
    %2522 = vmatmul.bf16.gmra.mxu0 %v2487
    %v2523 = vpop.f32.mrf.mxu0
    %v2524 = vadd.f32 %v193, %v2523
    %v2525 = vpop.f32.mrf.mxu0
    %2526 = vdwg.mxu0
    %v2527 = vadd.f32 %v479, %v2498
    %v2528 = vxor.u32 %v2527, 2147483648
    %v2529 = vmul.f32 %v2528, 1.442695
    %v2530 = vpow.pop %v2529
    %v2531 = vadd.f32 %v2530, 1.0
    %v2532 = vrcp.pop %v2531
    %v2533 = vmul.f32 %v2531, %v2532
    %v2534 = vsub.f32 1.0, %v2533
    %v2535 = vmul.f32 %v2532, %v2534
    %v2536 = vadd.f32 %v2532, %v2535
    %vm2537 = vweird.f32 %v2531
    %vm2538 = vweird.f32 %v2532
    %vm2539 = vmor %vm2537, %vm2538
    %v2540 = vsel %vm2539, %v2532, %v2536
    %v2541 = vand.u32 2147483647, %v2531
    %vm2542 = vcmp.eq.f32.partialorder %v2541, 8.507059e+37
    %v2543 = vand.u32 %v2531, 2147483648
    %v2544 = vor.u32 1.1754944e-38, %v2543
    %v2545 = vsel %vm2542, %v2544, %v2540
    %v2546 = vmul.f32 1.0, %v2545
    %v2547 = vadd.f32 %v504, %v2511
    %v2548 = vxor.u32 %v2547, 2147483648
    %v2549 = vmul.f32 %v2548, 1.442695
    %v2550 = vpow.pop %v2549
    %v2551 = vadd.f32 %v2550, 1.0
    %v2552 = vrcp.pop %v2551
    %v2553 = vmul.f32 %v2551, %v2552
    %v2554 = vsub.f32 1.0, %v2553
    %v2555 = vmul.f32 %v2552, %v2554
    %v2556 = vadd.f32 %v2552, %v2555
    %vm2557 = vweird.f32 %v2551
    %vm2558 = vweird.f32 %v2552
    %vm2559 = vmor %vm2557, %vm2558
    %v2560 = vsel %vm2559, %v2552, %v2556
    %v2561 = vand.u32 2147483647, %v2551
    %vm2562 = vcmp.eq.f32.partialorder %v2561, 8.507059e+37
    %v2563 = vand.u32 %v2551, 2147483648
    %v2564 = vor.u32 1.1754944e-38, %v2563
    %v2565 = vsel %vm2562, %v2564, %v2560
    %v2566 = vmul.f32 1.0, %v2565
    %v2567 = vmul.f32 %v2546, %v2524
    %v2568 = vadd.f32 %v529, %v2567
    %v2569 = vtanh.pop %v2568
    %v2570 = vsub.f32 1.0, %v2566
    %v2571 = vmul.f32 %v2570, %v2569
    %v2572 = vmul.f32 %v2566, %v2486
    %v2573 = vadd.f32 %v2571, %v2572
    %v2574 = vpack.c.bf16 %v2252, %v2165
    %v2575 = vpack.c.bf16 %v2573, %v2486
    %v2576 = vld [vmem:[%s12] sm:$0x1]
    %v2578 = vperm.slane %v2576, 0
    %2580 = vmatpush.bf16.msra.mxu0 %v1862
    %2581 = vmatpush.bf16.msra.mxu0 %v1861
    %2582 = vmatpush.bf16.msra.mxu0 %v1860
    %2583 = vmatpush.bf16.msra.mxu0 %v1859
    %2584 = vmatpush.bf16.msra.mxu0 %v1858
    %2585 = vmatpush.bf16.msra.mxu0 %v1857
    %2586 = vmatpush.bf16.msra.mxu0 %v1856
    %2587 = vmatpush.bf16.msra.mxu0 %v1855
    %2588 = vmatmul.bf16.gmra.mxu0 %v2574
    %v2589 = vpop.f32.mrf.mxu0
    %v2590 = vadd.f32 %v2578, %v2589
    %v2591 = vpop.f32.mrf.mxu0
    %v2592 = vadd.f32 %v2578, %v2591
    %2593 = vmatmul.bf16.gmra.mxu0 %v2575
    %v2594 = vpop.f32.mrf.mxu0
    %v2595 = vadd.f32 %v2578, %v2594
    %v2596 = vpop.f32.mrf.mxu0
    %v2597 = vadd.f32 %v2578, %v2596
    %2598 = vdwg.mxu0
    %s2599 = scalar_lea.vmem [#allocation8], 24
    %2600 = vst [vmem:[%s2599] sm:$0xff] %v2590
    %s2601 = scalar_lea.vmem [#allocation8], 32
    %2602 = vst [vmem:[%s2601] sm:$0xff] %v2592
    %s2603 = scalar_lea.vmem [#allocation8], 48
    %2604 = vst [vmem:[%s2603] sm:$0xff] %v2595
    %s2605 = scalar_lea.vmem [#allocation8], 56
    %2606 = vst [vmem:[%s2605] sm:$0xff] %v2597
    // Predicated region
    $region66: #{tpu_custom_call.1} parent=1 // pred_check
      _
    $region67: #{tpu_custom_call.1} parent=1 // pred_check_branch
      %2608 = sbr.rel (0) target = $region69
    $region68: #{tpu_custom_call.1} parent=1 // pred_region
      %2610 = vsyncadd [#allocation4], 0
      %s2611 = sshll.u32 [#allocation8], 4
      %s2612 = int_to_ptr.vmem [resolvable:$true] %s2611
      %s2613 = sshll.u32 %s13, 4
      %s2614 = int_to_ptr.hbm [resolvable:$true] %s2613
      %2619 = dma.vmem_to_hbm [thread:$0]  %s2612, 1024, %s2614, [#allocation4], 128, 128, 8
    $region69: #{tpu_custom_call.1} parent=1 // pred_fallthru
      _
    // Predicated region
    $region70: #{tpu_custom_call.1} parent=1 // pred_check
      _
    $region71: #{tpu_custom_call.1} parent=1 // pred_check_branch
      %2621 = sbr.rel (0) target = $region73
    $region72: #{tpu_custom_call.1} parent=1 // pred_region
      %2623 = dma.done [#allocation4], 1024
    $region73: #{tpu_custom_call.1} parent=1 // pred_fallthru
      _
    %2624 = vsyncpa [#allocation3], 1
    %2625 = vsyncpa [#allocation6], 1
    %2626 = vsyncpa [#allocation4], 1

</llo_original>
